<compile_context>
chip_gen: v5e
topology: v5e:2x2
jax: 0.10.0
libtpu: 0.0.40
codegen_flags: <defaults>
</compile_context>

<pallas_src>
import functools

import jax
import jax.numpy as jnp
from jax import lax
from jax.experimental import pallas as pl
from jax.experimental.pallas import tpu as pltpu


# TODO(synk): derive per-generation from actual block sizes; 48 MiB leaves
#             headroom on v7x's 64 MiB physical VMEM and is far above the
#             default 16/32 MiB scoped limits on v5e/v6e.
_VMEM_LIMIT_BYTES = 48 * 1024 * 1024


# ----------------------------------------------------------------------------
# Fused cv1 -> cv2 kernel (Conv3x3 'same' + BN(eval) + SiLU, twice)
# ----------------------------------------------------------------------------

def _im2col_same(x_hwc, k, col_ref):
    """Assemble the kxk 'same'-padded im2col matrix of x into col_ref (H, W, k*k*C).

    The scratch is zeroed first and only the in-bounds window of each tap is
    stored, so the remaining zeros provide the 'same' padding without any
    padded copy of the input (neither in HBM nor in VMEM)."""
    H, W, C = x_hwc.shape
    p = k // 2
    col_ref[...] = jnp.zeros_like(col_ref)
    idx = 0
    for ky in range(k):
        for kx in range(k):
            dy, dx = ky - p, kx - p
            h0, h1 = max(0, -dy), H - max(0, dy)
            w0, w1 = max(0, -dx), W - max(0, dx)
            col_ref[h0:h1, w0:w1, idx * C:(idx + 1) * C] = (
                x_hwc[h0 + dy:h1 + dy, w0 + dx:w1 + dx, :])
            idx += 1


def _bottleneck_convs_kernel(x_ref, w1_ref, s1_ref, b1_ref,
                             w2t_ref, s2_ref, b2_ref, o_ref,
                             col1_ref, col2_ref, *, k1, k2):
    """silu(bn2(conv2(silu(bn1(conv1(x)))))) for one batch element.

    x_ref  : (1, H, W, c1)       unpadded NHWC input tile
    w1_ref : (k1*k1*c1, c_)      cv1 weight, im2col layout
    s1/b1  : (1, c_)             folded BN1 scale / bias (token-major broadcast)
    w2t_ref: (c2, k2*k2*c_)      cv2 weight, im2col layout, transposed
    s2/b2  : (c2, 1)             folded BN2 scale / bias (channels-first broadcast)
    o_ref  : (1, c2, H*W)        channels-first (lane-dense) conv output
    col1/col2: VMEM im2col scratch buffers.
    """
    f32 = jnp.float32
    x = x_ref[0]                                   # (H, W, c1)
    H, W, _ = x.shape

    # --- cv1: one matmul on the VMEM im2col matrix, token-major result
    _im2col_same(x, k1, col1_ref)
    cols1 = col1_ref[...].reshape(H * W, col1_ref.shape[-1])
    y1 = jnp.dot(cols1, w1_ref[...], preferred_element_type=f32)   # (H*W, c_)
    y1 = y1 * s1_ref[...] + b1_ref[...]
    y1 = y1 * jax.nn.sigmoid(y1)                                   # SiLU
    c_mid = y1.shape[-1]

    # --- cv2: intermediate stays in VMEM; result computed channels-first so
    #          the HBM store is lane-dense over H*W.
    _im2col_same(y1.reshape(H, W, c_mid), k2, col2_ref)
    cols2 = col2_ref[...].reshape(H * W, col2_ref.shape[-1])
    dn_t = (((1,), (1,)), ((), ()))                                # A @ B.T
    y2 = lax.dot_general(w2t_ref[...], cols2, dn_t,
                         preferred_element_type=f32)               # (c2, H*W)
    y2 = y2 * s2_ref[...] + b2_ref[...]
    o_ref[0] = y2 * jax.nn.sigmoid(y2)


def conv_pair_cf(x_nhwc, p, eps=1e-5):
    """Fused cv1+cv2 (+BN eval +SiLU); returns (B, c2, H*W) channels-first."""
    B, H, W, c1 = x_nhwc.shape
    w1, w2 = p["cv1_w"], p["cv2_w"]
    k1, c_ = w1.shape[0], w1.shape[-1]
    k2, c2 = w2.shape[0], w2.shape[-1]

    inv1 = p["cv1_gamma"] / jnp.sqrt(p["cv1_var"] + eps)
    s1 = inv1.reshape(1, c_)
    b1 = (p["cv1_beta"] - p["cv1_mean"] * inv1).reshape(1, c_)
    inv2 = p["cv2_gamma"] / jnp.sqrt(p["cv2_var"] + eps)
    s2 = inv2.reshape(c2, 1)
    b2 = (p["cv2_beta"] - p["cv2_mean"] * inv2).reshape(c2, 1)

    w1r = w1.reshape(k1 * k1 * c1, c_)
    w2t = w2.reshape(k2 * k2 * c_, c2).T            # (c2, k2*k2*c_)

    kern = functools.partial(_bottleneck_convs_kernel, k1=k1, k2=k2)
    return pl.pallas_call(
        kern,
        grid=(B,),
        in_specs=[
            pl.BlockSpec((1, H, W, c1), lambda b: (b, 0, 0, 0)),
            pl.BlockSpec((k1 * k1 * c1, c_), lambda b: (0, 0)),
            pl.BlockSpec((1, c_), lambda b: (0, 0)),
            pl.BlockSpec((1, c_), lambda b: (0, 0)),
            pl.BlockSpec((c2, k2 * k2 * c_), lambda b: (0, 0)),
            pl.BlockSpec((c2, 1), lambda b: (0, 0)),
            pl.BlockSpec((c2, 1), lambda b: (0, 0)),
        ],
        out_specs=pl.BlockSpec((1, c2, H * W), lambda b: (b, 0, 0)),
        out_shape=jax.ShapeDtypeStruct((B, c2, H * W), jnp.float32),
        scratch_shapes=[
            pltpu.VMEM((H, W, k1 * k1 * c1), jnp.float32),
            pltpu.VMEM((H, W, k2 * k2 * c_), jnp.float32),
        ],
        compiler_params=pltpu.CompilerParams(
            dimension_semantics=("parallel",),
            vmem_limit_bytes=_VMEM_LIMIT_BYTES),
    )(x_nhwc, w1r, s1, b1, w2t, s2, b2)


# ----------------------------------------------------------------------------
# Fused Nystrom attention (+ residual depthwise conv + to_out) kernel
# ----------------------------------------------------------------------------

def _softmax(x, *, approx):
    mx = jnp.max(x, axis=-1, keepdims=True)
    e = jnp.exp(x - mx)
    s = jnp.sum(e, axis=-1, keepdims=True)
    if approx:
        return e * pl.reciprocal(s, approx=True)
    return e / s                                     # exact: feeds the pinv iteration


def _pinv_iter(a, eye, iters):
    """Moore-Penrose iterative pseudo-inverse (matches moore_penrose_iter_pinv)."""
    f32 = jnp.float32
    abs_a = jnp.abs(a)
    col = jnp.sum(abs_a, axis=-1)
    row = jnp.sum(abs_a, axis=-2)
    z = jnp.transpose(a) / (jnp.max(col) * jnp.max(row))
    for _ in range(iters):
        az = jnp.dot(a, z, preferred_element_type=f32)
        t = 7.0 * eye - az
        t = 15.0 * eye - jnp.dot(az, t, preferred_element_type=f32)
        t = 13.0 * eye - jnp.dot(az, t, preferred_element_type=f32)
        z = 0.25 * jnp.dot(z, t, preferred_element_type=f32)
    return z


def _nystrom_head_group_kernel(x_ref, wq_ref, wk_ref, wv_ref, wl_ref, wot_ref,
                               bo_ref, o_ref, *, num_landmarks, pinv_iters,
                               dim_head, hpb):
    """Nystrom attention + residual conv + to_out for one (batch, head-group).

    x_ref  : (1, dim, N)       channels-first tokens (N % num_landmarks == 0)
    wq/wk/wv_ref: (dim, hpb*dh) qkv columns for this head group (q pre-scaled)
    wl_ref : (1, ksz, hpb*dh)  residual depthwise-conv taps, broadcast over lanes
    wot_ref: (dim, hpb*dh)     to_out weight columns (transposed) for this group
    bo_ref : (dim, 1)          to_out bias (added once, on head group 0)
    o_ref  : (1, dim, N)       channels-first output, ACCUMULATED over the head axis
    """
    f32 = jnp.float32
    d = dim_head
    m = num_landmarks
    cw = hpb * d

    xt = x_ref[0].T                                  # (N, dim) token rows
    N = xt.shape[0]
    l = N // m

    # fused qkv projection for this head group (q scale folded into wq)
    q2 = jnp.dot(xt, wq_ref[...], preferred_element_type=f32)   # (N, cw)
    k2 = jnp.dot(xt, wk_ref[...], preferred_element_type=f32)
    v2 = jnp.dot(xt, wv_ref[...], preferred_element_type=f32)

    # residual depthwise conv (ksz x 1, groups=heads): shifted+scaled VPU adds.
    wl = wl_ref[0]                                   # (ksz, cw)
    ksz = wl.shape[0]
    pad = ksz // 2
    zpad = jnp.zeros((pad, cw), f32)
    vp = jnp.concatenate([zpad, v2, zpad], axis=0)   # (N + 2*pad, cw)
    res = jnp.zeros((N, cw), f32)
    for tap in range(ksz):
        res = res + vp[tap:tap + N, :] * wl[tap:tap + 1, :]

    # identity for the Moore-Penrose iteration, built once per grid step
    ri = lax.broadcasted_iota(jnp.int32, (m, m), 0)
    ci = lax.broadcasted_iota(jnp.int32, (m, m), 1)
    eye = (ri == ci).astype(f32)

    dn_t = (((1,), (1,)), ((), ()))                  # A @ B.T
    contrib = None
    for a in range(hpb):
        q = q2[:, a * d:(a + 1) * d]
        k = k2[:, a * d:(a + 1) * d]
        v = v2[:, a * d:(a + 1) * d]
        if l == 1:
            ql, kl = q, k                            # landmark pooling is the identity
        else:
            # TODO(synk): use a strided segment-sum for very large N.
            ql = q.reshape(m, l, d).sum(axis=1) * (1.0 / l)
            kl = k.reshape(m, l, d).sum(axis=1) * (1.0 / l)

        sim1 = lax.dot_general(q, kl, dn_t, preferred_element_type=f32)   # (N, m)
        sim2 = lax.dot_general(ql, kl, dn_t, preferred_element_type=f32)  # (m, m)
        sim3 = lax.dot_general(ql, k, dn_t, preferred_element_type=f32)   # (m, N)

        attn1 = _softmax(sim1, approx=True)
        attn2 = _softmax(sim2, approx=False)
        attn3 = _softmax(sim3, approx=True)
        attn2_inv = _pinv_iter(attn2, eye, pinv_iters)

        # re-associated Nystrom product: attn1 @ (attn2_inv @ (attn3 @ v))
        t3 = jnp.dot(attn3, v, preferred_element_type=f32)            # (m, d)
        t3 = jnp.dot(attn2_inv, t3, preferred_element_type=f32)       # (m, d)
        out = jnp.dot(attn1, t3, preferred_element_type=f32)          # (N, d)
        out = out + res[:, a * d:(a + 1) * d]

        # fused to_out projection, channels-first: (dim, d) x (N, d)^T -> (dim, N)
        wo_a = wot_ref[:, a * d:(a + 1) * d]
        c = lax.dot_general(wo_a, out, dn_t, preferred_element_type=f32)
        contrib = c if contrib is None else contrib + c

    h = pl.program_id(1)

    @pl.when(h == 0)
    def _():
        o_ref[0] = contrib + bo_ref[...]

    @pl.when(h != 0)
    def _():
        o_ref[0] = o_ref[0] + contrib


def _heads_per_group(heads, dim_head):
    """128-lane head groups on v5e/v4, 256-lane groups on v6e/v7x (2x256 MXU)."""
    kind = ""
    try:
        kind = jax.devices()[0].device_kind.lower()
    except Exception:  # pragma: no cover - defensive
        pass
    hpb = 4 if any(t in kind for t in ("v6", "v7", "7x")) else 2
    if heads % hpb != 0 or (hpb * dim_head) % 128 != 0:
        hpb = 2
    assert heads % hpb == 0 and (hpb * dim_head) % 128 == 0, (heads, dim_head)
    return hpb


def nystrom_attention_cf(x_cf, p, n_keep):
    """Matches Nystromattention.forward (mask=None, return_attn=False, dropout=0).

    x_cf: (B, dim, n0) channels-first tokens.  Returns (B, dim, n_keep)."""
    B, dim, n0 = x_cf.shape
    heads, dh = p["heads"], p["dim_head"]
    m, iters = p["num_landmarks"], p["pinv_iterations"]
    inner = heads * dh
    scale = dh ** (-0.5)

    rem = n0 % m
    if rem > 0:
        x_cf = jnp.pad(x_cf, ((0, 0), (0, 0), (m - rem, 0)))
    npad = x_cf.shape[-1]

    hpb = _heads_per_group(heads, dh)
    nhp = heads // hpb
    cw = hpb * dh

    # fold the q scale into the q columns of the qkv weight (to_qkv has no bias)
    w_qkv = jnp.concatenate(
        [p["w_qkv"][:, :inner] * scale, p["w_qkv"][:, inner:]], axis=1)

    # residual depthwise-conv taps broadcast across the group's head lanes
    ksz = p["res_kernel"]
    wl = jnp.repeat(p["w_res"].reshape(nhp, hpb, ksz)[..., None], dh, axis=-1)
    wl = wl.transpose(0, 2, 1, 3).reshape(nhp, ksz, cw)

    w_out_t = p["w_out"].T                        # (dim, inner)
    b_out = p["b_out"].reshape(dim, 1)

    kern = functools.partial(_nystrom_head_group_kernel, num_landmarks=m,
                             pinv_iters=iters, dim_head=dh, hpb=hpb)
    out_cf = pl.pallas_call(
        kern,
        grid=(B, nhp),
        in_specs=[
            pl.BlockSpec((1, dim, npad), lambda b, h: (b, 0, 0)),
            pl.BlockSpec((dim, cw), lambda b, h: (0, h)),
            pl.BlockSpec((dim, cw), lambda b, h: (0, nhp + h)),
            pl.BlockSpec((dim, cw), lambda b, h: (0, 2 * nhp + h)),
            pl.BlockSpec((1, ksz, cw), lambda b, h: (h, 0, 0)),
            pl.BlockSpec((dim, cw), lambda b, h: (0, h)),
            pl.BlockSpec((dim, 1), lambda b, h: (0, 0)),
        ],
        out_specs=pl.BlockSpec((1, dim, npad), lambda b, h: (b, 0, 0)),
        out_shape=jax.ShapeDtypeStruct((B, dim, npad), jnp.float32),
        compiler_params=pltpu.CompilerParams(
            dimension_semantics=("parallel", "arbitrary"),
            vmem_limit_bytes=_VMEM_LIMIT_BYTES),
    )(x_cf, w_qkv, w_qkv, w_qkv, wl, w_out_t, b_out)

    return out_cf[:, :, npad - n_keep:]           # drop left padding tokens


# ----------------------------------------------------------------------------
# Top level
# ----------------------------------------------------------------------------

def bottleneck_forward(x_nchw, params):
    B, c1, H, W = x_nchw.shape
    x_nhwc = x_nchw.transpose(0, 2, 3, 1)
    y_cf = conv_pair_cf(x_nhwc, params)                       # (B, c2, H*W)
    attn_cf = nystrom_attention_cf(y_cf, params["attn"], H * W)  # (B, c2, H*W)
    attn_nchw = attn_cf.reshape(B, attn_cf.shape[1], H, W)    # already NCHW order
    add = params["shortcut"] and (c1 == params["c2"])
    return x_nchw + attn_nchw if add else attn_nchw


# ----------------------------------------------------------------------------
# Parameter init + demo
# ----------------------------------------------------------------------------

def init_params(key, c1=4, c2=4, e=0.5, heads=8, dim_head=64,
                num_landmarks=256, pinv_iterations=6, res_kernel=33):
    c_ = int(c2 * e)
    inner = heads * dim_head
    ks = jax.random.split(key, 8)
    f32 = jnp.float32
    return {
        "c2": c2,
        "shortcut": True,
        "cv1_w": jax.random.normal(ks[0], (3, 3, c1, c_), f32) * 0.2,
        "cv1_gamma": jnp.ones((c_,), f32),
        "cv1_beta": jnp.zeros((c_,), f32),
        "cv1_mean": jnp.zeros((c_,), f32),
        "cv1_var": jnp.ones((c_,), f32),
        "cv2_w": jax.random.normal(ks[1], (3, 3, c_, c2), f32) * 0.2,
        "cv2_gamma": jnp.ones((c2,), f32),
        "cv2_beta": jnp.zeros((c2,), f32),
        "cv2_mean": jnp.zeros((c2,), f32),
        "cv2_var": jnp.ones((c2,), f32),
        "attn": {
            "heads": heads,
            "dim_head": dim_head,
            "num_landmarks": num_landmarks,
            "pinv_iterations": pinv_iterations,
            "res_kernel": res_kernel,
            "w_qkv": jax.random.normal(ks[2], (c2, 3 * inner), f32) * 0.3,
            "w_out": jax.random.normal(ks[3], (inner, c2), f32) * 0.05,
            "b_out": jax.random.normal(ks[4], (c2,), f32) * 0.01,
            "w_res": jax.random.normal(ks[5], (heads, res_kernel), f32) * 0.05,
        },
    }


if __name__ == "__main__":
    key = jax.random.PRNGKey(0)
    k_x, k_p = jax.random.split(key)
    x = jax.random.normal(k_x, (2, 4, 16, 16), jnp.float32)   # NCHW, c1 = c2 = 4
    params = init_params(k_p, c1=4, c2=4)

    out = jax.block_until_ready(bottleneck_forward(x, params))
    assert out.shape == x.shape, out.shape
    assert bool(jnp.all(jnp.isfinite(out)))
    print("KERNEL_OK")
</pallas_src>

<mosaic_0001>
module attributes {stable_mosaic.version = 11 : i64} {
  func.func @_bottleneck_convs_kernel(%arg0: i32, %arg1: memref<1x16x16x4xf32, #tpu.memory_space<vmem>>, %arg2: memref<36x2xf32, #tpu.memory_space<vmem>>, %arg3: memref<1x2xf32, #tpu.memory_space<vmem>>, %arg4: memref<1x2xf32, #tpu.memory_space<vmem>>, %arg5: memref<4x18xf32, #tpu.memory_space<vmem>>, %arg6: memref<4x1xf32, #tpu.memory_space<vmem>>, %arg7: memref<4x1xf32, #tpu.memory_space<vmem>>, %arg8: memref<1x4x256xf32, #tpu.memory_space<vmem>>, %arg9: memref<16x16x36xf32, #tpu.memory_space<vmem>>, %arg10: memref<16x16x18xf32, #tpu.memory_space<vmem>>) attributes {dimension_semantics = [#tpu.dimension_semantics<parallel>], iteration_bounds = array<i64: 2>, scalar_prefetch = 0 : i64, scratch_operands = 2 : i64, tpu.core_type = #tpu.core_type<tc>, window_params = [{transform_indices = @transform_0, window_bounds = array<i64: 1, 16, 16, 4>}, {pipeline_mode = #tpu.pipeline_mode<synchronous>, transform_indices = @transform_1, window_bounds = array<i64: 36, 2>}, {pipeline_mode = #tpu.pipeline_mode<synchronous>, transform_indices = @transform_2, window_bounds = array<i64: 1, 2>}, {pipeline_mode = #tpu.pipeline_mode<synchronous>, transform_indices = @transform_3, window_bounds = array<i64: 1, 2>}, {pipeline_mode = #tpu.pipeline_mode<synchronous>, transform_indices = @transform_4, window_bounds = array<i64: 4, 18>}, {pipeline_mode = #tpu.pipeline_mode<synchronous>, transform_indices = @transform_5, window_bounds = array<i64: 4, 1>}, {pipeline_mode = #tpu.pipeline_mode<synchronous>, transform_indices = @transform_6, window_bounds = array<i64: 4, 1>}, {transform_indices = @transform_7, window_bounds = array<i64: 1, 4, 256>}]} {
    %c0 = arith.constant 0 : index
    %c0_0 = arith.constant 0 : index
    %c0_1 = arith.constant 0 : index
    %c0_2 = arith.constant 0 : index
    %0 = vector.load %arg1[%c0, %c0_0, %c0_1, %c0_2] : memref<1x16x16x4xf32, #tpu.memory_space<vmem>>, vector<1x16x16x4xf32>
    %1 = vector.shape_cast %0 : vector<1x16x16x4xf32> to vector<16x16x4xf32>
    %cst = arith.constant 0.000000e+00 : f32
    %2 = vector.broadcast %cst : f32 to vector<16x16x36xf32>
    %c0_3 = arith.constant 0 : index
    %c0_4 = arith.constant 0 : index
    %c0_5 = arith.constant 0 : index
    %3 = vector.load %arg9[%c0_3, %c0_4, %c0_5] : memref<16x16x36xf32, #tpu.memory_space<vmem>>, vector<16x16x36xf32>
    tpu.vector_store %arg9[%c0_3, %c0_4, %c0_5], %2 {strides = array<i32>} : memref<16x16x36xf32, #tpu.memory_space<vmem>>, vector<16x16x36xf32>,
    %4 = vector.extract_strided_slice %1 {offsets = [0, 0, 0], sizes = [15, 15, 4], strides = [1, 1, 1]} : vector<16x16x4xf32> to vector<15x15x4xf32>
    %c1 = arith.constant 1 : index
    %c1_6 = arith.constant 1 : index
    %c0_7 = arith.constant 0 : index
    %5 = vector.load %arg9[%c1, %c1_6, %c0_7] : memref<16x16x36xf32, #tpu.memory_space<vmem>>, vector<15x15x4xf32>
    tpu.vector_store %arg9[%c1, %c1_6, %c0_7], %4 {strides = array<i32>} : memref<16x16x36xf32, #tpu.memory_space<vmem>>, vector<15x15x4xf32>,
    %6 = vector.extract_strided_slice %1 {offsets = [0, 0, 0], sizes = [15, 16, 4], strides = [1, 1, 1]} : vector<16x16x4xf32> to vector<15x16x4xf32>
    %c1_8 = arith.constant 1 : index
    %c0_9 = arith.constant 0 : index
    %c4 = arith.constant 4 : index
    %7 = vector.load %arg9[%c1_8, %c0_9, %c4] : memref<16x16x36xf32, #tpu.memory_space<vmem>>, vector<15x16x4xf32>
    tpu.vector_store %arg9[%c1_8, %c0_9, %c4], %6 {strides = array<i32>} : memref<16x16x36xf32, #tpu.memory_space<vmem>>, vector<15x16x4xf32>,
    %8 = vector.extract_strided_slice %1 {offsets = [0, 1, 0], sizes = [15, 15, 4], strides = [1, 1, 1]} : vector<16x16x4xf32> to vector<15x15x4xf32>
    %c1_10 = arith.constant 1 : index
    %c0_11 = arith.constant 0 : index
    %c8 = arith.constant 8 : index
    %9 = vector.load %arg9[%c1_10, %c0_11, %c8] : memref<16x16x36xf32, #tpu.memory_space<vmem>>, vector<15x15x4xf32>
    tpu.vector_store %arg9[%c1_10, %c0_11, %c8], %8 {strides = array<i32>} : memref<16x16x36xf32, #tpu.memory_space<vmem>>, vector<15x15x4xf32>,
    %10 = vector.extract_strided_slice %1 {offsets = [0, 0, 0], sizes = [16, 15, 4], strides = [1, 1, 1]} : vector<16x16x4xf32> to vector<16x15x4xf32>
    %c0_12 = arith.constant 0 : index
    %c1_13 = arith.constant 1 : index
    %c12 = arith.constant 12 : index
    %11 = vector.load %arg9[%c0_12, %c1_13, %c12] : memref<16x16x36xf32, #tpu.memory_space<vmem>>, vector<16x15x4xf32>
    tpu.vector_store %arg9[%c0_12, %c1_13, %c12], %10 {strides = array<i32>} : memref<16x16x36xf32, #tpu.memory_space<vmem>>, vector<16x15x4xf32>,
    %c0_14 = arith.constant 0 : index
    %c0_15 = arith.constant 0 : index
    %c16 = arith.constant 16 : index
    %12 = vector.load %arg9[%c0_14, %c0_15, %c16] : memref<16x16x36xf32, #tpu.memory_space<vmem>>, vector<16x16x4xf32>
    tpu.vector_store %arg9[%c0_14, %c0_15, %c16], %1 {strides = array<i32>} : memref<16x16x36xf32, #tpu.memory_space<vmem>>, vector<16x16x4xf32>,
    %13 = vector.extract_strided_slice %1 {offsets = [0, 1, 0], sizes = [16, 15, 4], strides = [1, 1, 1]} : vector<16x16x4xf32> to vector<16x15x4xf32>
    %c0_16 = arith.constant 0 : index
    %c0_17 = arith.constant 0 : index
    %c20 = arith.constant 20 : index
    %14 = vector.load %arg9[%c0_16, %c0_17, %c20] : memref<16x16x36xf32, #tpu.memory_space<vmem>>, vector<16x15x4xf32>
    tpu.vector_store %arg9[%c0_16, %c0_17, %c20], %13 {strides = array<i32>} : memref<16x16x36xf32, #tpu.memory_space<vmem>>, vector<16x15x4xf32>,
    %15 = vector.extract_strided_slice %1 {offsets = [1, 0, 0], sizes = [15, 15, 4], strides = [1, 1, 1]} : vector<16x16x4xf32> to vector<15x15x4xf32>
    %c0_18 = arith.constant 0 : index
    %c1_19 = arith.constant 1 : index
    %c24 = arith.constant 24 : index
    %16 = vector.load %arg9[%c0_18, %c1_19, %c24] : memref<16x16x36xf32, #tpu.memory_space<vmem>>, vector<15x15x4xf32>
    tpu.vector_store %arg9[%c0_18, %c1_19, %c24], %15 {strides = array<i32>} : memref<16x16x36xf32, #tpu.memory_space<vmem>>, vector<15x15x4xf32>,
    %17 = vector.extract_strided_slice %1 {offsets = [1, 0, 0], sizes = [15, 16, 4], strides = [1, 1, 1]} : vector<16x16x4xf32> to vector<15x16x4xf32>
    %c0_20 = arith.constant 0 : index
    %c0_21 = arith.constant 0 : index
    %c28 = arith.constant 28 : index
    %18 = vector.load %arg9[%c0_20, %c0_21, %c28] : memref<16x16x36xf32, #tpu.memory_space<vmem>>, vector<15x16x4xf32>
    tpu.vector_store %arg9[%c0_20, %c0_21, %c28], %17 {strides = array<i32>} : memref<16x16x36xf32, #tpu.memory_space<vmem>>, vector<15x16x4xf32>,
    %19 = vector.extract_strided_slice %1 {offsets = [1, 1, 0], sizes = [15, 15, 4], strides = [1, 1, 1]} : vector<16x16x4xf32> to vector<15x15x4xf32>
    %c0_22 = arith.constant 0 : index
    %c0_23 = arith.constant 0 : index
    %c32 = arith.constant 32 : index
    %20 = vector.load %arg9[%c0_22, %c0_23, %c32] : memref<16x16x36xf32, #tpu.memory_space<vmem>>, vector<15x15x4xf32>
    tpu.vector_store %arg9[%c0_22, %c0_23, %c32], %19 {strides = array<i32>} : memref<16x16x36xf32, #tpu.memory_space<vmem>>, vector<15x15x4xf32>,
    %c0_24 = arith.constant 0 : index
    %c0_25 = arith.constant 0 : index
    %c0_26 = arith.constant 0 : index
    %21 = vector.load %arg9[%c0_24, %c0_25, %c0_26] : memref<16x16x36xf32, #tpu.memory_space<vmem>>, vector<16x16x36xf32>
    %22 = vector.shape_cast %21 : vector<16x16x36xf32> to vector<256x36xf32>
    %c0_27 = arith.constant 0 : index
    %c0_28 = arith.constant 0 : index
    %23 = vector.load %arg2[%c0_27, %c0_28] : memref<36x2xf32, #tpu.memory_space<vmem>>, vector<36x2xf32>
    %cst_29 = arith.constant dense<0.000000e+00> : vector<256x2xf32>
    %24 = tpu.matmul %22, %23, %cst_29 {dimension_numbers = #tpu.dot_dimension_numbers<[1], [0], [0], [1], [0, 0, 1, 1], [], []>} : vector<256x36xf32>, vector<36x2xf32>, vector<256x2xf32> -> vector<256x2xf32>
    %c0_30 = arith.constant 0 : index
    %c0_31 = arith.constant 0 : index
    %25 = vector.load %arg3[%c0_30, %c0_31] : memref<1x2xf32, #tpu.memory_space<vmem>>, vector<1x2xf32>
    %26 = vector.broadcast %25 : vector<1x2xf32> to vector<256x2xf32>
    %27 = arith.mulf %24, %26 : vector<256x2xf32>
    %c0_32 = arith.constant 0 : index
    %c0_33 = arith.constant 0 : index
    %28 = vector.load %arg4[%c0_32, %c0_33] : memref<1x2xf32, #tpu.memory_space<vmem>>, vector<1x2xf32>
    %29 = vector.broadcast %28 : vector<1x2xf32> to vector<256x2xf32>
    %30 = arith.addf %27, %29 : vector<256x2xf32>
    %31 = arith.negf %30 : vector<256x2xf32>
    %32 = math.exp %31 : vector<256x2xf32>
    %cst_34 = arith.constant 1.000000e+00 : f32
    %33 = vector.broadcast %cst_34 : f32 to vector<256x2xf32>
    %34 = arith.addf %33, %32 : vector<256x2xf32>
    %35 = arith.divf %33, %34 : vector<256x2xf32>
    %36 = arith.mulf %30, %35 : vector<256x2xf32>
    %37 = vector.shape_cast %36 : vector<256x2xf32> to vector<16x16x2xf32>
    %cst_35 = arith.constant 0.000000e+00 : f32
    %38 = vector.broadcast %cst_35 : f32 to vector<16x16x18xf32>
    %c0_36 = arith.constant 0 : index
    %c0_37 = arith.constant 0 : index
    %c0_38 = arith.constant 0 : index
    %39 = vector.load %arg10[%c0_36, %c0_37, %c0_38] : memref<16x16x18xf32, #tpu.memory_space<vmem>>, vector<16x16x18xf32>
    tpu.vector_store %arg10[%c0_36, %c0_37, %c0_38], %38 {strides = array<i32>} : memref<16x16x18xf32, #tpu.memory_space<vmem>>, vector<16x16x18xf32>,
    %40 = vector.extract_strided_slice %37 {offsets = [0, 0, 0], sizes = [15, 15, 2], strides = [1, 1, 1]} : vector<16x16x2xf32> to vector<15x15x2xf32>
    %c1_39 = arith.constant 1 : index
    %c1_40 = arith.constant 1 : index
    %c0_41 = arith.constant 0 : index
    %41 = vector.load %arg10[%c1_39, %c1_40, %c0_41] : memref<16x16x18xf32, #tpu.memory_space<vmem>>, vector<15x15x2xf32>
    tpu.vector_store %arg10[%c1_39, %c1_40, %c0_41], %40 {strides = array<i32>} : memref<16x16x18xf32, #tpu.memory_space<vmem>>, vector<15x15x2xf32>,
    %42 = vector.extract_strided_slice %37 {offsets = [0, 0, 0], sizes = [15, 16, 2], strides = [1, 1, 1]} : vector<16x16x2xf32> to vector<15x16x2xf32>
    %c1_42 = arith.constant 1 : index
    %c0_43 = arith.constant 0 : index
    %c2 = arith.constant 2 : index
    %43 = vector.load %arg10[%c1_42, %c0_43, %c2] : memref<16x16x18xf32, #tpu.memory_space<vmem>>, vector<15x16x2xf32>
    tpu.vector_store %arg10[%c1_42, %c0_43, %c2], %42 {strides = array<i32>} : memref<16x16x18xf32, #tpu.memory_space<vmem>>, vector<15x16x2xf32>,
    %44 = vector.extract_strided_slice %37 {offsets = [0, 1, 0], sizes = [15, 15, 2], strides = [1, 1, 1]} : vector<16x16x2xf32> to vector<15x15x2xf32>
    %c1_44 = arith.constant 1 : index
    %c0_45 = arith.constant 0 : index
    %c4_46 = arith.constant 4 : index
    %45 = vector.load %arg10[%c1_44, %c0_45, %c4_46] : memref<16x16x18xf32, #tpu.memory_space<vmem>>, vector<15x15x2xf32>
    tpu.vector_store %arg10[%c1_44, %c0_45, %c4_46], %44 {strides = array<i32>} : memref<16x16x18xf32, #tpu.memory_space<vmem>>, vector<15x15x2xf32>,
    %46 = vector.extract_strided_slice %37 {offsets = [0, 0, 0], sizes = [16, 15, 2], strides = [1, 1, 1]} : vector<16x16x2xf32> to vector<16x15x2xf32>
    %c0_47 = arith.constant 0 : index
    %c1_48 = arith.constant 1 : index
    %c6 = arith.constant 6 : index
    %47 = vector.load %arg10[%c0_47, %c1_48, %c6] : memref<16x16x18xf32, #tpu.memory_space<vmem>>, vector<16x15x2xf32>
    tpu.vector_store %arg10[%c0_47, %c1_48, %c6], %46 {strides = array<i32>} : memref<16x16x18xf32, #tpu.memory_space<vmem>>, vector<16x15x2xf32>,
    %c0_49 = arith.constant 0 : index
    %c0_50 = arith.constant 0 : index
    %c8_51 = arith.constant 8 : index
    %48 = vector.load %arg10[%c0_49, %c0_50, %c8_51] : memref<16x16x18xf32, #tpu.memory_space<vmem>>, vector<16x16x2xf32>
    tpu.vector_store %arg10[%c0_49, %c0_50, %c8_51], %37 {strides = array<i32>} : memref<16x16x18xf32, #tpu.memory_space<vmem>>, vector<16x16x2xf32>,
    %49 = vector.extract_strided_slice %37 {offsets = [0, 1, 0], sizes = [16, 15, 2], strides = [1, 1, 1]} : vector<16x16x2xf32> to vector<16x15x2xf32>
    %c0_52 = arith.constant 0 : index
    %c0_53 = arith.constant 0 : index
    %c10 = arith.constant 10 : index
    %50 = vector.load %arg10[%c0_52, %c0_53, %c10] : memref<16x16x18xf32, #tpu.memory_space<vmem>>, vector<16x15x2xf32>
    tpu.vector_store %arg10[%c0_52, %c0_53, %c10], %49 {strides = array<i32>} : memref<16x16x18xf32, #tpu.memory_space<vmem>>, vector<16x15x2xf32>,
    %51 = vector.extract_strided_slice %37 {offsets = [1, 0, 0], sizes = [15, 15, 2], strides = [1, 1, 1]} : vector<16x16x2xf32> to vector<15x15x2xf32>
    %c0_54 = arith.constant 0 : index
    %c1_55 = arith.constant 1 : index
    %c12_56 = arith.constant 12 : index
    %52 = vector.load %arg10[%c0_54, %c1_55, %c12_56] : memref<16x16x18xf32, #tpu.memory_space<vmem>>, vector<15x15x2xf32>
    tpu.vector_store %arg10[%c0_54, %c1_55, %c12_56], %51 {strides = array<i32>} : memref<16x16x18xf32, #tpu.memory_space<vmem>>, vector<15x15x2xf32>,
    %53 = vector.extract_strided_slice %37 {offsets = [1, 0, 0], sizes = [15, 16, 2], strides = [1, 1, 1]} : vector<16x16x2xf32> to vector<15x16x2xf32>
    %c0_57 = arith.constant 0 : index
    %c0_58 = arith.constant 0 : index
    %c14 = arith.constant 14 : index
    %54 = vector.load %arg10[%c0_57, %c0_58, %c14] : memref<16x16x18xf32, #tpu.memory_space<vmem>>, vector<15x16x2xf32>
    tpu.vector_store %arg10[%c0_57, %c0_58, %c14], %53 {strides = array<i32>} : memref<16x16x18xf32, #tpu.memory_space<vmem>>, vector<15x16x2xf32>,
    %55 = vector.extract_strided_slice %37 {offsets = [1, 1, 0], sizes = [15, 15, 2], strides = [1, 1, 1]} : vector<16x16x2xf32> to vector<15x15x2xf32>
    %c0_59 = arith.constant 0 : index
    %c0_60 = arith.constant 0 : index
    %c16_61 = arith.constant 16 : index
    %56 = vector.load %arg10[%c0_59, %c0_60, %c16_61] : memref<16x16x18xf32, #tpu.memory_space<vmem>>, vector<15x15x2xf32>
    tpu.vector_store %arg10[%c0_59, %c0_60, %c16_61], %55 {strides = array<i32>} : memref<16x16x18xf32, #tpu.memory_space<vmem>>, vector<15x15x2xf32>,
    %c0_62 = arith.constant 0 : index
    %c0_63 = arith.constant 0 : index
    %c0_64 = arith.constant 0 : index
    %57 = vector.load %arg10[%c0_62, %c0_63, %c0_64] : memref<16x16x18xf32, #tpu.memory_space<vmem>>, vector<16x16x18xf32>
    %58 = vector.shape_cast %57 : vector<16x16x18xf32> to vector<256x18xf32>
    %c0_65 = arith.constant 0 : index
    %c0_66 = arith.constant 0 : index
    %59 = vector.load %arg5[%c0_65, %c0_66] : memref<4x18xf32, #tpu.memory_space<vmem>>, vector<4x18xf32>
    %cst_67 = arith.constant dense<0.000000e+00> : vector<4x256xf32>
    %60 = tpu.matmul %59, %58, %cst_67 {dimension_numbers = #tpu.dot_dimension_numbers<[1], [1], [0], [0], [0, 0, 1, 0], [], []>} : vector<4x18xf32>, vector<256x18xf32>, vector<4x256xf32> -> vector<4x256xf32>
    %c0_68 = arith.constant 0 : index
    %c0_69 = arith.constant 0 : index
    %61 = vector.load %arg6[%c0_68, %c0_69] : memref<4x1xf32, #tpu.memory_space<vmem>>, vector<4x1xf32>
    %62 = vector.broadcast %61 : vector<4x1xf32> to vector<4x256xf32>
    %63 = arith.mulf %60, %62 : vector<4x256xf32>
    %c0_70 = arith.constant 0 : index
    %c0_71 = arith.constant 0 : index
    %64 = vector.load %arg7[%c0_70, %c0_71] : memref<4x1xf32, #tpu.memory_space<vmem>>, vector<4x1xf32>
    %65 = vector.broadcast %64 : vector<4x1xf32> to vector<4x256xf32>
    %66 = arith.addf %63, %65 : vector<4x256xf32>
    %67 = arith.negf %66 : vector<4x256xf32>
    %68 = math.exp %67 : vector<4x256xf32>
    %cst_72 = arith.constant 1.000000e+00 : f32
    %69 = vector.broadcast %cst_72 : f32 to vector<4x256xf32>
    %70 = arith.addf %69, %68 : vector<4x256xf32>
    %71 = arith.divf %69, %70 : vector<4x256xf32>
    %72 = arith.mulf %66, %71 : vector<4x256xf32>
    %c0_73 = arith.constant 0 : index
    %c0_74 = arith.constant 0 : index
    %c0_75 = arith.constant 0 : index
    %73 = vector.load %arg8[%c0_73, %c0_74, %c0_75] : memref<1x4x256xf32, #tpu.memory_space<vmem>>, vector<1x4x256xf32>
    %74 = vector.shape_cast %73 : vector<1x4x256xf32> to vector<4x256xf32>
    %75 = vector.shape_cast %72 : vector<4x256xf32> to vector<1x4x256xf32>
    tpu.vector_store %arg8[%c0_73, %c0_74, %c0_75], %75 {strides = array<i32>} : memref<1x4x256xf32, #tpu.memory_space<vmem>>, vector<1x4x256xf32>,
    return
  }
  func.func @transform_0(%arg0: i32) -> (i32, i32, i32, i32) {
    %c0_i32 = arith.constant 0 : i32
    %c0_i32_0 = arith.constant 0 : i32
    %c0_i32_1 = arith.constant 0 : i32
    %c0_i32_2 = arith.constant 0 : i32
    return %arg0, %c0_i32, %c0_i32_0, %c0_i32_1 : i32, i32, i32, i32
  }
  func.func @transform_1(%arg0: i32) -> (i32, i32) {
    %c0_i32 = arith.constant 0 : i32
    %c0_i32_0 = arith.constant 0 : i32
    %c0_i32_1 = arith.constant 0 : i32
    return %c0_i32, %c0_i32_0 : i32, i32
  }
  func.func @transform_2(%arg0: i32) -> (i32, i32) {
    %c0_i32 = arith.constant 0 : i32
    %c0_i32_0 = arith.constant 0 : i32
    %c0_i32_1 = arith.constant 0 : i32
    return %c0_i32, %c0_i32_0 : i32, i32
  }
  func.func @transform_3(%arg0: i32) -> (i32, i32) {
    %c0_i32 = arith.constant 0 : i32
    %c0_i32_0 = arith.constant 0 : i32
    %c0_i32_1 = arith.constant 0 : i32
    return %c0_i32, %c0_i32_0 : i32, i32
  }
  func.func @transform_4(%arg0: i32) -> (i32, i32) {
    %c0_i32 = arith.constant 0 : i32
    %c0_i32_0 = arith.constant 0 : i32
    %c0_i32_1 = arith.constant 0 : i32
    return %c0_i32, %c0_i32_0 : i32, i32
  }
  func.func @transform_5(%arg0: i32) -> (i32, i32) {
    %c0_i32 = arith.constant 0 : i32
    %c0_i32_0 = arith.constant 0 : i32
    %c0_i32_1 = arith.constant 0 : i32
    return %c0_i32, %c0_i32_0 : i32, i32
  }
  func.func @transform_6(%arg0: i32) -> (i32, i32) {
    %c0_i32 = arith.constant 0 : i32
    %c0_i32_0 = arith.constant 0 : i32
    %c0_i32_1 = arith.constant 0 : i32
    return %c0_i32, %c0_i32_0 : i32, i32
  }
  func.func @transform_7(%arg0: i32) -> (i32, i32, i32) {
    %c0_i32 = arith.constant 0 : i32
    %c0_i32_0 = arith.constant 0 : i32
    %c0_i32_1 = arith.constant 0 : i32
    return %arg0, %c0_i32, %c0_i32_0 : i32, i32, i32
  }
}

</mosaic_0001>

<llo_original>
// kernel: tpu_custom_call.1
$region0: #{tpu_custom_call.1}
  #allocation0 [shape = 'u32[]', space=smem, size = 0x4, offset = 0x4, fixed_abs, tag = 'smem constant byte address 0x4 - core index']
  #allocation1 [shape = 'u32[72,128]{1,0:T(1,128)}', space=vmem, size = 0x9000, scoped, tag = 'internal scratch']
  #allocation2 [shape = 'f32[16,16,36]{2,1,0:T(8,128)}', space=vmem, size = 0x20000, scoped, tag = 'scratch operand']
  #allocation3 [shape = 'f32[16,16,18]{2,1,0:T(8,128)}', space=vmem, size = 0x20000, scoped, tag = 'scratch operand']
  %s0 = inlined_call_operand.vmem [shape: f32[2,16,16,4], index: 0, kind: input, shape index: {}]
  %s1 = inlined_call_operand.vmem [shape: f32[36,2], index: 1, kind: input, shape index: {}]
  %s2 = inlined_call_operand.vmem [shape: f32[1,2], index: 2, kind: input, shape index: {}]
  %s3 = inlined_call_operand.vmem [shape: f32[1,2], index: 3, kind: input, shape index: {}]
  %s4 = inlined_call_operand.vmem [shape: f32[4,18], index: 4, kind: input, shape index: {}]
  %s5 = inlined_call_operand.vmem [shape: f32[4,1], index: 5, kind: input, shape index: {}]
  %s6 = inlined_call_operand.vmem [shape: f32[4,1], index: 6, kind: input, shape index: {}]
  %s7 = inlined_call_operand.hbm [shape: f32[2,4,256], index: 7, kind: output, shape index: {}]
  %s8 = sld [smem:[#allocation0]]
  $region61: #{tpu_custom_call.1} parent=0
    _
  %s10 = ssub.s32 1, %s8
  %s11 = scalar_select 0, %s10, %s8
  $region1: #{tpu_custom_call.1} parent=0
    #allocation4 [shape = 'u8[8192]{0}', space=vmem, size = 0x2000, scoped, tag = 'output window, operand 0']
    #allocation5 [shape = 's32[2]{0}', space=sflag, size = 0x8, scoped, tag = 'scoped memory for tpu_custom_call.1']
    %12 = vsyncpa [#allocation5], 0
    %s13 = scalar_lea.sflag [#allocation5], 1
    %14 = vsyncpa %s13, 0
    loop: start=0, step=1, limit=4
    $region2: #{tpu_custom_call.1} parent=1 // loop_pre_header
      _
    $region3: #{tpu_custom_call.1} parent=1 // loop_header
      %s16 = sphi 0, %s20
      %p17 = scmp.ge.s32.totalorder %s16, 4
      %s26 = sphi 0, %s28
      %s29 = sphi 0, %s26
      %s30 = sphi 0, %s29
      %s46 = sphi 0, %s30
      %s50 = sphi 0, %s50
      %s52 = sphi 0, %s50
      %s53 = sphi 0, %s52
      %s67 = sphi 0, %s53
      %s71 = sphi 0, %s71
      %s73 = sphi 0, %s71
      %s74 = sphi 0, %s73
      %s88 = sphi 0, %s74
      %s92 = sphi 0, %s92
      %s94 = sphi 0, %s92
      %s95 = sphi 0, %s94
      %s109 = sphi 0, %s95
      %s113 = sphi 0, %s113
      %s115 = sphi 0, %s113
      %s116 = sphi 0, %s115
      %s130 = sphi 0, %s116
      %s134 = sphi 0, %s134
      %s136 = sphi 0, %s134
      %s137 = sphi 0, %s136
      %s151 = sphi 0, %s137
      %s155 = sphi 0, %s155
      %s157 = sphi 0, %s155
      %s158 = sphi 0, %s157
      %s172 = sphi 0, %s158
      %s178 = sphi 0, %s180
      %s181 = sphi 0, %s178
      %s182 = sphi 0, %s181
      %s198 = sphi 0, %s182
    $region4: #{tpu_custom_call.1} parent=1 // loop_header_branch
      %19 = sbr.rel (%p17) target = $region8
    $region5: #{tpu_custom_call.1} parent=1 // loop_body
      %s21 = ssub.s32 %s16, 1
      %s22 = ssub.s32 %s16, 2
      %s23 = sadd.s32 %s16, 1
      %s24 = ssub.s32 %s16, %s23
      %p25 = scmp.eq.s32.totalorder %s24, 0
      %s27 = sadd.s32 %s26, 1
      %s28 = scalar_select %p25, %s26, %s27
      %p31 = pneg %p25
      %p32 = scmp.eq.s32.totalorder %s16, 1
      %p33 = por %p31, %p32
      %p34 = scmp.ne.s32.totalorder %s26, %s29
      %p35 = scmp.eq.s32.totalorder %s16, 0
      %p36 = por %p34, %p35
      %p37 = scmp.ne.s32.totalorder %s26, %s29
      %p38 = scmp.eq.s32.totalorder %s21, 1
      %p39 = por %p37, %p38
      %p40 = scmp.ne.s32.totalorder %s29, %s30
      %p41 = scmp.eq.s32.totalorder %s21, 0
      %p42 = por %p40, %p41
      %p43 = scmp.ne.s32.totalorder %s29, %s30
      %p44 = scmp.eq.s32.totalorder %s22, 1
      %p45 = por %p43, %p44
      %p47 = scmp.ne.s32.totalorder %s30, %s46
      %p48 = scmp.eq.s32.totalorder %s22, 0
      %p49 = por %p47, %p48
      %s51 = sadd.s32 %s50, 1
      %p54 = scmp.eq.s32.totalorder %s16, 1
      %p55 = scmp.ne.s32.totalorder %s50, %s52
      %p56 = scmp.eq.s32.totalorder %s16, 0
      %p57 = por %p55, %p56
      %p58 = scmp.ne.s32.totalorder %s50, %s52
      %p59 = scmp.eq.s32.totalorder %s21, 1
      %p60 = por %p58, %p59
      %p61 = scmp.ne.s32.totalorder %s52, %s53
      %p62 = scmp.eq.s32.totalorder %s21, 0
      %p63 = por %p61, %p62
      %p64 = scmp.ne.s32.totalorder %s52, %s53
      %p65 = scmp.eq.s32.totalorder %s22, 1
      %p66 = por %p64, %p65
      %p68 = scmp.ne.s32.totalorder %s53, %s67
      %p69 = scmp.eq.s32.totalorder %s22, 0
      %p70 = por %p68, %p69
      %s72 = sadd.s32 %s71, 1
      %p75 = scmp.eq.s32.totalorder %s16, 1
      %p76 = scmp.ne.s32.totalorder %s71, %s73
      %p77 = scmp.eq.s32.totalorder %s16, 0
      %p78 = por %p76, %p77
      %p79 = scmp.ne.s32.totalorder %s71, %s73
      %p80 = scmp.eq.s32.totalorder %s21, 1
      %p81 = por %p79, %p80
      %p82 = scmp.ne.s32.totalorder %s73, %s74
      %p83 = scmp.eq.s32.totalorder %s21, 0
      %p84 = por %p82, %p83
      %p85 = scmp.ne.s32.totalorder %s73, %s74
      %p86 = scmp.eq.s32.totalorder %s22, 1
      %p87 = por %p85, %p86
      %p89 = scmp.ne.s32.totalorder %s74, %s88
      %p90 = scmp.eq.s32.totalorder %s22, 0
      %p91 = por %p89, %p90
      %s93 = sadd.s32 %s92, 1
      %p96 = scmp.eq.s32.totalorder %s16, 1
      %p97 = scmp.ne.s32.totalorder %s92, %s94
      %p98 = scmp.eq.s32.totalorder %s16, 0
      %p99 = por %p97, %p98
      %p100 = scmp.ne.s32.totalorder %s92, %s94
      %p101 = scmp.eq.s32.totalorder %s21, 1
      %p102 = por %p100, %p101
      %p103 = scmp.ne.s32.totalorder %s94, %s95
      %p104 = scmp.eq.s32.totalorder %s21, 0
      %p105 = por %p103, %p104
      %p106 = scmp.ne.s32.totalorder %s94, %s95
      %p107 = scmp.eq.s32.totalorder %s22, 1
      %p108 = por %p106, %p107
      %p110 = scmp.ne.s32.totalorder %s95, %s109
      %p111 = scmp.eq.s32.totalorder %s22, 0
      %p112 = por %p110, %p111
      %s114 = sadd.s32 %s113, 1
      %p117 = scmp.eq.s32.totalorder %s16, 1
      %p118 = scmp.ne.s32.totalorder %s113, %s115
      %p119 = scmp.eq.s32.totalorder %s16, 0
      %p120 = por %p118, %p119
      %p121 = scmp.ne.s32.totalorder %s113, %s115
      %p122 = scmp.eq.s32.totalorder %s21, 1
      %p123 = por %p121, %p122
      %p124 = scmp.ne.s32.totalorder %s115, %s116
      %p125 = scmp.eq.s32.totalorder %s21, 0
      %p126 = por %p124, %p125
      %p127 = scmp.ne.s32.totalorder %s115, %s116
      %p128 = scmp.eq.s32.totalorder %s22, 1
      %p129 = por %p127, %p128
      %p131 = scmp.ne.s32.totalorder %s116, %s130
      %p132 = scmp.eq.s32.totalorder %s22, 0
      %p133 = por %p131, %p132
      %s135 = sadd.s32 %s134, 1
      %p138 = scmp.eq.s32.totalorder %s16, 1
      %p139 = scmp.ne.s32.totalorder %s134, %s136
      %p140 = scmp.eq.s32.totalorder %s16, 0
      %p141 = por %p139, %p140
      %p142 = scmp.ne.s32.totalorder %s134, %s136
      %p143 = scmp.eq.s32.totalorder %s21, 1
      %p144 = por %p142, %p143
      %p145 = scmp.ne.s32.totalorder %s136, %s137
      %p146 = scmp.eq.s32.totalorder %s21, 0
      %p147 = por %p145, %p146
      %p148 = scmp.ne.s32.totalorder %s136, %s137
      %p149 = scmp.eq.s32.totalorder %s22, 1
      %p150 = por %p148, %p149
      %p152 = scmp.ne.s32.totalorder %s137, %s151
      %p153 = scmp.eq.s32.totalorder %s22, 0
      %p154 = por %p152, %p153
      %s156 = sadd.s32 %s155, 1
      %p159 = scmp.eq.s32.totalorder %s16, 1
      %p160 = scmp.ne.s32.totalorder %s155, %s157
      %p161 = scmp.eq.s32.totalorder %s16, 0
      %p162 = por %p160, %p161
      %p163 = scmp.ne.s32.totalorder %s155, %s157
      %p164 = scmp.eq.s32.totalorder %s21, 1
      %p165 = por %p163, %p164
      %p166 = scmp.ne.s32.totalorder %s157, %s158
      %p167 = scmp.eq.s32.totalorder %s21, 0
      %p168 = por %p166, %p167
      %p169 = scmp.ne.s32.totalorder %s157, %s158
      %p170 = scmp.eq.s32.totalorder %s22, 1
      %p171 = por %p169, %p170
      %p173 = scmp.ne.s32.totalorder %s158, %s172
      %p174 = scmp.eq.s32.totalorder %s22, 0
      %p175 = por %p173, %p174
      %s176 = ssub.s32 %s16, %s23
      %p177 = scmp.eq.s32.totalorder %s176, 0
      %s179 = sadd.s32 %s178, 1
      %s180 = scalar_select %p177, %s178, %s179
      %p183 = pneg %p177
      %p184 = scmp.eq.s32.totalorder %s16, 1
      %p185 = por %p183, %p184
      %p186 = scmp.ne.s32.totalorder %s178, %s181
      %p187 = scmp.eq.s32.totalorder %s16, 0
      %p188 = por %p186, %p187
      %p189 = scmp.ne.s32.totalorder %s178, %s181
      %p190 = scmp.eq.s32.totalorder %s21, 1
      %p191 = por %p189, %p190
      %p192 = scmp.ne.s32.totalorder %s181, %s182
      %p193 = scmp.eq.s32.totalorder %s21, 0
      %p194 = por %p192, %p193
      %p195 = scmp.ne.s32.totalorder %s181, %s182
      %p196 = scmp.eq.s32.totalorder %s22, 1
      %p197 = por %p195, %p196
      %p199 = scmp.ne.s32.totalorder %s182, %s198
      %p200 = scmp.eq.s32.totalorder %s22, 0
      %p201 = por %p199, %p200
      %p202 = scmp.le.s32.totalorder 1, %s16
      %p203 = scmp.lt.s32.totalorder %s16, 3
      %p204 = pnand %p202, %p203
      %p205 = pneg %p204
      // Predicated region
      $region9: #{tpu_custom_call.1} parent=5 // pred_check
        _
      $region10: #{tpu_custom_call.1} parent=5 // pred_check_branch
        %207 = sbr.rel (%p204) target = $region12
      $region11: #{tpu_custom_call.1} parent=5 // pred_region
        %s208 = ssub.s32 %s16, 1
        // Predicated region
        $region13: #{tpu_custom_call.1} parent=11 // pred_check
          %p209 = pneg %p63
        $region14: #{tpu_custom_call.1} parent=11 // pred_check_branch
          %211 = sbr.rel (%p209) target = $region16
        $region15: #{tpu_custom_call.1} parent=11 // pred_region
          _
        $region16: #{tpu_custom_call.1} parent=11 // pred_fallthru
          _
        // Predicated region
        $region17: #{tpu_custom_call.1} parent=11 // pred_check
          %p212 = pneg %p84
        $region18: #{tpu_custom_call.1} parent=11 // pred_check_branch
          %214 = sbr.rel (%p212) target = $region20
        $region19: #{tpu_custom_call.1} parent=11 // pred_region
          _
        $region20: #{tpu_custom_call.1} parent=11 // pred_fallthru
          _
        // Predicated region
        $region21: #{tpu_custom_call.1} parent=11 // pred_check
          %p215 = pneg %p105
        $region22: #{tpu_custom_call.1} parent=11 // pred_check_branch
          %217 = sbr.rel (%p215) target = $region24
        $region23: #{tpu_custom_call.1} parent=11 // pred_region
          _
        $region24: #{tpu_custom_call.1} parent=11 // pred_fallthru
          _
        // Predicated region
        $region25: #{tpu_custom_call.1} parent=11 // pred_check
          %p218 = pneg %p126
        $region26: #{tpu_custom_call.1} parent=11 // pred_check_branch
          %220 = sbr.rel (%p218) target = $region28
        $region27: #{tpu_custom_call.1} parent=11 // pred_region
          _
        $region28: #{tpu_custom_call.1} parent=11 // pred_fallthru
          _
        // Predicated region
        $region29: #{tpu_custom_call.1} parent=11 // pred_check
          %p221 = pneg %p147
        $region30: #{tpu_custom_call.1} parent=11 // pred_check_branch
          %223 = sbr.rel (%p221) target = $region32
        $region31: #{tpu_custom_call.1} parent=11 // pred_region
          _
        $region32: #{tpu_custom_call.1} parent=11 // pred_fallthru
          _
        // Predicated region
        $region33: #{tpu_custom_call.1} parent=11 // pred_check
          %p224 = pneg %p168
        $region34: #{tpu_custom_call.1} parent=11 // pred_check_branch
          %226 = sbr.rel (%p224) target = $region36
        $region35: #{tpu_custom_call.1} parent=11 // pred_region
          _
        $region36: #{tpu_custom_call.1} parent=11 // pred_fallthru
          _
      $region12: #{tpu_custom_call.1} parent=5 // pred_fallthru
        _
      %p227 = scmp.lt.s32.totalorder %s16, 2
      // Predicated region
      $region37: #{tpu_custom_call.1} parent=5 // pred_check
        %p228 = pneg %p227
      $region38: #{tpu_custom_call.1} parent=5 // pred_check_branch
        %230 = sbr.rel (%p228) target = $region40
      $region39: #{tpu_custom_call.1} parent=5 // pred_region
        // Predicated region
        $region41: #{tpu_custom_call.1} parent=39 // pred_check
          %p231 = pneg %p36
        $region42: #{tpu_custom_call.1} parent=39 // pred_check_branch
          %233 = sbr.rel (%p231) target = $region44
        $region43: #{tpu_custom_call.1} parent=39 // pred_region
          %p234 = scmp.lt.s32.totalorder %s16, 1
          %s235 = scalar_select %p234, %s16, 1
          %s236 = smul.addr %s235, 32
          %s237 = smul.addr %s236, 8
          %s238 = scalar_lea.vmem %s0, %s237
        $region44: #{tpu_custom_call.1} parent=39 // pred_fallthru
          _
      $region40: #{tpu_custom_call.1} parent=5 // pred_fallthru
        _
      %p239 = scmp.le.s32.totalorder 1, %s16
      %p240 = scmp.lt.s32.totalorder %s16, 3
      %p241 = pnand %p239, %p240
      %p242 = pneg %p241
      // Predicated region
      $region45: #{tpu_custom_call.1} parent=5 // pred_check
        _
      $region46: #{tpu_custom_call.1} parent=5 // pred_check_branch
        %244 = sbr.rel (%p241) target = $region48
      $region47: #{tpu_custom_call.1} parent=5 // pred_region
        %s245 = ssub.s32 %s16, 1
        %p246 = scmp.lt.s32.totalorder %s21, 1
        %s247 = scalar_select %p246, %s21, 1
        %s248 = smul.addr %s247, 32
        %s249 = smul.addr %s248, 8
        %s250 = scalar_lea.vmem %s0, %s249
        %p251 = pneg %p42
        %p252 = pneg %p39
        %p253 = pneg %p63
        %p254 = pneg %p60
        %p255 = pneg %p84
        %p256 = pneg %p81
        %p257 = pneg %p105
        %p258 = pneg %p102
        %p259 = pneg %p126
        %p260 = pneg %p123
        %p261 = pneg %p147
        %p262 = pneg %p144
        %p263 = pneg %p168
        %p264 = pneg %p165
        %p265 = pneg %p194
        %p266 = pneg %p191
        %s267 = sand.u32 %s181, 1
        %s268 = scalar_lea.sflag [#allocation5], %s267
        %s269 = sand.u32 %s181, 1
        %s270 = smul.addr %s269, 8
        %s271 = scalar_lea.vmem [#allocation4], %s270
        %p272 = scmp.lt.s32.totalorder %s21, 1
        %s273 = scalar_select %p272, %s21, 1
        %s274 = smul.addr %s273, 32
        %s275 = smul.addr %s274, 8
        %s276 = scalar_lea.vmem %s0, %s275
        %v277 = vld [vmem:[%s276] sm:$0xff]
        %v278 = vld [vmem:[%s276 + $0x8] sm:$0xff]
        %v279 = vld [vmem:[%s276 + $0x10] sm:$0xff]
        %v280 = vld [vmem:[%s276 + $0x18] sm:$0xff]
        %v281 = vld [vmem:[%s276 + $0x20] sm:$0xff]
        %v282 = vld [vmem:[%s276 + $0x28] sm:$0xff]
        %v283 = vld [vmem:[%s276 + $0x30] sm:$0xff]
        %v284 = vld [vmem:[%s276 + $0x38] sm:$0xff]
        %v285 = vld [vmem:[%s276 + $0x40] sm:$0xff]
        %v286 = vld [vmem:[%s276 + $0x48] sm:$0xff]
        %v287 = vld [vmem:[%s276 + $0x50] sm:$0xff]
        %v288 = vld [vmem:[%s276 + $0x58] sm:$0xff]
        %v289 = vld [vmem:[%s276 + $0x60] sm:$0xff]
        %v290 = vld [vmem:[%s276 + $0x68] sm:$0xff]
        %v291 = vld [vmem:[%s276 + $0x70] sm:$0xff]
        %v292 = vld [vmem:[%s276 + $0x78] sm:$0xff]
        %v293 = vld [vmem:[%s276 + $0x80] sm:$0xff]
        %v294 = vld [vmem:[%s276 + $0x88] sm:$0xff]
        %v295 = vld [vmem:[%s276 + $0x90] sm:$0xff]
        %v296 = vld [vmem:[%s276 + $0x98] sm:$0xff]
        %v297 = vld [vmem:[%s276 + $0xa0] sm:$0xff]
        %v298 = vld [vmem:[%s276 + $0xa8] sm:$0xff]
        %v299 = vld [vmem:[%s276 + $0xb0] sm:$0xff]
        %v300 = vld [vmem:[%s276 + $0xb8] sm:$0xff]
        %v301 = vld [vmem:[%s276 + $0xc0] sm:$0xff]
        %v302 = vld [vmem:[%s276 + $0xc8] sm:$0xff]
        %v303 = vld [vmem:[%s276 + $0xd0] sm:$0xff]
        %v304 = vld [vmem:[%s276 + $0xd8] sm:$0xff]
        %v305 = vld [vmem:[%s276 + $0xe0] sm:$0xff]
        %v306 = vld [vmem:[%s276 + $0xe8] sm:$0xff]
        %v307 = vld [vmem:[%s276 + $0xf0] sm:$0xff]
        %v308 = vld [vmem:[%s276 + $0xf8] sm:$0xff]
        %vm309 = vcmask 293888
        %310 = vst.msk [vmem:[#allocation2] sm:$0xff] %vm309, 0.0
        %311 = vst.msk [vmem:[#allocation2 + $0x8] sm:$0xff] %vm309, 0.0
        %312 = vst.msk [vmem:[#allocation2 + $0x10] sm:$0xff] %vm309, 0.0
        %313 = vst.msk [vmem:[#allocation2 + $0x18] sm:$0xff] %vm309, 0.0
        %314 = vst.msk [vmem:[#allocation2 + $0x20] sm:$0xff] %vm309, 0.0
        %315 = vst.msk [vmem:[#allocation2 + $0x28] sm:$0xff] %vm309, 0.0
        %316 = vst.msk [vmem:[#allocation2 + $0x30] sm:$0xff] %vm309, 0.0
        %317 = vst.msk [vmem:[#allocation2 + $0x38] sm:$0xff] %vm309, 0.0
        %318 = vst.msk [vmem:[#allocation2 + $0x40] sm:$0xff] %vm309, 0.0
        %319 = vst.msk [vmem:[#allocation2 + $0x48] sm:$0xff] %vm309, 0.0
        %320 = vst.msk [vmem:[#allocation2 + $0x50] sm:$0xff] %vm309, 0.0
        %321 = vst.msk [vmem:[#allocation2 + $0x58] sm:$0xff] %vm309, 0.0
        %322 = vst.msk [vmem:[#allocation2 + $0x60] sm:$0xff] %vm309, 0.0
        %323 = vst.msk [vmem:[#allocation2 + $0x68] sm:$0xff] %vm309, 0.0
        %324 = vst.msk [vmem:[#allocation2 + $0x70] sm:$0xff] %vm309, 0.0
        %325 = vst.msk [vmem:[#allocation2 + $0x78] sm:$0xff] %vm309, 0.0
        %326 = vst.msk [vmem:[#allocation2 + $0x80] sm:$0xff] %vm309, 0.0
        %327 = vst.msk [vmem:[#allocation2 + $0x88] sm:$0xff] %vm309, 0.0
        %328 = vst.msk [vmem:[#allocation2 + $0x90] sm:$0xff] %vm309, 0.0
        %329 = vst.msk [vmem:[#allocation2 + $0x98] sm:$0xff] %vm309, 0.0
        %330 = vst.msk [vmem:[#allocation2 + $0xa0] sm:$0xff] %vm309, 0.0
        %331 = vst.msk [vmem:[#allocation2 + $0xa8] sm:$0xff] %vm309, 0.0
        %332 = vst.msk [vmem:[#allocation2 + $0xb0] sm:$0xff] %vm309, 0.0
        %333 = vst.msk [vmem:[#allocation2 + $0xb8] sm:$0xff] %vm309, 0.0
        %334 = vst.msk [vmem:[#allocation2 + $0xc0] sm:$0xff] %vm309, 0.0
        %335 = vst.msk [vmem:[#allocation2 + $0xc8] sm:$0xff] %vm309, 0.0
        %336 = vst.msk [vmem:[#allocation2 + $0xd0] sm:$0xff] %vm309, 0.0
        %337 = vst.msk [vmem:[#allocation2 + $0xd8] sm:$0xff] %vm309, 0.0
        %338 = vst.msk [vmem:[#allocation2 + $0xe0] sm:$0xff] %vm309, 0.0
        %339 = vst.msk [vmem:[#allocation2 + $0xe8] sm:$0xff] %vm309, 0.0
        %340 = vst.msk [vmem:[#allocation2 + $0xf0] sm:$0xff] %vm309, 0.0
        %341 = vst.msk [vmem:[#allocation2 + $0xf8] sm:$0xff] %vm309, 0.0
        %s342 = scalar_lea.vmem [#allocation2], 16
        %vm343 = vcmask 31744
        %344 = vst.msk [vmem:[%s342 + $0x1] sm:$0xff] %vm343, %v277
        %vm345 = vcmask 30720
        %346 = vst.msk [vmem:[%s342 + $0x9] sm:$0x7f] %vm345, %v278
        %347 = vst.msk [vmem:[%s342 + $0x11] sm:$0xff] %vm343, %v279
        %348 = vst.msk [vmem:[%s342 + $0x19] sm:$0x7f] %vm345, %v280
        %349 = vst.msk [vmem:[%s342 + $0x21] sm:$0xff] %vm343, %v281
        %350 = vst.msk [vmem:[%s342 + $0x29] sm:$0x7f] %vm345, %v282
        %351 = vst.msk [vmem:[%s342 + $0x31] sm:$0xff] %vm343, %v283
        %352 = vst.msk [vmem:[%s342 + $0x39] sm:$0x7f] %vm345, %v284
        %353 = vst.msk [vmem:[%s342 + $0x41] sm:$0xff] %vm343, %v285
        %354 = vst.msk [vmem:[%s342 + $0x49] sm:$0x7f] %vm345, %v286
        %355 = vst.msk [vmem:[%s342 + $0x51] sm:$0xff] %vm343, %v287
        %356 = vst.msk [vmem:[%s342 + $0x59] sm:$0x7f] %vm345, %v288
        %357 = vst.msk [vmem:[%s342 + $0x61] sm:$0xff] %vm343, %v289
        %358 = vst.msk [vmem:[%s342 + $0x69] sm:$0x7f] %vm345, %v290
        %359 = vst.msk [vmem:[%s342 + $0x71] sm:$0xff] %vm343, %v291
        %360 = vst.msk [vmem:[%s342 + $0x79] sm:$0x7f] %vm345, %v292
        %361 = vst.msk [vmem:[%s342 + $0x81] sm:$0xff] %vm343, %v293
        %362 = vst.msk [vmem:[%s342 + $0x89] sm:$0x7f] %vm345, %v294
        %363 = vst.msk [vmem:[%s342 + $0x91] sm:$0xff] %vm343, %v295
        %364 = vst.msk [vmem:[%s342 + $0x99] sm:$0x7f] %vm345, %v296
        %365 = vst.msk [vmem:[%s342 + $0xa1] sm:$0xff] %vm343, %v297
        %366 = vst.msk [vmem:[%s342 + $0xa9] sm:$0x7f] %vm345, %v298
        %367 = vst.msk [vmem:[%s342 + $0xb1] sm:$0xff] %vm343, %v299
        %368 = vst.msk [vmem:[%s342 + $0xb9] sm:$0x7f] %vm345, %v300
        %369 = vst.msk [vmem:[%s342 + $0xc1] sm:$0xff] %vm343, %v301
        %370 = vst.msk [vmem:[%s342 + $0xc9] sm:$0x7f] %vm345, %v302
        %371 = vst.msk [vmem:[%s342 + $0xd1] sm:$0xff] %vm343, %v303
        %372 = vst.msk [vmem:[%s342 + $0xd9] sm:$0x7f] %vm345, %v304
        %373 = vst.msk [vmem:[%s342 + $0xe1] sm:$0xff] %vm343, %v305
        %374 = vst.msk [vmem:[%s342 + $0xe9] sm:$0x7f] %vm345, %v306
        %405 = vrot.lane.b32.xlu0 %v277, 4
        %v406 = vpop.permute.xlu0 %405
        %407 = vrot.lane.b32.xlu0 %v278, 4
        %v408 = vpop.permute.xlu0 %407
        %409 = vrot.lane.b32.xlu0 %v279, 4
        %v410 = vpop.permute.xlu0 %409
        %411 = vrot.lane.b32.xlu0 %v280, 4
        %v412 = vpop.permute.xlu0 %411
        %413 = vrot.lane.b32.xlu0 %v281, 4
        %v414 = vpop.permute.xlu0 %413
        %415 = vrot.lane.b32.xlu0 %v282, 4
        %v416 = vpop.permute.xlu0 %415
        %417 = vrot.lane.b32.xlu0 %v283, 4
        %v418 = vpop.permute.xlu0 %417
        %419 = vrot.lane.b32.xlu0 %v284, 4
        %v420 = vpop.permute.xlu0 %419
        %421 = vrot.lane.b32.xlu0 %v285, 4
        %v422 = vpop.permute.xlu0 %421
        %423 = vrot.lane.b32.xlu0 %v286, 4
        %v424 = vpop.permute.xlu0 %423
        %425 = vrot.lane.b32.xlu0 %v287, 4
        %v426 = vpop.permute.xlu0 %425
        %427 = vrot.lane.b32.xlu0 %v288, 4
        %v428 = vpop.permute.xlu0 %427
        %429 = vrot.lane.b32.xlu0 %v289, 4
        %v430 = vpop.permute.xlu0 %429
        %431 = vrot.lane.b32.xlu0 %v290, 4
        %v432 = vpop.permute.xlu0 %431
        %433 = vrot.lane.b32.xlu0 %v291, 4
        %v434 = vpop.permute.xlu0 %433
        %435 = vrot.lane.b32.xlu0 %v292, 4
        %v436 = vpop.permute.xlu0 %435
        %437 = vrot.lane.b32.xlu0 %v293, 4
        %v438 = vpop.permute.xlu0 %437
        %439 = vrot.lane.b32.xlu0 %v294, 4
        %v440 = vpop.permute.xlu0 %439
        %441 = vrot.lane.b32.xlu0 %v295, 4
        %v442 = vpop.permute.xlu0 %441
        %443 = vrot.lane.b32.xlu0 %v296, 4
        %v444 = vpop.permute.xlu0 %443
        %445 = vrot.lane.b32.xlu0 %v297, 4
        %v446 = vpop.permute.xlu0 %445
        %447 = vrot.lane.b32.xlu0 %v298, 4
        %v448 = vpop.permute.xlu0 %447
        %449 = vrot.lane.b32.xlu0 %v299, 4
        %v450 = vpop.permute.xlu0 %449
        %451 = vrot.lane.b32.xlu0 %v300, 4
        %v452 = vpop.permute.xlu0 %451
        %453 = vrot.lane.b32.xlu0 %v301, 4
        %v454 = vpop.permute.xlu0 %453
        %455 = vrot.lane.b32.xlu0 %v302, 4
        %v456 = vpop.permute.xlu0 %455
        %457 = vrot.lane.b32.xlu0 %v303, 4
        %v458 = vpop.permute.xlu0 %457
        %459 = vrot.lane.b32.xlu0 %v304, 4
        %v460 = vpop.permute.xlu0 %459
        %461 = vrot.lane.b32.xlu0 %v305, 4
        %v462 = vpop.permute.xlu0 %461
        %463 = vrot.lane.b32.xlu0 %v306, 4
        %v464 = vpop.permute.xlu0 %463
        %vm495 = vcmask 64544
        %496 = vst.msk [vmem:[%s342] sm:$0xff] %vm495, %v406
        %497 = vst.msk [vmem:[%s342 + $0x8] sm:$0xff] %vm495, %v408
        %498 = vst.msk [vmem:[%s342 + $0x10] sm:$0xff] %vm495, %v410
        %499 = vst.msk [vmem:[%s342 + $0x18] sm:$0xff] %vm495, %v412
        %500 = vst.msk [vmem:[%s342 + $0x20] sm:$0xff] %vm495, %v414
        %501 = vst.msk [vmem:[%s342 + $0x28] sm:$0xff] %vm495, %v416
        %502 = vst.msk [vmem:[%s342 + $0x30] sm:$0xff] %vm495, %v418
        %503 = vst.msk [vmem:[%s342 + $0x38] sm:$0xff] %vm495, %v420
        %504 = vst.msk [vmem:[%s342 + $0x40] sm:$0xff] %vm495, %v422
        %505 = vst.msk [vmem:[%s342 + $0x48] sm:$0xff] %vm495, %v424
        %506 = vst.msk [vmem:[%s342 + $0x50] sm:$0xff] %vm495, %v426
        %507 = vst.msk [vmem:[%s342 + $0x58] sm:$0xff] %vm495, %v428
        %508 = vst.msk [vmem:[%s342 + $0x60] sm:$0xff] %vm495, %v430
        %509 = vst.msk [vmem:[%s342 + $0x68] sm:$0xff] %vm495, %v432
        %510 = vst.msk [vmem:[%s342 + $0x70] sm:$0xff] %vm495, %v434
        %511 = vst.msk [vmem:[%s342 + $0x78] sm:$0xff] %vm495, %v436
        %512 = vst.msk [vmem:[%s342 + $0x80] sm:$0xff] %vm495, %v438
        %513 = vst.msk [vmem:[%s342 + $0x88] sm:$0xff] %vm495, %v440
        %514 = vst.msk [vmem:[%s342 + $0x90] sm:$0xff] %vm495, %v442
        %515 = vst.msk [vmem:[%s342 + $0x98] sm:$0xff] %vm495, %v444
        %516 = vst.msk [vmem:[%s342 + $0xa0] sm:$0xff] %vm495, %v446
        %517 = vst.msk [vmem:[%s342 + $0xa8] sm:$0xff] %vm495, %v448
        %518 = vst.msk [vmem:[%s342 + $0xb0] sm:$0xff] %vm495, %v450
        %519 = vst.msk [vmem:[%s342 + $0xb8] sm:$0xff] %vm495, %v452
        %520 = vst.msk [vmem:[%s342 + $0xc0] sm:$0xff] %vm495, %v454
        %521 = vst.msk [vmem:[%s342 + $0xc8] sm:$0xff] %vm495, %v456
        %522 = vst.msk [vmem:[%s342 + $0xd0] sm:$0xff] %vm495, %v458
        %523 = vst.msk [vmem:[%s342 + $0xd8] sm:$0xff] %vm495, %v460
        %524 = vst.msk [vmem:[%s342 + $0xe0] sm:$0xff] %vm495, %v462
        %525 = vst.msk [vmem:[%s342 + $0xe8] sm:$0xff] %vm495, %v464
        %526 = vrot.lane.b32.xlu0 %v277, 8
        %v527 = vpop.permute.xlu0 %526
        %528 = vrot.lane.b32.xlu0 %v278, 8
        %v529 = vpop.permute.xlu0 %528
        %530 = vrot.lane.b32.xlu0 %v279, 8
        %v531 = vpop.permute.xlu0 %530
        %532 = vrot.lane.b32.xlu0 %v280, 8
        %v533 = vpop.permute.xlu0 %532
        %534 = vrot.lane.b32.xlu0 %v281, 8
        %v535 = vpop.permute.xlu0 %534
        %536 = vrot.lane.b32.xlu0 %v282, 8
        %v537 = vpop.permute.xlu0 %536
        %538 = vrot.lane.b32.xlu0 %v283, 8
        %v539 = vpop.permute.xlu0 %538
        %540 = vrot.lane.b32.xlu0 %v284, 8
        %v541 = vpop.permute.xlu0 %540
        %542 = vrot.lane.b32.xlu0 %v285, 8
        %v543 = vpop.permute.xlu0 %542
        %544 = vrot.lane.b32.xlu0 %v286, 8
        %v545 = vpop.permute.xlu0 %544
        %546 = vrot.lane.b32.xlu0 %v287, 8
        %v547 = vpop.permute.xlu0 %546
        %548 = vrot.lane.b32.xlu0 %v288, 8
        %v549 = vpop.permute.xlu0 %548
        %550 = vrot.lane.b32.xlu0 %v289, 8
        %v551 = vpop.permute.xlu0 %550
        %552 = vrot.lane.b32.xlu0 %v290, 8
        %v553 = vpop.permute.xlu0 %552
        %554 = vrot.lane.b32.xlu0 %v291, 8
        %v555 = vpop.permute.xlu0 %554
        %556 = vrot.lane.b32.xlu0 %v292, 8
        %v557 = vpop.permute.xlu0 %556
        %558 = vrot.lane.b32.xlu0 %v293, 8
        %v559 = vpop.permute.xlu0 %558
        %560 = vrot.lane.b32.xlu0 %v294, 8
        %v561 = vpop.permute.xlu0 %560
        %562 = vrot.lane.b32.xlu0 %v295, 8
        %v563 = vpop.permute.xlu0 %562
        %564 = vrot.lane.b32.xlu0 %v296, 8
        %v565 = vpop.permute.xlu0 %564
        %566 = vrot.lane.b32.xlu0 %v297, 8
        %v567 = vpop.permute.xlu0 %566
        %568 = vrot.lane.b32.xlu0 %v298, 8
        %v569 = vpop.permute.xlu0 %568
        %570 = vrot.lane.b32.xlu0 %v299, 8
        %v571 = vpop.permute.xlu0 %570
        %572 = vrot.lane.b32.xlu0 %v300, 8
        %v573 = vpop.permute.xlu0 %572
        %574 = vrot.lane.b32.xlu0 %v301, 8
        %v575 = vpop.permute.xlu0 %574
        %576 = vrot.lane.b32.xlu0 %v302, 8
        %v577 = vpop.permute.xlu0 %576
        %578 = vrot.lane.b32.xlu0 %v303, 8
        %v579 = vpop.permute.xlu0 %578
        %580 = vrot.lane.b32.xlu0 %v304, 8
        %v581 = vpop.permute.xlu0 %580
        %582 = vrot.lane.b32.xlu0 %v305, 8
        %v583 = vpop.permute.xlu0 %582
        %584 = vrot.lane.b32.xlu0 %v306, 8
        %v585 = vpop.permute.xlu0 %584
        %vm616 = vcmask 97345
        %617 = vst.msk [vmem:[%s342 - $0x1] sm:$0xfe] %vm616, %v527
        %vm618 = vcmask 97344
        %619 = vst.msk [vmem:[%s342 + $0x7] sm:$0xff] %vm618, %v529
        %620 = vst.msk [vmem:[%s342 + $0xf] sm:$0xfe] %vm616, %v531
        %621 = vst.msk [vmem:[%s342 + $0x17] sm:$0xff] %vm618, %v533
        %622 = vst.msk [vmem:[%s342 + $0x1f] sm:$0xfe] %vm616, %v535
        %623 = vst.msk [vmem:[%s342 + $0x27] sm:$0xff] %vm618, %v537
        %624 = vst.msk [vmem:[%s342 + $0x2f] sm:$0xfe] %vm616, %v539
        %625 = vst.msk [vmem:[%s342 + $0x37] sm:$0xff] %vm618, %v541
        %626 = vst.msk [vmem:[%s342 + $0x3f] sm:$0xfe] %vm616, %v543
        %627 = vst.msk [vmem:[%s342 + $0x47] sm:$0xff] %vm618, %v545
        %628 = vst.msk [vmem:[%s342 + $0x4f] sm:$0xfe] %vm616, %v547
        %629 = vst.msk [vmem:[%s342 + $0x57] sm:$0xff] %vm618, %v549
        %630 = vst.msk [vmem:[%s342 + $0x5f] sm:$0xfe] %vm616, %v551
        %631 = vst.msk [vmem:[%s342 + $0x67] sm:$0xff] %vm618, %v553
        %632 = vst.msk [vmem:[%s342 + $0x6f] sm:$0xfe] %vm616, %v555
        %633 = vst.msk [vmem:[%s342 + $0x77] sm:$0xff] %vm618, %v557
        %634 = vst.msk [vmem:[%s342 + $0x7f] sm:$0xfe] %vm616, %v559
        %635 = vst.msk [vmem:[%s342 + $0x87] sm:$0xff] %vm618, %v561
        %636 = vst.msk [vmem:[%s342 + $0x8f] sm:$0xfe] %vm616, %v563
        %637 = vst.msk [vmem:[%s342 + $0x97] sm:$0xff] %vm618, %v565
        %638 = vst.msk [vmem:[%s342 + $0x9f] sm:$0xfe] %vm616, %v567
        %639 = vst.msk [vmem:[%s342 + $0xa7] sm:$0xff] %vm618, %v569
        %640 = vst.msk [vmem:[%s342 + $0xaf] sm:$0xfe] %vm616, %v571
        %641 = vst.msk [vmem:[%s342 + $0xb7] sm:$0xff] %vm618, %v573
        %642 = vst.msk [vmem:[%s342 + $0xbf] sm:$0xfe] %vm616, %v575
        %643 = vst.msk [vmem:[%s342 + $0xc7] sm:$0xff] %vm618, %v577
        %644 = vst.msk [vmem:[%s342 + $0xcf] sm:$0xfe] %vm616, %v579
        %645 = vst.msk [vmem:[%s342 + $0xd7] sm:$0xff] %vm618, %v581
        %646 = vst.msk [vmem:[%s342 + $0xdf] sm:$0xfe] %vm616, %v583
        %647 = vst.msk [vmem:[%s342 + $0xe7] sm:$0xff] %vm618, %v585
        %650 = vrot.lane.b32.xlu0 %v277, 12
        %v651 = vpop.permute.xlu0 %650
        %652 = vrot.lane.b32.xlu0 %v278, 12
        %v653 = vpop.permute.xlu0 %652
        %654 = vrot.lane.b32.xlu0 %v279, 12
        %v655 = vpop.permute.xlu0 %654
        %656 = vrot.lane.b32.xlu0 %v280, 12
        %v657 = vpop.permute.xlu0 %656
        %658 = vrot.lane.b32.xlu0 %v281, 12
        %v659 = vpop.permute.xlu0 %658
        %660 = vrot.lane.b32.xlu0 %v282, 12
        %v661 = vpop.permute.xlu0 %660
        %662 = vrot.lane.b32.xlu0 %v283, 12
        %v663 = vpop.permute.xlu0 %662
        %664 = vrot.lane.b32.xlu0 %v284, 12
        %v665 = vpop.permute.xlu0 %664
        %666 = vrot.lane.b32.xlu0 %v285, 12
        %v667 = vpop.permute.xlu0 %666
        %668 = vrot.lane.b32.xlu0 %v286, 12
        %v669 = vpop.permute.xlu0 %668
        %670 = vrot.lane.b32.xlu0 %v287, 12
        %v671 = vpop.permute.xlu0 %670
        %672 = vrot.lane.b32.xlu0 %v288, 12
        %v673 = vpop.permute.xlu0 %672
        %674 = vrot.lane.b32.xlu0 %v289, 12
        %v675 = vpop.permute.xlu0 %674
        %676 = vrot.lane.b32.xlu0 %v290, 12
        %v677 = vpop.permute.xlu0 %676
        %678 = vrot.lane.b32.xlu0 %v291, 12
        %v679 = vpop.permute.xlu0 %678
        %680 = vrot.lane.b32.xlu0 %v292, 12
        %v681 = vpop.permute.xlu0 %680
        %682 = vrot.lane.b32.xlu0 %v293, 12
        %v683 = vpop.permute.xlu0 %682
        %684 = vrot.lane.b32.xlu0 %v294, 12
        %v685 = vpop.permute.xlu0 %684
        %686 = vrot.lane.b32.xlu0 %v295, 12
        %v687 = vpop.permute.xlu0 %686
        %688 = vrot.lane.b32.xlu0 %v296, 12
        %v689 = vpop.permute.xlu0 %688
        %690 = vrot.lane.b32.xlu0 %v297, 12
        %v691 = vpop.permute.xlu0 %690
        %692 = vrot.lane.b32.xlu0 %v298, 12
        %v693 = vpop.permute.xlu0 %692
        %694 = vrot.lane.b32.xlu0 %v299, 12
        %v695 = vpop.permute.xlu0 %694
        %696 = vrot.lane.b32.xlu0 %v300, 12
        %v697 = vpop.permute.xlu0 %696
        %698 = vrot.lane.b32.xlu0 %v301, 12
        %v699 = vpop.permute.xlu0 %698
        %700 = vrot.lane.b32.xlu0 %v302, 12
        %v701 = vpop.permute.xlu0 %700
        %702 = vrot.lane.b32.xlu0 %v303, 12
        %v703 = vpop.permute.xlu0 %702
        %704 = vrot.lane.b32.xlu0 %v304, 12
        %v705 = vpop.permute.xlu0 %704
        %706 = vrot.lane.b32.xlu0 %v305, 12
        %v707 = vpop.permute.xlu0 %706
        %708 = vrot.lane.b32.xlu0 %v306, 12
        %v709 = vpop.permute.xlu0 %708
        %710 = vrot.lane.b32.xlu0 %v307, 12
        %v711 = vpop.permute.xlu0 %710
        %712 = vrot.lane.b32.xlu0 %v308, 12
        %v713 = vpop.permute.xlu0 %712
        %vm746 = vcmask 130144
        %747 = vst.msk [vmem:[#allocation2 + $0x1] sm:$0xff] %vm746, %v651
        %vm748 = vcmask 129120
        %749 = vst.msk [vmem:[#allocation2 + $0x9] sm:$0x7f] %vm748, %v653
        %750 = vst.msk [vmem:[#allocation2 + $0x11] sm:$0xff] %vm746, %v655
        %751 = vst.msk [vmem:[#allocation2 + $0x19] sm:$0x7f] %vm748, %v657
        %752 = vst.msk [vmem:[#allocation2 + $0x21] sm:$0xff] %vm746, %v659
        %753 = vst.msk [vmem:[#allocation2 + $0x29] sm:$0x7f] %vm748, %v661
        %754 = vst.msk [vmem:[#allocation2 + $0x31] sm:$0xff] %vm746, %v663
        %755 = vst.msk [vmem:[#allocation2 + $0x39] sm:$0x7f] %vm748, %v665
        %756 = vst.msk [vmem:[#allocation2 + $0x41] sm:$0xff] %vm746, %v667
        %757 = vst.msk [vmem:[#allocation2 + $0x49] sm:$0x7f] %vm748, %v669
        %758 = vst.msk [vmem:[#allocation2 + $0x51] sm:$0xff] %vm746, %v671
        %759 = vst.msk [vmem:[#allocation2 + $0x59] sm:$0x7f] %vm748, %v673
        %760 = vst.msk [vmem:[#allocation2 + $0x61] sm:$0xff] %vm746, %v675
        %761 = vst.msk [vmem:[#allocation2 + $0x69] sm:$0x7f] %vm748, %v677
        %762 = vst.msk [vmem:[#allocation2 + $0x71] sm:$0xff] %vm746, %v679
        %763 = vst.msk [vmem:[#allocation2 + $0x79] sm:$0x7f] %vm748, %v681
        %764 = vst.msk [vmem:[#allocation2 + $0x81] sm:$0xff] %vm746, %v683
        %765 = vst.msk [vmem:[#allocation2 + $0x89] sm:$0x7f] %vm748, %v685
        %766 = vst.msk [vmem:[#allocation2 + $0x91] sm:$0xff] %vm746, %v687
        %767 = vst.msk [vmem:[#allocation2 + $0x99] sm:$0x7f] %vm748, %v689
        %768 = vst.msk [vmem:[#allocation2 + $0xa1] sm:$0xff] %vm746, %v691
        %769 = vst.msk [vmem:[#allocation2 + $0xa9] sm:$0x7f] %vm748, %v693
        %770 = vst.msk [vmem:[#allocation2 + $0xb1] sm:$0xff] %vm746, %v695
        %771 = vst.msk [vmem:[#allocation2 + $0xb9] sm:$0x7f] %vm748, %v697
        %772 = vst.msk [vmem:[#allocation2 + $0xc1] sm:$0xff] %vm746, %v699
        %773 = vst.msk [vmem:[#allocation2 + $0xc9] sm:$0x7f] %vm748, %v701
        %774 = vst.msk [vmem:[#allocation2 + $0xd1] sm:$0xff] %vm746, %v703
        %775 = vst.msk [vmem:[#allocation2 + $0xd9] sm:$0x7f] %vm748, %v705
        %776 = vst.msk [vmem:[#allocation2 + $0xe1] sm:$0xff] %vm746, %v707
        %777 = vst.msk [vmem:[#allocation2 + $0xe9] sm:$0x7f] %vm748, %v709
        %778 = vst.msk [vmem:[#allocation2 + $0xf1] sm:$0xff] %vm746, %v711
        %779 = vst.msk [vmem:[#allocation2 + $0xf9] sm:$0x7f] %vm748, %v713
        %780 = vrot.lane.b32.xlu0 %v277, 16
        %v781 = vpop.permute.xlu0 %780
        %782 = vrot.lane.b32.xlu0 %v278, 16
        %v783 = vpop.permute.xlu0 %782
        %784 = vrot.lane.b32.xlu0 %v279, 16
        %v785 = vpop.permute.xlu0 %784
        %786 = vrot.lane.b32.xlu0 %v280, 16
        %v787 = vpop.permute.xlu0 %786
        %788 = vrot.lane.b32.xlu0 %v281, 16
        %v789 = vpop.permute.xlu0 %788
        %790 = vrot.lane.b32.xlu0 %v282, 16
        %v791 = vpop.permute.xlu0 %790
        %792 = vrot.lane.b32.xlu0 %v283, 16
        %v793 = vpop.permute.xlu0 %792
        %794 = vrot.lane.b32.xlu0 %v284, 16
        %v795 = vpop.permute.xlu0 %794
        %796 = vrot.lane.b32.xlu0 %v285, 16
        %v797 = vpop.permute.xlu0 %796
        %798 = vrot.lane.b32.xlu0 %v286, 16
        %v799 = vpop.permute.xlu0 %798
        %800 = vrot.lane.b32.xlu0 %v287, 16
        %v801 = vpop.permute.xlu0 %800
        %802 = vrot.lane.b32.xlu0 %v288, 16
        %v803 = vpop.permute.xlu0 %802
        %804 = vrot.lane.b32.xlu0 %v289, 16
        %v805 = vpop.permute.xlu0 %804
        %806 = vrot.lane.b32.xlu0 %v290, 16
        %v807 = vpop.permute.xlu0 %806
        %808 = vrot.lane.b32.xlu0 %v291, 16
        %v809 = vpop.permute.xlu0 %808
        %810 = vrot.lane.b32.xlu0 %v292, 16
        %v811 = vpop.permute.xlu0 %810
        %812 = vrot.lane.b32.xlu0 %v293, 16
        %v813 = vpop.permute.xlu0 %812
        %814 = vrot.lane.b32.xlu0 %v294, 16
        %v815 = vpop.permute.xlu0 %814
        %816 = vrot.lane.b32.xlu0 %v295, 16
        %v817 = vpop.permute.xlu0 %816
        %818 = vrot.lane.b32.xlu0 %v296, 16
        %v819 = vpop.permute.xlu0 %818
        %820 = vrot.lane.b32.xlu0 %v297, 16
        %v821 = vpop.permute.xlu0 %820
        %822 = vrot.lane.b32.xlu0 %v298, 16
        %v823 = vpop.permute.xlu0 %822
        %824 = vrot.lane.b32.xlu0 %v299, 16
        %v825 = vpop.permute.xlu0 %824
        %826 = vrot.lane.b32.xlu0 %v300, 16
        %v827 = vpop.permute.xlu0 %826
        %828 = vrot.lane.b32.xlu0 %v301, 16
        %v829 = vpop.permute.xlu0 %828
        %830 = vrot.lane.b32.xlu0 %v302, 16
        %v831 = vpop.permute.xlu0 %830
        %832 = vrot.lane.b32.xlu0 %v303, 16
        %v833 = vpop.permute.xlu0 %832
        %834 = vrot.lane.b32.xlu0 %v304, 16
        %v835 = vpop.permute.xlu0 %834
        %836 = vrot.lane.b32.xlu0 %v305, 16
        %v837 = vpop.permute.xlu0 %836
        %838 = vrot.lane.b32.xlu0 %v306, 16
        %v839 = vpop.permute.xlu0 %838
        %840 = vrot.lane.b32.xlu0 %v307, 16
        %v841 = vpop.permute.xlu0 %840
        %842 = vrot.lane.b32.xlu0 %v308, 16
        %v843 = vpop.permute.xlu0 %842
        %vm876 = vcmask 162944
        %877 = vst.msk [vmem:[#allocation2] sm:$0xff] %vm876, %v781
        %878 = vst.msk [vmem:[#allocation2 + $0x8] sm:$0xff] %vm876, %v783
        %879 = vst.msk [vmem:[#allocation2 + $0x10] sm:$0xff] %vm876, %v785
        %880 = vst.msk [vmem:[#allocation2 + $0x18] sm:$0xff] %vm876, %v787
        %881 = vst.msk [vmem:[#allocation2 + $0x20] sm:$0xff] %vm876, %v789
        %882 = vst.msk [vmem:[#allocation2 + $0x28] sm:$0xff] %vm876, %v791
        %883 = vst.msk [vmem:[#allocation2 + $0x30] sm:$0xff] %vm876, %v793
        %884 = vst.msk [vmem:[#allocation2 + $0x38] sm:$0xff] %vm876, %v795
        %885 = vst.msk [vmem:[#allocation2 + $0x40] sm:$0xff] %vm876, %v797
        %886 = vst.msk [vmem:[#allocation2 + $0x48] sm:$0xff] %vm876, %v799
        %887 = vst.msk [vmem:[#allocation2 + $0x50] sm:$0xff] %vm876, %v801
        %888 = vst.msk [vmem:[#allocation2 + $0x58] sm:$0xff] %vm876, %v803
        %889 = vst.msk [vmem:[#allocation2 + $0x60] sm:$0xff] %vm876, %v805
        %890 = vst.msk [vmem:[#allocation2 + $0x68] sm:$0xff] %vm876, %v807
        %891 = vst.msk [vmem:[#allocation2 + $0x70] sm:$0xff] %vm876, %v809
        %892 = vst.msk [vmem:[#allocation2 + $0x78] sm:$0xff] %vm876, %v811
        %893 = vst.msk [vmem:[#allocation2 + $0x80] sm:$0xff] %vm876, %v813
        %894 = vst.msk [vmem:[#allocation2 + $0x88] sm:$0xff] %vm876, %v815
        %895 = vst.msk [vmem:[#allocation2 + $0x90] sm:$0xff] %vm876, %v817
        %896 = vst.msk [vmem:[#allocation2 + $0x98] sm:$0xff] %vm876, %v819
        %897 = vst.msk [vmem:[#allocation2 + $0xa0] sm:$0xff] %vm876, %v821
        %898 = vst.msk [vmem:[#allocation2 + $0xa8] sm:$0xff] %vm876, %v823
        %899 = vst.msk [vmem:[#allocation2 + $0xb0] sm:$0xff] %vm876, %v825
        %900 = vst.msk [vmem:[#allocation2 + $0xb8] sm:$0xff] %vm876, %v827
        %901 = vst.msk [vmem:[#allocation2 + $0xc0] sm:$0xff] %vm876, %v829
        %902 = vst.msk [vmem:[#allocation2 + $0xc8] sm:$0xff] %vm876, %v831
        %903 = vst.msk [vmem:[#allocation2 + $0xd0] sm:$0xff] %vm876, %v833
        %904 = vst.msk [vmem:[#allocation2 + $0xd8] sm:$0xff] %vm876, %v835
        %905 = vst.msk [vmem:[#allocation2 + $0xe0] sm:$0xff] %vm876, %v837
        %906 = vst.msk [vmem:[#allocation2 + $0xe8] sm:$0xff] %vm876, %v839
        %907 = vst.msk [vmem:[#allocation2 + $0xf0] sm:$0xff] %vm876, %v841
        %908 = vst.msk [vmem:[#allocation2 + $0xf8] sm:$0xff] %vm876, %v843
        %909 = vrot.lane.b32.xlu0 %v277, 20
        %v910 = vpop.permute.xlu0 %909
        %911 = vrot.lane.b32.xlu0 %v278, 20
        %v912 = vpop.permute.xlu0 %911
        %913 = vrot.lane.b32.xlu0 %v279, 20
        %v914 = vpop.permute.xlu0 %913
        %915 = vrot.lane.b32.xlu0 %v280, 20
        %v916 = vpop.permute.xlu0 %915
        %917 = vrot.lane.b32.xlu0 %v281, 20
        %v918 = vpop.permute.xlu0 %917
        %919 = vrot.lane.b32.xlu0 %v282, 20
        %v920 = vpop.permute.xlu0 %919
        %921 = vrot.lane.b32.xlu0 %v283, 20
        %v922 = vpop.permute.xlu0 %921
        %923 = vrot.lane.b32.xlu0 %v284, 20
        %v924 = vpop.permute.xlu0 %923
        %925 = vrot.lane.b32.xlu0 %v285, 20
        %v926 = vpop.permute.xlu0 %925
        %927 = vrot.lane.b32.xlu0 %v286, 20
        %v928 = vpop.permute.xlu0 %927
        %929 = vrot.lane.b32.xlu0 %v287, 20
        %v930 = vpop.permute.xlu0 %929
        %931 = vrot.lane.b32.xlu0 %v288, 20
        %v932 = vpop.permute.xlu0 %931
        %933 = vrot.lane.b32.xlu0 %v289, 20
        %v934 = vpop.permute.xlu0 %933
        %935 = vrot.lane.b32.xlu0 %v290, 20
        %v936 = vpop.permute.xlu0 %935
        %937 = vrot.lane.b32.xlu0 %v291, 20
        %v938 = vpop.permute.xlu0 %937
        %939 = vrot.lane.b32.xlu0 %v292, 20
        %v940 = vpop.permute.xlu0 %939
        %941 = vrot.lane.b32.xlu0 %v293, 20
        %v942 = vpop.permute.xlu0 %941
        %943 = vrot.lane.b32.xlu0 %v294, 20
        %v944 = vpop.permute.xlu0 %943
        %945 = vrot.lane.b32.xlu0 %v295, 20
        %v946 = vpop.permute.xlu0 %945
        %947 = vrot.lane.b32.xlu0 %v296, 20
        %v948 = vpop.permute.xlu0 %947
        %949 = vrot.lane.b32.xlu0 %v297, 20
        %v950 = vpop.permute.xlu0 %949
        %951 = vrot.lane.b32.xlu0 %v298, 20
        %v952 = vpop.permute.xlu0 %951
        %953 = vrot.lane.b32.xlu0 %v299, 20
        %v954 = vpop.permute.xlu0 %953
        %955 = vrot.lane.b32.xlu0 %v300, 20
        %v956 = vpop.permute.xlu0 %955
        %957 = vrot.lane.b32.xlu0 %v301, 20
        %v958 = vpop.permute.xlu0 %957
        %959 = vrot.lane.b32.xlu0 %v302, 20
        %v960 = vpop.permute.xlu0 %959
        %961 = vrot.lane.b32.xlu0 %v303, 20
        %v962 = vpop.permute.xlu0 %961
        %963 = vrot.lane.b32.xlu0 %v304, 20
        %v964 = vpop.permute.xlu0 %963
        %965 = vrot.lane.b32.xlu0 %v305, 20
        %v966 = vpop.permute.xlu0 %965
        %967 = vrot.lane.b32.xlu0 %v306, 20
        %v968 = vpop.permute.xlu0 %967
        %969 = vrot.lane.b32.xlu0 %v307, 20
        %v970 = vpop.permute.xlu0 %969
        %971 = vrot.lane.b32.xlu0 %v308, 20
        %v972 = vpop.permute.xlu0 %971
        %vm1005 = vcmask 195745
        %1006 = vst.msk [vmem:[#allocation2 - $0x1] sm:$0xfe] %vm1005, %v910
        %vm1007 = vcmask 195744
        %1008 = vst.msk [vmem:[#allocation2 + $0x7] sm:$0xff] %vm1007, %v912
        %1009 = vst.msk [vmem:[#allocation2 + $0xf] sm:$0xfe] %vm1005, %v914
        %1010 = vst.msk [vmem:[#allocation2 + $0x17] sm:$0xff] %vm1007, %v916
        %1011 = vst.msk [vmem:[#allocation2 + $0x1f] sm:$0xfe] %vm1005, %v918
        %1012 = vst.msk [vmem:[#allocation2 + $0x27] sm:$0xff] %vm1007, %v920
        %1013 = vst.msk [vmem:[#allocation2 + $0x2f] sm:$0xfe] %vm1005, %v922
        %1014 = vst.msk [vmem:[#allocation2 + $0x37] sm:$0xff] %vm1007, %v924
        %1015 = vst.msk [vmem:[#allocation2 + $0x3f] sm:$0xfe] %vm1005, %v926
        %1016 = vst.msk [vmem:[#allocation2 + $0x47] sm:$0xff] %vm1007, %v928
        %1017 = vst.msk [vmem:[#allocation2 + $0x4f] sm:$0xfe] %vm1005, %v930
        %1018 = vst.msk [vmem:[#allocation2 + $0x57] sm:$0xff] %vm1007, %v932
        %1019 = vst.msk [vmem:[#allocation2 + $0x5f] sm:$0xfe] %vm1005, %v934
        %1020 = vst.msk [vmem:[#allocation2 + $0x67] sm:$0xff] %vm1007, %v936
        %1021 = vst.msk [vmem:[#allocation2 + $0x6f] sm:$0xfe] %vm1005, %v938
        %1022 = vst.msk [vmem:[#allocation2 + $0x77] sm:$0xff] %vm1007, %v940
        %1023 = vst.msk [vmem:[#allocation2 + $0x7f] sm:$0xfe] %vm1005, %v942
        %1024 = vst.msk [vmem:[#allocation2 + $0x87] sm:$0xff] %vm1007, %v944
        %1025 = vst.msk [vmem:[#allocation2 + $0x8f] sm:$0xfe] %vm1005, %v946
        %1026 = vst.msk [vmem:[#allocation2 + $0x97] sm:$0xff] %vm1007, %v948
        %1027 = vst.msk [vmem:[#allocation2 + $0x9f] sm:$0xfe] %vm1005, %v950
        %1028 = vst.msk [vmem:[#allocation2 + $0xa7] sm:$0xff] %vm1007, %v952
        %1029 = vst.msk [vmem:[#allocation2 + $0xaf] sm:$0xfe] %vm1005, %v954
        %1030 = vst.msk [vmem:[#allocation2 + $0xb7] sm:$0xff] %vm1007, %v956
        %1031 = vst.msk [vmem:[#allocation2 + $0xbf] sm:$0xfe] %vm1005, %v958
        %1032 = vst.msk [vmem:[#allocation2 + $0xc7] sm:$0xff] %vm1007, %v960
        %1033 = vst.msk [vmem:[#allocation2 + $0xcf] sm:$0xfe] %vm1005, %v962
        %1034 = vst.msk [vmem:[#allocation2 + $0xd7] sm:$0xff] %vm1007, %v964
        %1035 = vst.msk [vmem:[#allocation2 + $0xdf] sm:$0xfe] %vm1005, %v966
        %1036 = vst.msk [vmem:[#allocation2 + $0xe7] sm:$0xff] %vm1007, %v968
        %1037 = vst.msk [vmem:[#allocation2 + $0xef] sm:$0xfe] %vm1005, %v970
        %1038 = vst.msk [vmem:[#allocation2 + $0xf7] sm:$0xff] %vm1007, %v972
        %1039 = vrot.lane.b32.xlu0 %v279, 24
        %v1040 = vpop.permute.xlu0 %1039
        %1041 = vrot.lane.b32.xlu0 %v280, 24
        %v1042 = vpop.permute.xlu0 %1041
        %1043 = vrot.lane.b32.xlu0 %v281, 24
        %v1044 = vpop.permute.xlu0 %1043
        %1045 = vrot.lane.b32.xlu0 %v282, 24
        %v1046 = vpop.permute.xlu0 %1045
        %1047 = vrot.lane.b32.xlu0 %v283, 24
        %v1048 = vpop.permute.xlu0 %1047
        %1049 = vrot.lane.b32.xlu0 %v284, 24
        %v1050 = vpop.permute.xlu0 %1049
        %1051 = vrot.lane.b32.xlu0 %v285, 24
        %v1052 = vpop.permute.xlu0 %1051
        %1053 = vrot.lane.b32.xlu0 %v286, 24
        %v1054 = vpop.permute.xlu0 %1053
        %1055 = vrot.lane.b32.xlu0 %v287, 24
        %v1056 = vpop.permute.xlu0 %1055
        %1057 = vrot.lane.b32.xlu0 %v288, 24
        %v1058 = vpop.permute.xlu0 %1057
        %1059 = vrot.lane.b32.xlu0 %v289, 24
        %v1060 = vpop.permute.xlu0 %1059
        %1061 = vrot.lane.b32.xlu0 %v290, 24
        %v1062 = vpop.permute.xlu0 %1061
        %1063 = vrot.lane.b32.xlu0 %v291, 24
        %v1064 = vpop.permute.xlu0 %1063
        %1065 = vrot.lane.b32.xlu0 %v292, 24
        %v1066 = vpop.permute.xlu0 %1065
        %1067 = vrot.lane.b32.xlu0 %v293, 24
        %v1068 = vpop.permute.xlu0 %1067
        %1069 = vrot.lane.b32.xlu0 %v294, 24
        %v1070 = vpop.permute.xlu0 %1069
        %1071 = vrot.lane.b32.xlu0 %v295, 24
        %v1072 = vpop.permute.xlu0 %1071
        %1073 = vrot.lane.b32.xlu0 %v296, 24
        %v1074 = vpop.permute.xlu0 %1073
        %1075 = vrot.lane.b32.xlu0 %v297, 24
        %v1076 = vpop.permute.xlu0 %1075
        %1077 = vrot.lane.b32.xlu0 %v298, 24
        %v1078 = vpop.permute.xlu0 %1077
        %1079 = vrot.lane.b32.xlu0 %v299, 24
        %v1080 = vpop.permute.xlu0 %1079
        %1081 = vrot.lane.b32.xlu0 %v300, 24
        %v1082 = vpop.permute.xlu0 %1081
        %1083 = vrot.lane.b32.xlu0 %v301, 24
        %v1084 = vpop.permute.xlu0 %1083
        %1085 = vrot.lane.b32.xlu0 %v302, 24
        %v1086 = vpop.permute.xlu0 %1085
        %1087 = vrot.lane.b32.xlu0 %v303, 24
        %v1088 = vpop.permute.xlu0 %1087
        %1089 = vrot.lane.b32.xlu0 %v304, 24
        %v1090 = vpop.permute.xlu0 %1089
        %1091 = vrot.lane.b32.xlu0 %v305, 24
        %v1092 = vpop.permute.xlu0 %1091
        %1093 = vrot.lane.b32.xlu0 %v306, 24
        %v1094 = vpop.permute.xlu0 %1093
        %1095 = vrot.lane.b32.xlu0 %v307, 24
        %v1096 = vpop.permute.xlu0 %1095
        %1097 = vrot.lane.b32.xlu0 %v308, 24
        %v1098 = vpop.permute.xlu0 %1097
        %vm1129 = vcmask 228544
        %1130 = vst.msk [vmem:[#allocation2 + $0x1] sm:$0xff] %vm1129, %v1040
        %vm1131 = vcmask 227520
        %1132 = vst.msk [vmem:[#allocation2 + $0x9] sm:$0x7f] %vm1131, %v1042
        %1133 = vst.msk [vmem:[#allocation2 + $0x11] sm:$0xff] %vm1129, %v1044
        %1134 = vst.msk [vmem:[#allocation2 + $0x19] sm:$0x7f] %vm1131, %v1046
        %1135 = vst.msk [vmem:[#allocation2 + $0x21] sm:$0xff] %vm1129, %v1048
        %1136 = vst.msk [vmem:[#allocation2 + $0x29] sm:$0x7f] %vm1131, %v1050
        %1137 = vst.msk [vmem:[#allocation2 + $0x31] sm:$0xff] %vm1129, %v1052
        %1138 = vst.msk [vmem:[#allocation2 + $0x39] sm:$0x7f] %vm1131, %v1054
        %1139 = vst.msk [vmem:[#allocation2 + $0x41] sm:$0xff] %vm1129, %v1056
        %1140 = vst.msk [vmem:[#allocation2 + $0x49] sm:$0x7f] %vm1131, %v1058
        %1141 = vst.msk [vmem:[#allocation2 + $0x51] sm:$0xff] %vm1129, %v1060
        %1142 = vst.msk [vmem:[#allocation2 + $0x59] sm:$0x7f] %vm1131, %v1062
        %1143 = vst.msk [vmem:[#allocation2 + $0x61] sm:$0xff] %vm1129, %v1064
        %1144 = vst.msk [vmem:[#allocation2 + $0x69] sm:$0x7f] %vm1131, %v1066
        %1145 = vst.msk [vmem:[#allocation2 + $0x71] sm:$0xff] %vm1129, %v1068
        %1146 = vst.msk [vmem:[#allocation2 + $0x79] sm:$0x7f] %vm1131, %v1070
        %1147 = vst.msk [vmem:[#allocation2 + $0x81] sm:$0xff] %vm1129, %v1072
        %1148 = vst.msk [vmem:[#allocation2 + $0x89] sm:$0x7f] %vm1131, %v1074
        %1149 = vst.msk [vmem:[#allocation2 + $0x91] sm:$0xff] %vm1129, %v1076
        %1150 = vst.msk [vmem:[#allocation2 + $0x99] sm:$0x7f] %vm1131, %v1078
        %1151 = vst.msk [vmem:[#allocation2 + $0xa1] sm:$0xff] %vm1129, %v1080
        %1152 = vst.msk [vmem:[#allocation2 + $0xa9] sm:$0x7f] %vm1131, %v1082
        %1153 = vst.msk [vmem:[#allocation2 + $0xb1] sm:$0xff] %vm1129, %v1084
        %1154 = vst.msk [vmem:[#allocation2 + $0xb9] sm:$0x7f] %vm1131, %v1086
        %1155 = vst.msk [vmem:[#allocation2 + $0xc1] sm:$0xff] %vm1129, %v1088
        %1156 = vst.msk [vmem:[#allocation2 + $0xc9] sm:$0x7f] %vm1131, %v1090
        %1157 = vst.msk [vmem:[#allocation2 + $0xd1] sm:$0xff] %vm1129, %v1092
        %1158 = vst.msk [vmem:[#allocation2 + $0xd9] sm:$0x7f] %vm1131, %v1094
        %1159 = vst.msk [vmem:[#allocation2 + $0xe1] sm:$0xff] %vm1129, %v1096
        %1160 = vst.msk [vmem:[#allocation2 + $0xe9] sm:$0x7f] %vm1131, %v1098
        %1161 = vrot.lane.b32.xlu0 %v279, 28
        %v1162 = vpop.permute.xlu0 %1161
        %1163 = vrot.lane.b32.xlu0 %v280, 28
        %v1164 = vpop.permute.xlu0 %1163
        %1165 = vrot.lane.b32.xlu0 %v281, 28
        %v1166 = vpop.permute.xlu0 %1165
        %1167 = vrot.lane.b32.xlu0 %v282, 28
        %v1168 = vpop.permute.xlu0 %1167
        %1169 = vrot.lane.b32.xlu0 %v283, 28
        %v1170 = vpop.permute.xlu0 %1169
        %1171 = vrot.lane.b32.xlu0 %v284, 28
        %v1172 = vpop.permute.xlu0 %1171
        %1173 = vrot.lane.b32.xlu0 %v285, 28
        %v1174 = vpop.permute.xlu0 %1173
        %1175 = vrot.lane.b32.xlu0 %v286, 28
        %v1176 = vpop.permute.xlu0 %1175
        %1177 = vrot.lane.b32.xlu0 %v287, 28
        %v1178 = vpop.permute.xlu0 %1177
        %1179 = vrot.lane.b32.xlu0 %v288, 28
        %v1180 = vpop.permute.xlu0 %1179
        %1181 = vrot.lane.b32.xlu0 %v289, 28
        %v1182 = vpop.permute.xlu0 %1181
        %1183 = vrot.lane.b32.xlu0 %v290, 28
        %v1184 = vpop.permute.xlu0 %1183
        %1185 = vrot.lane.b32.xlu0 %v291, 28
        %v1186 = vpop.permute.xlu0 %1185
        %1187 = vrot.lane.b32.xlu0 %v292, 28
        %v1188 = vpop.permute.xlu0 %1187
        %1189 = vrot.lane.b32.xlu0 %v293, 28
        %v1190 = vpop.permute.xlu0 %1189
        %1191 = vrot.lane.b32.xlu0 %v294, 28
        %v1192 = vpop.permute.xlu0 %1191
        %1193 = vrot.lane.b32.xlu0 %v295, 28
        %v1194 = vpop.permute.xlu0 %1193
        %1195 = vrot.lane.b32.xlu0 %v296, 28
        %v1196 = vpop.permute.xlu0 %1195
        %1197 = vrot.lane.b32.xlu0 %v297, 28
        %v1198 = vpop.permute.xlu0 %1197
        %1199 = vrot.lane.b32.xlu0 %v298, 28
        %v1200 = vpop.permute.xlu0 %1199
        %1201 = vrot.lane.b32.xlu0 %v299, 28
        %v1202 = vpop.permute.xlu0 %1201
        %1203 = vrot.lane.b32.xlu0 %v300, 28
        %v1204 = vpop.permute.xlu0 %1203
        %1205 = vrot.lane.b32.xlu0 %v301, 28
        %v1206 = vpop.permute.xlu0 %1205
        %1207 = vrot.lane.b32.xlu0 %v302, 28
        %v1208 = vpop.permute.xlu0 %1207
        %1209 = vrot.lane.b32.xlu0 %v303, 28
        %v1210 = vpop.permute.xlu0 %1209
        %1211 = vrot.lane.b32.xlu0 %v304, 28
        %v1212 = vpop.permute.xlu0 %1211
        %1213 = vrot.lane.b32.xlu0 %v305, 28
        %v1214 = vpop.permute.xlu0 %1213
        %1215 = vrot.lane.b32.xlu0 %v306, 28
        %v1216 = vpop.permute.xlu0 %1215
        %1217 = vrot.lane.b32.xlu0 %v307, 28
        %v1218 = vpop.permute.xlu0 %1217
        %1219 = vrot.lane.b32.xlu0 %v308, 28
        %v1220 = vpop.permute.xlu0 %1219
        %vm1251 = vcmask 261344
        %1252 = vst.msk [vmem:[#allocation2] sm:$0xff] %vm1251, %v1162
        %1253 = vst.msk [vmem:[#allocation2 + $0x8] sm:$0xff] %vm1251, %v1164
        %1254 = vst.msk [vmem:[#allocation2 + $0x10] sm:$0xff] %vm1251, %v1166
        %1255 = vst.msk [vmem:[#allocation2 + $0x18] sm:$0xff] %vm1251, %v1168
        %1256 = vst.msk [vmem:[#allocation2 + $0x20] sm:$0xff] %vm1251, %v1170
        %1257 = vst.msk [vmem:[#allocation2 + $0x28] sm:$0xff] %vm1251, %v1172
        %1258 = vst.msk [vmem:[#allocation2 + $0x30] sm:$0xff] %vm1251, %v1174
        %1259 = vst.msk [vmem:[#allocation2 + $0x38] sm:$0xff] %vm1251, %v1176
        %1260 = vst.msk [vmem:[#allocation2 + $0x40] sm:$0xff] %vm1251, %v1178
        %1261 = vst.msk [vmem:[#allocation2 + $0x48] sm:$0xff] %vm1251, %v1180
        %1262 = vst.msk [vmem:[#allocation2 + $0x50] sm:$0xff] %vm1251, %v1182
        %1263 = vst.msk [vmem:[#allocation2 + $0x58] sm:$0xff] %vm1251, %v1184
        %1264 = vst.msk [vmem:[#allocation2 + $0x60] sm:$0xff] %vm1251, %v1186
        %1265 = vst.msk [vmem:[#allocation2 + $0x68] sm:$0xff] %vm1251, %v1188
        %1266 = vst.msk [vmem:[#allocation2 + $0x70] sm:$0xff] %vm1251, %v1190
        %1267 = vst.msk [vmem:[#allocation2 + $0x78] sm:$0xff] %vm1251, %v1192
        %1268 = vst.msk [vmem:[#allocation2 + $0x80] sm:$0xff] %vm1251, %v1194
        %1269 = vst.msk [vmem:[#allocation2 + $0x88] sm:$0xff] %vm1251, %v1196
        %1270 = vst.msk [vmem:[#allocation2 + $0x90] sm:$0xff] %vm1251, %v1198
        %1271 = vst.msk [vmem:[#allocation2 + $0x98] sm:$0xff] %vm1251, %v1200
        %1272 = vst.msk [vmem:[#allocation2 + $0xa0] sm:$0xff] %vm1251, %v1202
        %1273 = vst.msk [vmem:[#allocation2 + $0xa8] sm:$0xff] %vm1251, %v1204
        %1274 = vst.msk [vmem:[#allocation2 + $0xb0] sm:$0xff] %vm1251, %v1206
        %1275 = vst.msk [vmem:[#allocation2 + $0xb8] sm:$0xff] %vm1251, %v1208
        %1276 = vst.msk [vmem:[#allocation2 + $0xc0] sm:$0xff] %vm1251, %v1210
        %1277 = vst.msk [vmem:[#allocation2 + $0xc8] sm:$0xff] %vm1251, %v1212
        %1278 = vst.msk [vmem:[#allocation2 + $0xd0] sm:$0xff] %vm1251, %v1214
        %1279 = vst.msk [vmem:[#allocation2 + $0xd8] sm:$0xff] %vm1251, %v1216
        %1280 = vst.msk [vmem:[#allocation2 + $0xe0] sm:$0xff] %vm1251, %v1218
        %1281 = vst.msk [vmem:[#allocation2 + $0xe8] sm:$0xff] %vm1251, %v1220
        %1282 = vrot.lane.b32.xlu0 %v279, 32
        %v1283 = vpop.permute.xlu0 %1282
        %1284 = vrot.lane.b32.xlu0 %v280, 32
        %v1285 = vpop.permute.xlu0 %1284
        %1286 = vrot.lane.b32.xlu0 %v281, 32
        %v1287 = vpop.permute.xlu0 %1286
        %1288 = vrot.lane.b32.xlu0 %v282, 32
        %v1289 = vpop.permute.xlu0 %1288
        %1290 = vrot.lane.b32.xlu0 %v283, 32
        %v1291 = vpop.permute.xlu0 %1290
        %1292 = vrot.lane.b32.xlu0 %v284, 32
        %v1293 = vpop.permute.xlu0 %1292
        %1294 = vrot.lane.b32.xlu0 %v285, 32
        %v1295 = vpop.permute.xlu0 %1294
        %1296 = vrot.lane.b32.xlu0 %v286, 32
        %v1297 = vpop.permute.xlu0 %1296
        %1298 = vrot.lane.b32.xlu0 %v287, 32
        %v1299 = vpop.permute.xlu0 %1298
        %1300 = vrot.lane.b32.xlu0 %v288, 32
        %v1301 = vpop.permute.xlu0 %1300
        %1302 = vrot.lane.b32.xlu0 %v289, 32
        %v1303 = vpop.permute.xlu0 %1302
        %1304 = vrot.lane.b32.xlu0 %v290, 32
        %v1305 = vpop.permute.xlu0 %1304
        %1306 = vrot.lane.b32.xlu0 %v291, 32
        %v1307 = vpop.permute.xlu0 %1306
        %1308 = vrot.lane.b32.xlu0 %v292, 32
        %v1309 = vpop.permute.xlu0 %1308
        %1310 = vrot.lane.b32.xlu0 %v293, 32
        %v1311 = vpop.permute.xlu0 %1310
        %1312 = vrot.lane.b32.xlu0 %v294, 32
        %v1313 = vpop.permute.xlu0 %1312
        %1314 = vrot.lane.b32.xlu0 %v295, 32
        %v1315 = vpop.permute.xlu0 %1314
        %1316 = vrot.lane.b32.xlu0 %v296, 32
        %v1317 = vpop.permute.xlu0 %1316
        %1318 = vrot.lane.b32.xlu0 %v297, 32
        %v1319 = vpop.permute.xlu0 %1318
        %1320 = vrot.lane.b32.xlu0 %v298, 32
        %v1321 = vpop.permute.xlu0 %1320
        %1322 = vrot.lane.b32.xlu0 %v299, 32
        %v1323 = vpop.permute.xlu0 %1322
        %1324 = vrot.lane.b32.xlu0 %v300, 32
        %v1325 = vpop.permute.xlu0 %1324
        %1326 = vrot.lane.b32.xlu0 %v301, 32
        %v1327 = vpop.permute.xlu0 %1326
        %1328 = vrot.lane.b32.xlu0 %v302, 32
        %v1329 = vpop.permute.xlu0 %1328
        %1330 = vrot.lane.b32.xlu0 %v303, 32
        %v1331 = vpop.permute.xlu0 %1330
        %1332 = vrot.lane.b32.xlu0 %v304, 32
        %v1333 = vpop.permute.xlu0 %1332
        %1334 = vrot.lane.b32.xlu0 %v305, 32
        %v1335 = vpop.permute.xlu0 %1334
        %1336 = vrot.lane.b32.xlu0 %v306, 32
        %v1337 = vpop.permute.xlu0 %1336
        %1338 = vrot.lane.b32.xlu0 %v307, 32
        %v1339 = vpop.permute.xlu0 %1338
        %1340 = vrot.lane.b32.xlu0 %v308, 32
        %v1341 = vpop.permute.xlu0 %1340
        %vm1372 = vcmask 294145
        %1373 = vst.msk [vmem:[#allocation2 - $0x1] sm:$0xfe] %vm1372, %v1283
        %vm1374 = vcmask 294144
        %1375 = vst.msk [vmem:[#allocation2 + $0x7] sm:$0xff] %vm1374, %v1285
        %1376 = vst.msk [vmem:[#allocation2 + $0xf] sm:$0xfe] %vm1372, %v1287
        %1377 = vst.msk [vmem:[#allocation2 + $0x17] sm:$0xff] %vm1374, %v1289
        %1378 = vst.msk [vmem:[#allocation2 + $0x1f] sm:$0xfe] %vm1372, %v1291
        %1379 = vst.msk [vmem:[#allocation2 + $0x27] sm:$0xff] %vm1374, %v1293
        %1380 = vst.msk [vmem:[#allocation2 + $0x2f] sm:$0xfe] %vm1372, %v1295
        %1381 = vst.msk [vmem:[#allocation2 + $0x37] sm:$0xff] %vm1374, %v1297
        %1382 = vst.msk [vmem:[#allocation2 + $0x3f] sm:$0xfe] %vm1372, %v1299
        %1383 = vst.msk [vmem:[#allocation2 + $0x47] sm:$0xff] %vm1374, %v1301
        %1384 = vst.msk [vmem:[#allocation2 + $0x4f] sm:$0xfe] %vm1372, %v1303
        %1385 = vst.msk [vmem:[#allocation2 + $0x57] sm:$0xff] %vm1374, %v1305
        %1386 = vst.msk [vmem:[#allocation2 + $0x5f] sm:$0xfe] %vm1372, %v1307
        %1387 = vst.msk [vmem:[#allocation2 + $0x67] sm:$0xff] %vm1374, %v1309
        %1388 = vst.msk [vmem:[#allocation2 + $0x6f] sm:$0xfe] %vm1372, %v1311
        %1389 = vst.msk [vmem:[#allocation2 + $0x77] sm:$0xff] %vm1374, %v1313
        %1390 = vst.msk [vmem:[#allocation2 + $0x7f] sm:$0xfe] %vm1372, %v1315
        %1391 = vst.msk [vmem:[#allocation2 + $0x87] sm:$0xff] %vm1374, %v1317
        %1392 = vst.msk [vmem:[#allocation2 + $0x8f] sm:$0xfe] %vm1372, %v1319
        %1393 = vst.msk [vmem:[#allocation2 + $0x97] sm:$0xff] %vm1374, %v1321
        %1394 = vst.msk [vmem:[#allocation2 + $0x9f] sm:$0xfe] %vm1372, %v1323
        %1395 = vst.msk [vmem:[#allocation2 + $0xa7] sm:$0xff] %vm1374, %v1325
        %1396 = vst.msk [vmem:[#allocation2 + $0xaf] sm:$0xfe] %vm1372, %v1327
        %1397 = vst.msk [vmem:[#allocation2 + $0xb7] sm:$0xff] %vm1374, %v1329
        %1398 = vst.msk [vmem:[#allocation2 + $0xbf] sm:$0xfe] %vm1372, %v1331
        %1399 = vst.msk [vmem:[#allocation2 + $0xc7] sm:$0xff] %vm1374, %v1333
        %1400 = vst.msk [vmem:[#allocation2 + $0xcf] sm:$0xfe] %vm1372, %v1335
        %1401 = vst.msk [vmem:[#allocation2 + $0xd7] sm:$0xff] %vm1374, %v1337
        %1402 = vst.msk [vmem:[#allocation2 + $0xdf] sm:$0xfe] %vm1372, %v1339
        %1403 = vst.msk [vmem:[#allocation2 + $0xe7] sm:$0xff] %vm1374, %v1341
        %v1404 = vld [vmem:[#allocation2] sm:$0xff]
        %v1405 = vld [vmem:[#allocation2 + $0x8] sm:$0xff]
        %v1406 = vld [vmem:[#allocation2 + $0x10] sm:$0xff]
        %v1407 = vld [vmem:[#allocation2 + $0x18] sm:$0xff]
        %v1408 = vld [vmem:[#allocation2 + $0x20] sm:$0xff]
        %v1409 = vld [vmem:[#allocation2 + $0x28] sm:$0xff]
        %v1410 = vld [vmem:[#allocation2 + $0x30] sm:$0xff]
        %v1411 = vld [vmem:[#allocation2 + $0x38] sm:$0xff]
        %v1412 = vld [vmem:[#allocation2 + $0x40] sm:$0xff]
        %v1413 = vld [vmem:[#allocation2 + $0x48] sm:$0xff]
        %v1414 = vld [vmem:[#allocation2 + $0x50] sm:$0xff]
        %v1415 = vld [vmem:[#allocation2 + $0x58] sm:$0xff]
        %v1416 = vld [vmem:[#allocation2 + $0x60] sm:$0xff]
        %v1417 = vld [vmem:[#allocation2 + $0x68] sm:$0xff]
        %v1418 = vld [vmem:[#allocation2 + $0x70] sm:$0xff]
        %v1419 = vld [vmem:[#allocation2 + $0x78] sm:$0xff]
        %v1420 = vld [vmem:[#allocation2 + $0x80] sm:$0xff]
        %v1421 = vld [vmem:[#allocation2 + $0x88] sm:$0xff]
        %v1422 = vld [vmem:[#allocation2 + $0x90] sm:$0xff]
        %v1423 = vld [vmem:[#allocation2 + $0x98] sm:$0xff]
        %v1424 = vld [vmem:[#allocation2 + $0xa0] sm:$0xff]
        %v1425 = vld [vmem:[#allocation2 + $0xa8] sm:$0xff]
        %v1426 = vld [vmem:[#allocation2 + $0xb0] sm:$0xff]
        %v1427 = vld [vmem:[#allocation2 + $0xb8] sm:$0xff]
        %v1428 = vld [vmem:[#allocation2 + $0xc0] sm:$0xff]
        %v1429 = vld [vmem:[#allocation2 + $0xc8] sm:$0xff]
        %v1430 = vld [vmem:[#allocation2 + $0xd0] sm:$0xff]
        %v1431 = vld [vmem:[#allocation2 + $0xd8] sm:$0xff]
        %v1432 = vld [vmem:[#allocation2 + $0xe0] sm:$0xff]
        %v1433 = vld [vmem:[#allocation2 + $0xe8] sm:$0xff]
        %v1434 = vld [vmem:[#allocation2 + $0xf0] sm:$0xff]
        %v1435 = vld [vmem:[#allocation2 + $0xf8] sm:$0xff]
        %v1436 = vld [vmem:[%s1] sm:$0xff]
        %v1437 = vld [vmem:[%s1 + $0x8] sm:$0xff]
        %v1438 = vld [vmem:[%s1 + $0x10] sm:$0xff]
        %v1439 = vld [vmem:[%s1 + $0x18] sm:$0xff]
        %v1440 = vld [vmem:[%s1 + $0x20] sm:$0xf]
        %v1442 = vsel %vm309, %v1404, 0
        %v1445 = vsel %vm309, %v1405, 0
        %v1448 = vsel %vm309, %v1406, 0
        %v1451 = vsel %vm309, %v1407, 0
        %v1454 = vsel %vm309, %v1408, 0
        %v1457 = vsel %vm309, %v1409, 0
        %v1460 = vsel %vm309, %v1410, 0
        %v1463 = vsel %vm309, %v1411, 0
        %v1466 = vsel %vm309, %v1412, 0
        %v1469 = vsel %vm309, %v1413, 0
        %v1472 = vsel %vm309, %v1414, 0
        %v1475 = vsel %vm309, %v1415, 0
        %v1478 = vsel %vm309, %v1416, 0
        %v1481 = vsel %vm309, %v1417, 0
        %v1484 = vsel %vm309, %v1418, 0
        %v1487 = vsel %vm309, %v1419, 0
        %v1490 = vsel %vm309, %v1420, 0
        %v1493 = vsel %vm309, %v1421, 0
        %v1496 = vsel %vm309, %v1422, 0
        %v1499 = vsel %vm309, %v1423, 0
        %v1502 = vsel %vm309, %v1424, 0
        %v1505 = vsel %vm309, %v1425, 0
        %v1508 = vsel %vm309, %v1426, 0
        %v1511 = vsel %vm309, %v1427, 0
        %v1514 = vsel %vm309, %v1428, 0
        %v1517 = vsel %vm309, %v1429, 0
        %v1520 = vsel %vm309, %v1430, 0
        %v1523 = vsel %vm309, %v1431, 0
        %v1526 = vsel %vm309, %v1432, 0
        %v1529 = vsel %vm309, %v1433, 0
        %v1532 = vsel %vm309, %v1434, 0
        %v1535 = vsel %vm309, %v1435, 0
        %vm1537 = vcmask 1043456
        %v1539 = vsel %vm1537, %v1440, 0
        %1541 = vmatpush.msra.mxu0 0.0
        %1542 = vmatpush.msra.mxu0 0.0
        %1543 = vmatpush.msra.mxu0 0.0
        %1544 = vmatpush.msra.mxu0 0.0
        %1545 = vmatpush.msra.mxu0 0.0
        %1546 = vmatpush.msra.mxu0 0.0
        %1547 = vmatpush.msra.mxu0 0.0
        %1548 = vmatpush.msra.mxu0 0.0
        %1549 = vmatpush.msra.mxu0 0.0
        %1550 = vmatpush.msra.mxu0 0.0
        %1551 = vmatpush.msra.mxu0 0.0
        %1552 = vmatpush.msra.mxu0 %v1539
        %1553 = vmatpush.msra.mxu0 %v1439
        %1554 = vmatpush.msra.mxu0 %v1438
        %1555 = vmatpush.msra.mxu0 %v1437
        %1556 = vmatpush.msra.mxu0 %v1436
        %1557 = vmatmul.f32.gmra.mxu0 %v1442
        %v1558 = vpop.f32.mrf.mxu0
        %v1559 = vadd.f32 0.0, %v1558
        %1560 = vmatmul.f32.gmra.mxu0 %v1445
        %v1561 = vpop.f32.mrf.mxu0
        %v1562 = vadd.f32 0.0, %v1561
        %1563 = vmatmul.f32.gmra.mxu0 %v1448
        %v1564 = vpop.f32.mrf.mxu0
        %v1565 = vadd.f32 0.0, %v1564
        %1566 = vmatmul.f32.gmra.mxu0 %v1451
        %v1567 = vpop.f32.mrf.mxu0
        %v1568 = vadd.f32 0.0, %v1567
        %1569 = vmatmul.f32.gmra.mxu0 %v1454
        %v1570 = vpop.f32.mrf.mxu0
        %v1571 = vadd.f32 0.0, %v1570
        %1572 = vmatmul.f32.gmra.mxu0 %v1457
        %v1573 = vpop.f32.mrf.mxu0
        %v1574 = vadd.f32 0.0, %v1573
        %1575 = vmatmul.f32.gmra.mxu0 %v1460
        %v1576 = vpop.f32.mrf.mxu0
        %v1577 = vadd.f32 0.0, %v1576
        %1578 = vmatmul.f32.gmra.mxu0 %v1463
        %v1579 = vpop.f32.mrf.mxu0
        %v1580 = vadd.f32 0.0, %v1579
        %1581 = vmatmul.f32.gmra.mxu0 %v1466
        %v1582 = vpop.f32.mrf.mxu0
        %v1583 = vadd.f32 0.0, %v1582
        %1584 = vmatmul.f32.gmra.mxu0 %v1469
        %v1585 = vpop.f32.mrf.mxu0
        %v1586 = vadd.f32 0.0, %v1585
        %1587 = vmatmul.f32.gmra.mxu0 %v1472
        %v1588 = vpop.f32.mrf.mxu0
        %v1589 = vadd.f32 0.0, %v1588
        %1590 = vmatmul.f32.gmra.mxu0 %v1475
        %v1591 = vpop.f32.mrf.mxu0
        %v1592 = vadd.f32 0.0, %v1591
        %1593 = vmatmul.f32.gmra.mxu0 %v1478
        %v1594 = vpop.f32.mrf.mxu0
        %v1595 = vadd.f32 0.0, %v1594
        %1596 = vmatmul.f32.gmra.mxu0 %v1481
        %v1597 = vpop.f32.mrf.mxu0
        %v1598 = vadd.f32 0.0, %v1597
        %1599 = vmatmul.f32.gmra.mxu0 %v1484
        %v1600 = vpop.f32.mrf.mxu0
        %v1601 = vadd.f32 0.0, %v1600
        %1602 = vmatmul.f32.gmra.mxu0 %v1487
        %v1603 = vpop.f32.mrf.mxu0
        %v1604 = vadd.f32 0.0, %v1603
        %1605 = vmatmul.f32.gmra.mxu0 %v1490
        %v1606 = vpop.f32.mrf.mxu0
        %v1607 = vadd.f32 0.0, %v1606
        %1608 = vmatmul.f32.gmra.mxu0 %v1493
        %v1609 = vpop.f32.mrf.mxu0
        %v1610 = vadd.f32 0.0, %v1609
        %1611 = vmatmul.f32.gmra.mxu0 %v1496
        %v1612 = vpop.f32.mrf.mxu0
        %v1613 = vadd.f32 0.0, %v1612
        %1614 = vmatmul.f32.gmra.mxu0 %v1499
        %v1615 = vpop.f32.mrf.mxu0
        %v1616 = vadd.f32 0.0, %v1615
        %1617 = vmatmul.f32.gmra.mxu0 %v1502
        %v1618 = vpop.f32.mrf.mxu0
        %v1619 = vadd.f32 0.0, %v1618
        %1620 = vmatmul.f32.gmra.mxu0 %v1505
        %v1621 = vpop.f32.mrf.mxu0
        %v1622 = vadd.f32 0.0, %v1621
        %1623 = vmatmul.f32.gmra.mxu0 %v1508
        %v1624 = vpop.f32.mrf.mxu0
        %v1625 = vadd.f32 0.0, %v1624
        %1626 = vmatmul.f32.gmra.mxu0 %v1511
        %v1627 = vpop.f32.mrf.mxu0
        %v1628 = vadd.f32 0.0, %v1627
        %1629 = vmatmul.f32.gmra.mxu0 %v1514
        %v1630 = vpop.f32.mrf.mxu0
        %v1631 = vadd.f32 0.0, %v1630
        %1632 = vmatmul.f32.gmra.mxu0 %v1517
        %v1633 = vpop.f32.mrf.mxu0
        %v1634 = vadd.f32 0.0, %v1633
        %1635 = vmatmul.f32.gmra.mxu0 %v1520
        %v1636 = vpop.f32.mrf.mxu0
        %v1637 = vadd.f32 0.0, %v1636
        %1638 = vmatmul.f32.gmra.mxu0 %v1523
        %v1639 = vpop.f32.mrf.mxu0
        %v1640 = vadd.f32 0.0, %v1639
        %1641 = vmatmul.f32.gmra.mxu0 %v1526
        %v1642 = vpop.f32.mrf.mxu0
        %v1643 = vadd.f32 0.0, %v1642
        %1644 = vmatmul.f32.gmra.mxu0 %v1529
        %v1645 = vpop.f32.mrf.mxu0
        %v1646 = vadd.f32 0.0, %v1645
        %1647 = vmatmul.f32.gmra.mxu0 %v1532
        %v1648 = vpop.f32.mrf.mxu0
        %v1649 = vadd.f32 0.0, %v1648
        %1650 = vmatmul.f32.gmra.mxu0 %v1535
        %v1651 = vpop.f32.mrf.mxu0
        %v1652 = vadd.f32 0.0, %v1651
        %1653 = vdwg.mxu0
        %v1654 = vld [vmem:[%s2] sm:$0x1]
        %v1656 = vperm.slane %v1654, 0
        %v1658 = vmul.f32 %v1559, %v1656
        %v1659 = vmul.f32 %v1562, %v1656
        %v1660 = vmul.f32 %v1565, %v1656
        %v1661 = vmul.f32 %v1568, %v1656
        %v1662 = vmul.f32 %v1571, %v1656
        %v1663 = vmul.f32 %v1574, %v1656
        %v1664 = vmul.f32 %v1577, %v1656
        %v1665 = vmul.f32 %v1580, %v1656
        %v1666 = vmul.f32 %v1583, %v1656
        %v1667 = vmul.f32 %v1586, %v1656
        %v1668 = vmul.f32 %v1589, %v1656
        %v1669 = vmul.f32 %v1592, %v1656
        %v1670 = vmul.f32 %v1595, %v1656
        %v1671 = vmul.f32 %v1598, %v1656
        %v1672 = vmul.f32 %v1601, %v1656
        %v1673 = vmul.f32 %v1604, %v1656
        %v1674 = vmul.f32 %v1607, %v1656
        %v1675 = vmul.f32 %v1610, %v1656
        %v1676 = vmul.f32 %v1613, %v1656
        %v1677 = vmul.f32 %v1616, %v1656
        %v1678 = vmul.f32 %v1619, %v1656
        %v1679 = vmul.f32 %v1622, %v1656
        %v1680 = vmul.f32 %v1625, %v1656
        %v1681 = vmul.f32 %v1628, %v1656
        %v1682 = vmul.f32 %v1631, %v1656
        %v1683 = vmul.f32 %v1634, %v1656
        %v1684 = vmul.f32 %v1637, %v1656
        %v1685 = vmul.f32 %v1640, %v1656
        %v1686 = vmul.f32 %v1643, %v1656
        %v1687 = vmul.f32 %v1646, %v1656
        %v1688 = vmul.f32 %v1649, %v1656
        %v1689 = vmul.f32 %v1652, %v1656
        %v1690 = vld [vmem:[%s3] sm:$0x1]
        %v1692 = vperm.slane %v1690, 0
        %v1694 = vadd.f32 %v1658, %v1692
        %v1695 = vadd.f32 %v1659, %v1692
        %v1696 = vadd.f32 %v1660, %v1692
        %v1697 = vadd.f32 %v1661, %v1692
        %v1698 = vadd.f32 %v1662, %v1692
        %v1699 = vadd.f32 %v1663, %v1692
        %v1700 = vadd.f32 %v1664, %v1692
        %v1701 = vadd.f32 %v1665, %v1692
        %v1702 = vadd.f32 %v1666, %v1692
        %v1703 = vadd.f32 %v1667, %v1692
        %v1704 = vadd.f32 %v1668, %v1692
        %v1705 = vadd.f32 %v1669, %v1692
        %v1706 = vadd.f32 %v1670, %v1692
        %v1707 = vadd.f32 %v1671, %v1692
        %v1708 = vadd.f32 %v1672, %v1692
        %v1709 = vadd.f32 %v1673, %v1692
        %v1710 = vadd.f32 %v1674, %v1692
        %v1711 = vadd.f32 %v1675, %v1692
        %v1712 = vadd.f32 %v1676, %v1692
        %v1713 = vadd.f32 %v1677, %v1692
        %v1714 = vadd.f32 %v1678, %v1692
        %v1715 = vadd.f32 %v1679, %v1692
        %v1716 = vadd.f32 %v1680, %v1692
        %v1717 = vadd.f32 %v1681, %v1692
        %v1718 = vadd.f32 %v1682, %v1692
        %v1719 = vadd.f32 %v1683, %v1692
        %v1720 = vadd.f32 %v1684, %v1692
        %v1721 = vadd.f32 %v1685, %v1692
        %v1722 = vadd.f32 %v1686, %v1692
        %v1723 = vadd.f32 %v1687, %v1692
        %v1724 = vadd.f32 %v1688, %v1692
        %v1725 = vadd.f32 %v1689, %v1692
        %v1726 = vxor.u32 %v1694, 2147483648
        %v1727 = vxor.u32 %v1695, 2147483648
        %v1728 = vxor.u32 %v1696, 2147483648
        %v1729 = vxor.u32 %v1697, 2147483648
        %v1730 = vxor.u32 %v1698, 2147483648
        %v1731 = vxor.u32 %v1699, 2147483648
        %v1732 = vxor.u32 %v1700, 2147483648
        %v1733 = vxor.u32 %v1701, 2147483648
        %v1734 = vxor.u32 %v1702, 2147483648
        %v1735 = vxor.u32 %v1703, 2147483648
        %v1736 = vxor.u32 %v1704, 2147483648
        %v1737 = vxor.u32 %v1705, 2147483648
        %v1738 = vxor.u32 %v1706, 2147483648
        %v1739 = vxor.u32 %v1707, 2147483648
        %v1740 = vxor.u32 %v1708, 2147483648
        %v1741 = vxor.u32 %v1709, 2147483648
        %v1742 = vxor.u32 %v1710, 2147483648
        %v1743 = vxor.u32 %v1711, 2147483648
        %v1744 = vxor.u32 %v1712, 2147483648
        %v1745 = vxor.u32 %v1713, 2147483648
        %v1746 = vxor.u32 %v1714, 2147483648
        %v1747 = vxor.u32 %v1715, 2147483648
        %v1748 = vxor.u32 %v1716, 2147483648
        %v1749 = vxor.u32 %v1717, 2147483648
        %v1750 = vxor.u32 %v1718, 2147483648
        %v1751 = vxor.u32 %v1719, 2147483648
        %v1752 = vxor.u32 %v1720, 2147483648
        %v1753 = vxor.u32 %v1721, 2147483648
        %v1754 = vxor.u32 %v1722, 2147483648
        %v1755 = vxor.u32 %v1723, 2147483648
        %v1756 = vxor.u32 %v1724, 2147483648
        %v1757 = vxor.u32 %v1725, 2147483648
        %v1758 = vmul.f32 %v1726, 1.442695
        %v1759 = vpow.pop %v1758
        %v1760 = vmul.f32 %v1727, 1.442695
        %v1761 = vpow.pop %v1760
        %v1762 = vmul.f32 %v1728, 1.442695
        %v1763 = vpow.pop %v1762
        %v1764 = vmul.f32 %v1729, 1.442695
        %v1765 = vpow.pop %v1764
        %v1766 = vmul.f32 %v1730, 1.442695
        %v1767 = vpow.pop %v1766
        %v1768 = vmul.f32 %v1731, 1.442695
        %v1769 = vpow.pop %v1768
        %v1770 = vmul.f32 %v1732, 1.442695
        %v1771 = vpow.pop %v1770
        %v1772 = vmul.f32 %v1733, 1.442695
        %v1773 = vpow.pop %v1772
        %v1774 = vmul.f32 %v1734, 1.442695
        %v1775 = vpow.pop %v1774
        %v1776 = vmul.f32 %v1735, 1.442695
        %v1777 = vpow.pop %v1776
        %v1778 = vmul.f32 %v1736, 1.442695
        %v1779 = vpow.pop %v1778
        %v1780 = vmul.f32 %v1737, 1.442695
        %v1781 = vpow.pop %v1780
        %v1782 = vmul.f32 %v1738, 1.442695
        %v1783 = vpow.pop %v1782
        %v1784 = vmul.f32 %v1739, 1.442695
        %v1785 = vpow.pop %v1784
        %v1786 = vmul.f32 %v1740, 1.442695
        %v1787 = vpow.pop %v1786
        %v1788 = vmul.f32 %v1741, 1.442695
        %v1789 = vpow.pop %v1788
        %v1790 = vmul.f32 %v1742, 1.442695
        %v1791 = vpow.pop %v1790
        %v1792 = vmul.f32 %v1743, 1.442695
        %v1793 = vpow.pop %v1792
        %v1794 = vmul.f32 %v1744, 1.442695
        %v1795 = vpow.pop %v1794
        %v1796 = vmul.f32 %v1745, 1.442695
        %v1797 = vpow.pop %v1796
        %v1798 = vmul.f32 %v1746, 1.442695
        %v1799 = vpow.pop %v1798
        %v1800 = vmul.f32 %v1747, 1.442695
        %v1801 = vpow.pop %v1800
        %v1802 = vmul.f32 %v1748, 1.442695
        %v1803 = vpow.pop %v1802
        %v1804 = vmul.f32 %v1749, 1.442695
        %v1805 = vpow.pop %v1804
        %v1806 = vmul.f32 %v1750, 1.442695
        %v1807 = vpow.pop %v1806
        %v1808 = vmul.f32 %v1751, 1.442695
        %v1809 = vpow.pop %v1808
        %v1810 = vmul.f32 %v1752, 1.442695
        %v1811 = vpow.pop %v1810
        %v1812 = vmul.f32 %v1753, 1.442695
        %v1813 = vpow.pop %v1812
        %v1814 = vmul.f32 %v1754, 1.442695
        %v1815 = vpow.pop %v1814
        %v1816 = vmul.f32 %v1755, 1.442695
        %v1817 = vpow.pop %v1816
        %v1818 = vmul.f32 %v1756, 1.442695
        %v1819 = vpow.pop %v1818
        %v1820 = vmul.f32 %v1757, 1.442695
        %v1821 = vpow.pop %v1820
        %v1822 = vadd.f32 %v1759, 1.0
        %v1823 = vadd.f32 %v1761, 1.0
        %v1824 = vadd.f32 %v1763, 1.0
        %v1825 = vadd.f32 %v1765, 1.0
        %v1826 = vadd.f32 %v1767, 1.0
        %v1827 = vadd.f32 %v1769, 1.0
        %v1828 = vadd.f32 %v1771, 1.0
        %v1829 = vadd.f32 %v1773, 1.0
        %v1830 = vadd.f32 %v1775, 1.0
        %v1831 = vadd.f32 %v1777, 1.0
        %v1832 = vadd.f32 %v1779, 1.0
        %v1833 = vadd.f32 %v1781, 1.0
        %v1834 = vadd.f32 %v1783, 1.0
        %v1835 = vadd.f32 %v1785, 1.0
        %v1836 = vadd.f32 %v1787, 1.0
        %v1837 = vadd.f32 %v1789, 1.0
        %v1838 = vadd.f32 %v1791, 1.0
        %v1839 = vadd.f32 %v1793, 1.0
        %v1840 = vadd.f32 %v1795, 1.0
        %v1841 = vadd.f32 %v1797, 1.0
        %v1842 = vadd.f32 %v1799, 1.0
        %v1843 = vadd.f32 %v1801, 1.0
        %v1844 = vadd.f32 %v1803, 1.0
        %v1845 = vadd.f32 %v1805, 1.0
        %v1846 = vadd.f32 %v1807, 1.0
        %v1847 = vadd.f32 %v1809, 1.0
        %v1848 = vadd.f32 %v1811, 1.0
        %v1849 = vadd.f32 %v1813, 1.0
        %v1850 = vadd.f32 %v1815, 1.0
        %v1851 = vadd.f32 %v1817, 1.0
        %v1852 = vadd.f32 %v1819, 1.0
        %v1853 = vadd.f32 %v1821, 1.0
        %v1854 = vrcp.pop %v1822
        %v1855 = vmul.f32 %v1822, %v1854
        %v1856 = vsub.f32 1.0, %v1855
        %v1857 = vmul.f32 %v1854, %v1856
        %v1858 = vadd.f32 %v1854, %v1857
        %vm1859 = vweird.f32 %v1822
        %vm1860 = vweird.f32 %v1854
        %vm1861 = vmor %vm1859, %vm1860
        %v1862 = vsel %vm1861, %v1854, %v1858
        %v1863 = vand.u32 2147483647, %v1822
        %vm1864 = vcmp.eq.f32.partialorder %v1863, 8.507059e+37
        %v1865 = vand.u32 %v1822, 2147483648
        %v1866 = vor.u32 1.1754944e-38, %v1865
        %v1867 = vsel %vm1864, %v1866, %v1862
        %v1868 = vmul.f32 1.0, %v1867
        %v1869 = vrcp.pop %v1823
        %v1870 = vmul.f32 %v1823, %v1869
        %v1871 = vsub.f32 1.0, %v1870
        %v1872 = vmul.f32 %v1869, %v1871
        %v1873 = vadd.f32 %v1869, %v1872
        %vm1874 = vweird.f32 %v1823
        %vm1875 = vweird.f32 %v1869
        %vm1876 = vmor %vm1874, %vm1875
        %v1877 = vsel %vm1876, %v1869, %v1873
        %v1878 = vand.u32 2147483647, %v1823
        %vm1879 = vcmp.eq.f32.partialorder %v1878, 8.507059e+37
        %v1880 = vand.u32 %v1823, 2147483648
        %v1881 = vor.u32 1.1754944e-38, %v1880
        %v1882 = vsel %vm1879, %v1881, %v1877
        %v1883 = vmul.f32 1.0, %v1882
        %v1884 = vrcp.pop %v1824
        %v1885 = vmul.f32 %v1824, %v1884
        %v1886 = vsub.f32 1.0, %v1885
        %v1887 = vmul.f32 %v1884, %v1886
        %v1888 = vadd.f32 %v1884, %v1887
        %vm1889 = vweird.f32 %v1824
        %vm1890 = vweird.f32 %v1884
        %vm1891 = vmor %vm1889, %vm1890
        %v1892 = vsel %vm1891, %v1884, %v1888
        %v1893 = vand.u32 2147483647, %v1824
        %vm1894 = vcmp.eq.f32.partialorder %v1893, 8.507059e+37
        %v1895 = vand.u32 %v1824, 2147483648
        %v1896 = vor.u32 1.1754944e-38, %v1895
        %v1897 = vsel %vm1894, %v1896, %v1892
        %v1898 = vmul.f32 1.0, %v1897
        %v1899 = vrcp.pop %v1825
        %v1900 = vmul.f32 %v1825, %v1899
        %v1901 = vsub.f32 1.0, %v1900
        %v1902 = vmul.f32 %v1899, %v1901
        %v1903 = vadd.f32 %v1899, %v1902
        %vm1904 = vweird.f32 %v1825
        %vm1905 = vweird.f32 %v1899
        %vm1906 = vmor %vm1904, %vm1905
        %v1907 = vsel %vm1906, %v1899, %v1903
        %v1908 = vand.u32 2147483647, %v1825
        %vm1909 = vcmp.eq.f32.partialorder %v1908, 8.507059e+37
        %v1910 = vand.u32 %v1825, 2147483648
        %v1911 = vor.u32 1.1754944e-38, %v1910
        %v1912 = vsel %vm1909, %v1911, %v1907
        %v1913 = vmul.f32 1.0, %v1912
        %v1914 = vrcp.pop %v1826
        %v1915 = vmul.f32 %v1826, %v1914
        %v1916 = vsub.f32 1.0, %v1915
        %v1917 = vmul.f32 %v1914, %v1916
        %v1918 = vadd.f32 %v1914, %v1917
        %vm1919 = vweird.f32 %v1826
        %vm1920 = vweird.f32 %v1914
        %vm1921 = vmor %vm1919, %vm1920
        %v1922 = vsel %vm1921, %v1914, %v1918
        %v1923 = vand.u32 2147483647, %v1826
        %vm1924 = vcmp.eq.f32.partialorder %v1923, 8.507059e+37
        %v1925 = vand.u32 %v1826, 2147483648
        %v1926 = vor.u32 1.1754944e-38, %v1925
        %v1927 = vsel %vm1924, %v1926, %v1922
        %v1928 = vmul.f32 1.0, %v1927
        %v1929 = vrcp.pop %v1827
        %v1930 = vmul.f32 %v1827, %v1929
        %v1931 = vsub.f32 1.0, %v1930
        %v1932 = vmul.f32 %v1929, %v1931
        %v1933 = vadd.f32 %v1929, %v1932
        %vm1934 = vweird.f32 %v1827
        %vm1935 = vweird.f32 %v1929
        %vm1936 = vmor %vm1934, %vm1935
        %v1937 = vsel %vm1936, %v1929, %v1933
        %v1938 = vand.u32 2147483647, %v1827
        %vm1939 = vcmp.eq.f32.partialorder %v1938, 8.507059e+37
        %v1940 = vand.u32 %v1827, 2147483648
        %v1941 = vor.u32 1.1754944e-38, %v1940
        %v1942 = vsel %vm1939, %v1941, %v1937
        %v1943 = vmul.f32 1.0, %v1942
        %v1944 = vrcp.pop %v1828
        %v1945 = vmul.f32 %v1828, %v1944
        %v1946 = vsub.f32 1.0, %v1945
        %v1947 = vmul.f32 %v1944, %v1946
        %v1948 = vadd.f32 %v1944, %v1947
        %vm1949 = vweird.f32 %v1828
        %vm1950 = vweird.f32 %v1944
        %vm1951 = vmor %vm1949, %vm1950
        %v1952 = vsel %vm1951, %v1944, %v1948
        %v1953 = vand.u32 2147483647, %v1828
        %vm1954 = vcmp.eq.f32.partialorder %v1953, 8.507059e+37
        %v1955 = vand.u32 %v1828, 2147483648
        %v1956 = vor.u32 1.1754944e-38, %v1955
        %v1957 = vsel %vm1954, %v1956, %v1952
        %v1958 = vmul.f32 1.0, %v1957
        %v1959 = vrcp.pop %v1829
        %v1960 = vmul.f32 %v1829, %v1959
        %v1961 = vsub.f32 1.0, %v1960
        %v1962 = vmul.f32 %v1959, %v1961
        %v1963 = vadd.f32 %v1959, %v1962
        %vm1964 = vweird.f32 %v1829
        %vm1965 = vweird.f32 %v1959
        %vm1966 = vmor %vm1964, %vm1965
        %v1967 = vsel %vm1966, %v1959, %v1963
        %v1968 = vand.u32 2147483647, %v1829
        %vm1969 = vcmp.eq.f32.partialorder %v1968, 8.507059e+37
        %v1970 = vand.u32 %v1829, 2147483648
        %v1971 = vor.u32 1.1754944e-38, %v1970
        %v1972 = vsel %vm1969, %v1971, %v1967
        %v1973 = vmul.f32 1.0, %v1972
        %v1974 = vrcp.pop %v1830
        %v1975 = vmul.f32 %v1830, %v1974
        %v1976 = vsub.f32 1.0, %v1975
        %v1977 = vmul.f32 %v1974, %v1976
        %v1978 = vadd.f32 %v1974, %v1977
        %vm1979 = vweird.f32 %v1830
        %vm1980 = vweird.f32 %v1974
        %vm1981 = vmor %vm1979, %vm1980
        %v1982 = vsel %vm1981, %v1974, %v1978
        %v1983 = vand.u32 2147483647, %v1830
        %vm1984 = vcmp.eq.f32.partialorder %v1983, 8.507059e+37
        %v1985 = vand.u32 %v1830, 2147483648
        %v1986 = vor.u32 1.1754944e-38, %v1985
        %v1987 = vsel %vm1984, %v1986, %v1982
        %v1988 = vmul.f32 1.0, %v1987
        %v1989 = vrcp.pop %v1831
        %v1990 = vmul.f32 %v1831, %v1989
        %v1991 = vsub.f32 1.0, %v1990
        %v1992 = vmul.f32 %v1989, %v1991
        %v1993 = vadd.f32 %v1989, %v1992
        %vm1994 = vweird.f32 %v1831
        %vm1995 = vweird.f32 %v1989
        %vm1996 = vmor %vm1994, %vm1995
        %v1997 = vsel %vm1996, %v1989, %v1993
        %v1998 = vand.u32 2147483647, %v1831
        %vm1999 = vcmp.eq.f32.partialorder %v1998, 8.507059e+37
        %v2000 = vand.u32 %v1831, 2147483648
        %v2001 = vor.u32 1.1754944e-38, %v2000
        %v2002 = vsel %vm1999, %v2001, %v1997
        %v2003 = vmul.f32 1.0, %v2002
        %v2004 = vrcp.pop %v1832
        %v2005 = vmul.f32 %v1832, %v2004
        %v2006 = vsub.f32 1.0, %v2005
        %v2007 = vmul.f32 %v2004, %v2006
        %v2008 = vadd.f32 %v2004, %v2007
        %vm2009 = vweird.f32 %v1832
        %vm2010 = vweird.f32 %v2004
        %vm2011 = vmor %vm2009, %vm2010
        %v2012 = vsel %vm2011, %v2004, %v2008
        %v2013 = vand.u32 2147483647, %v1832
        %vm2014 = vcmp.eq.f32.partialorder %v2013, 8.507059e+37
        %v2015 = vand.u32 %v1832, 2147483648
        %v2016 = vor.u32 1.1754944e-38, %v2015
        %v2017 = vsel %vm2014, %v2016, %v2012
        %v2018 = vmul.f32 1.0, %v2017
        %v2019 = vrcp.pop %v1833
        %v2020 = vmul.f32 %v1833, %v2019
        %v2021 = vsub.f32 1.0, %v2020
        %v2022 = vmul.f32 %v2019, %v2021
        %v2023 = vadd.f32 %v2019, %v2022
        %vm2024 = vweird.f32 %v1833
        %vm2025 = vweird.f32 %v2019
        %vm2026 = vmor %vm2024, %vm2025
        %v2027 = vsel %vm2026, %v2019, %v2023
        %v2028 = vand.u32 2147483647, %v1833
        %vm2029 = vcmp.eq.f32.partialorder %v2028, 8.507059e+37
        %v2030 = vand.u32 %v1833, 2147483648
        %v2031 = vor.u32 1.1754944e-38, %v2030
        %v2032 = vsel %vm2029, %v2031, %v2027
        %v2033 = vmul.f32 1.0, %v2032
        %v2034 = vrcp.pop %v1834
        %v2035 = vmul.f32 %v1834, %v2034
        %v2036 = vsub.f32 1.0, %v2035
        %v2037 = vmul.f32 %v2034, %v2036
        %v2038 = vadd.f32 %v2034, %v2037
        %vm2039 = vweird.f32 %v1834
        %vm2040 = vweird.f32 %v2034
        %vm2041 = vmor %vm2039, %vm2040
        %v2042 = vsel %vm2041, %v2034, %v2038
        %v2043 = vand.u32 2147483647, %v1834
        %vm2044 = vcmp.eq.f32.partialorder %v2043, 8.507059e+37
        %v2045 = vand.u32 %v1834, 2147483648
        %v2046 = vor.u32 1.1754944e-38, %v2045
        %v2047 = vsel %vm2044, %v2046, %v2042
        %v2048 = vmul.f32 1.0, %v2047
        %v2049 = vrcp.pop %v1835
        %v2050 = vmul.f32 %v1835, %v2049
        %v2051 = vsub.f32 1.0, %v2050
        %v2052 = vmul.f32 %v2049, %v2051
        %v2053 = vadd.f32 %v2049, %v2052
        %vm2054 = vweird.f32 %v1835
        %vm2055 = vweird.f32 %v2049
        %vm2056 = vmor %vm2054, %vm2055
        %v2057 = vsel %vm2056, %v2049, %v2053
        %v2058 = vand.u32 2147483647, %v1835
        %vm2059 = vcmp.eq.f32.partialorder %v2058, 8.507059e+37
        %v2060 = vand.u32 %v1835, 2147483648
        %v2061 = vor.u32 1.1754944e-38, %v2060
        %v2062 = vsel %vm2059, %v2061, %v2057
        %v2063 = vmul.f32 1.0, %v2062
        %v2064 = vrcp.pop %v1836
        %v2065 = vmul.f32 %v1836, %v2064
        %v2066 = vsub.f32 1.0, %v2065
        %v2067 = vmul.f32 %v2064, %v2066
        %v2068 = vadd.f32 %v2064, %v2067
        %vm2069 = vweird.f32 %v1836
        %vm2070 = vweird.f32 %v2064
        %vm2071 = vmor %vm2069, %vm2070
        %v2072 = vsel %vm2071, %v2064, %v2068
        %v2073 = vand.u32 2147483647, %v1836
        %vm2074 = vcmp.eq.f32.partialorder %v2073, 8.507059e+37
        %v2075 = vand.u32 %v1836, 2147483648
        %v2076 = vor.u32 1.1754944e-38, %v2075
        %v2077 = vsel %vm2074, %v2076, %v2072
        %v2078 = vmul.f32 1.0, %v2077
        %v2079 = vrcp.pop %v1837
        %v2080 = vmul.f32 %v1837, %v2079
        %v2081 = vsub.f32 1.0, %v2080
        %v2082 = vmul.f32 %v2079, %v2081
        %v2083 = vadd.f32 %v2079, %v2082
        %vm2084 = vweird.f32 %v1837
        %vm2085 = vweird.f32 %v2079
        %vm2086 = vmor %vm2084, %vm2085
        %v2087 = vsel %vm2086, %v2079, %v2083
        %v2088 = vand.u32 2147483647, %v1837
        %vm2089 = vcmp.eq.f32.partialorder %v2088, 8.507059e+37
        %v2090 = vand.u32 %v1837, 2147483648
        %v2091 = vor.u32 1.1754944e-38, %v2090
        %v2092 = vsel %vm2089, %v2091, %v2087
        %v2093 = vmul.f32 1.0, %v2092
        %v2094 = vrcp.pop %v1838
        %v2095 = vmul.f32 %v1838, %v2094
        %v2096 = vsub.f32 1.0, %v2095
        %v2097 = vmul.f32 %v2094, %v2096
        %v2098 = vadd.f32 %v2094, %v2097
        %vm2099 = vweird.f32 %v1838
        %vm2100 = vweird.f32 %v2094
        %vm2101 = vmor %vm2099, %vm2100
        %v2102 = vsel %vm2101, %v2094, %v2098
        %v2103 = vand.u32 2147483647, %v1838
        %vm2104 = vcmp.eq.f32.partialorder %v2103, 8.507059e+37
        %v2105 = vand.u32 %v1838, 2147483648
        %v2106 = vor.u32 1.1754944e-38, %v2105
        %v2107 = vsel %vm2104, %v2106, %v2102
        %v2108 = vmul.f32 1.0, %v2107
        %v2109 = vrcp.pop %v1839
        %v2110 = vmul.f32 %v1839, %v2109
        %v2111 = vsub.f32 1.0, %v2110
        %v2112 = vmul.f32 %v2109, %v2111
        %v2113 = vadd.f32 %v2109, %v2112
        %vm2114 = vweird.f32 %v1839
        %vm2115 = vweird.f32 %v2109
        %vm2116 = vmor %vm2114, %vm2115
        %v2117 = vsel %vm2116, %v2109, %v2113
        %v2118 = vand.u32 2147483647, %v1839
        %vm2119 = vcmp.eq.f32.partialorder %v2118, 8.507059e+37
        %v2120 = vand.u32 %v1839, 2147483648
        %v2121 = vor.u32 1.1754944e-38, %v2120
        %v2122 = vsel %vm2119, %v2121, %v2117
        %v2123 = vmul.f32 1.0, %v2122
        %v2124 = vrcp.pop %v1840
        %v2125 = vmul.f32 %v1840, %v2124
        %v2126 = vsub.f32 1.0, %v2125
        %v2127 = vmul.f32 %v2124, %v2126
        %v2128 = vadd.f32 %v2124, %v2127
        %vm2129 = vweird.f32 %v1840
        %vm2130 = vweird.f32 %v2124
        %vm2131 = vmor %vm2129, %vm2130
        %v2132 = vsel %vm2131, %v2124, %v2128
        %v2133 = vand.u32 2147483647, %v1840
        %vm2134 = vcmp.eq.f32.partialorder %v2133, 8.507059e+37
        %v2135 = vand.u32 %v1840, 2147483648
        %v2136 = vor.u32 1.1754944e-38, %v2135
        %v2137 = vsel %vm2134, %v2136, %v2132
        %v2138 = vmul.f32 1.0, %v2137
        %v2139 = vrcp.pop %v1841
        %v2140 = vmul.f32 %v1841, %v2139
        %v2141 = vsub.f32 1.0, %v2140
        %v2142 = vmul.f32 %v2139, %v2141
        %v2143 = vadd.f32 %v2139, %v2142
        %vm2144 = vweird.f32 %v1841
        %vm2145 = vweird.f32 %v2139
        %vm2146 = vmor %vm2144, %vm2145
        %v2147 = vsel %vm2146, %v2139, %v2143
        %v2148 = vand.u32 2147483647, %v1841
        %vm2149 = vcmp.eq.f32.partialorder %v2148, 8.507059e+37
        %v2150 = vand.u32 %v1841, 2147483648
        %v2151 = vor.u32 1.1754944e-38, %v2150
        %v2152 = vsel %vm2149, %v2151, %v2147
        %v2153 = vmul.f32 1.0, %v2152
        %v2154 = vrcp.pop %v1842
        %v2155 = vmul.f32 %v1842, %v2154
        %v2156 = vsub.f32 1.0, %v2155
        %v2157 = vmul.f32 %v2154, %v2156
        %v2158 = vadd.f32 %v2154, %v2157
        %vm2159 = vweird.f32 %v1842
        %vm2160 = vweird.f32 %v2154
        %vm2161 = vmor %vm2159, %vm2160
        %v2162 = vsel %vm2161, %v2154, %v2158
        %v2163 = vand.u32 2147483647, %v1842
        %vm2164 = vcmp.eq.f32.partialorder %v2163, 8.507059e+37
        %v2165 = vand.u32 %v1842, 2147483648
        %v2166 = vor.u32 1.1754944e-38, %v2165
        %v2167 = vsel %vm2164, %v2166, %v2162
        %v2168 = vmul.f32 1.0, %v2167
        %v2169 = vrcp.pop %v1843
        %v2170 = vmul.f32 %v1843, %v2169
        %v2171 = vsub.f32 1.0, %v2170
        %v2172 = vmul.f32 %v2169, %v2171
        %v2173 = vadd.f32 %v2169, %v2172
        %vm2174 = vweird.f32 %v1843
        %vm2175 = vweird.f32 %v2169
        %vm2176 = vmor %vm2174, %vm2175
        %v2177 = vsel %vm2176, %v2169, %v2173
        %v2178 = vand.u32 2147483647, %v1843
        %vm2179 = vcmp.eq.f32.partialorder %v2178, 8.507059e+37
        %v2180 = vand.u32 %v1843, 2147483648
        %v2181 = vor.u32 1.1754944e-38, %v2180
        %v2182 = vsel %vm2179, %v2181, %v2177
        %v2183 = vmul.f32 1.0, %v2182
        %v2184 = vrcp.pop %v1844
        %v2185 = vmul.f32 %v1844, %v2184
        %v2186 = vsub.f32 1.0, %v2185
        %v2187 = vmul.f32 %v2184, %v2186
        %v2188 = vadd.f32 %v2184, %v2187
        %vm2189 = vweird.f32 %v1844
        %vm2190 = vweird.f32 %v2184
        %vm2191 = vmor %vm2189, %vm2190
        %v2192 = vsel %vm2191, %v2184, %v2188
        %v2193 = vand.u32 2147483647, %v1844
        %vm2194 = vcmp.eq.f32.partialorder %v2193, 8.507059e+37
        %v2195 = vand.u32 %v1844, 2147483648
        %v2196 = vor.u32 1.1754944e-38, %v2195
        %v2197 = vsel %vm2194, %v2196, %v2192
        %v2198 = vmul.f32 1.0, %v2197
        %v2199 = vrcp.pop %v1845
        %v2200 = vmul.f32 %v1845, %v2199
        %v2201 = vsub.f32 1.0, %v2200
        %v2202 = vmul.f32 %v2199, %v2201
        %v2203 = vadd.f32 %v2199, %v2202
        %vm2204 = vweird.f32 %v1845
        %vm2205 = vweird.f32 %v2199
        %vm2206 = vmor %vm2204, %vm2205
        %v2207 = vsel %vm2206, %v2199, %v2203
        %v2208 = vand.u32 2147483647, %v1845
        %vm2209 = vcmp.eq.f32.partialorder %v2208, 8.507059e+37
        %v2210 = vand.u32 %v1845, 2147483648
        %v2211 = vor.u32 1.1754944e-38, %v2210
        %v2212 = vsel %vm2209, %v2211, %v2207
        %v2213 = vmul.f32 1.0, %v2212
        %v2214 = vrcp.pop %v1846
        %v2215 = vmul.f32 %v1846, %v2214
        %v2216 = vsub.f32 1.0, %v2215
        %v2217 = vmul.f32 %v2214, %v2216
        %v2218 = vadd.f32 %v2214, %v2217
        %vm2219 = vweird.f32 %v1846
        %vm2220 = vweird.f32 %v2214
        %vm2221 = vmor %vm2219, %vm2220
        %v2222 = vsel %vm2221, %v2214, %v2218
        %v2223 = vand.u32 2147483647, %v1846
        %vm2224 = vcmp.eq.f32.partialorder %v2223, 8.507059e+37
        %v2225 = vand.u32 %v1846, 2147483648
        %v2226 = vor.u32 1.1754944e-38, %v2225
        %v2227 = vsel %vm2224, %v2226, %v2222
        %v2228 = vmul.f32 1.0, %v2227
        %v2229 = vrcp.pop %v1847
        %v2230 = vmul.f32 %v1847, %v2229
        %v2231 = vsub.f32 1.0, %v2230
        %v2232 = vmul.f32 %v2229, %v2231
        %v2233 = vadd.f32 %v2229, %v2232
        %vm2234 = vweird.f32 %v1847
        %vm2235 = vweird.f32 %v2229
        %vm2236 = vmor %vm2234, %vm2235
        %v2237 = vsel %vm2236, %v2229, %v2233
        %v2238 = vand.u32 2147483647, %v1847
        %vm2239 = vcmp.eq.f32.partialorder %v2238, 8.507059e+37
        %v2240 = vand.u32 %v1847, 2147483648
        %v2241 = vor.u32 1.1754944e-38, %v2240
        %v2242 = vsel %vm2239, %v2241, %v2237
        %v2243 = vmul.f32 1.0, %v2242
        %v2244 = vrcp.pop %v1848
        %v2245 = vmul.f32 %v1848, %v2244
        %v2246 = vsub.f32 1.0, %v2245
        %v2247 = vmul.f32 %v2244, %v2246
        %v2248 = vadd.f32 %v2244, %v2247
        %vm2249 = vweird.f32 %v1848
        %vm2250 = vweird.f32 %v2244
        %vm2251 = vmor %vm2249, %vm2250
        %v2252 = vsel %vm2251, %v2244, %v2248
        %v2253 = vand.u32 2147483647, %v1848
        %vm2254 = vcmp.eq.f32.partialorder %v2253, 8.507059e+37
        %v2255 = vand.u32 %v1848, 2147483648
        %v2256 = vor.u32 1.1754944e-38, %v2255
        %v2257 = vsel %vm2254, %v2256, %v2252
        %v2258 = vmul.f32 1.0, %v2257
        %v2259 = vrcp.pop %v1849
        %v2260 = vmul.f32 %v1849, %v2259
        %v2261 = vsub.f32 1.0, %v2260
        %v2262 = vmul.f32 %v2259, %v2261
        %v2263 = vadd.f32 %v2259, %v2262
        %vm2264 = vweird.f32 %v1849
        %vm2265 = vweird.f32 %v2259
        %vm2266 = vmor %vm2264, %vm2265
        %v2267 = vsel %vm2266, %v2259, %v2263
        %v2268 = vand.u32 2147483647, %v1849
        %vm2269 = vcmp.eq.f32.partialorder %v2268, 8.507059e+37
        %v2270 = vand.u32 %v1849, 2147483648
        %v2271 = vor.u32 1.1754944e-38, %v2270
        %v2272 = vsel %vm2269, %v2271, %v2267
        %v2273 = vmul.f32 1.0, %v2272
        %v2274 = vrcp.pop %v1850
        %v2275 = vmul.f32 %v1850, %v2274
        %v2276 = vsub.f32 1.0, %v2275
        %v2277 = vmul.f32 %v2274, %v2276
        %v2278 = vadd.f32 %v2274, %v2277
        %vm2279 = vweird.f32 %v1850
        %vm2280 = vweird.f32 %v2274
        %vm2281 = vmor %vm2279, %vm2280
        %v2282 = vsel %vm2281, %v2274, %v2278
        %v2283 = vand.u32 2147483647, %v1850
        %vm2284 = vcmp.eq.f32.partialorder %v2283, 8.507059e+37
        %v2285 = vand.u32 %v1850, 2147483648
        %v2286 = vor.u32 1.1754944e-38, %v2285
        %v2287 = vsel %vm2284, %v2286, %v2282
        %v2288 = vmul.f32 1.0, %v2287
        %v2289 = vrcp.pop %v1851
        %v2290 = vmul.f32 %v1851, %v2289
        %v2291 = vsub.f32 1.0, %v2290
        %v2292 = vmul.f32 %v2289, %v2291
        %v2293 = vadd.f32 %v2289, %v2292
        %vm2294 = vweird.f32 %v1851
        %vm2295 = vweird.f32 %v2289
        %vm2296 = vmor %vm2294, %vm2295
        %v2297 = vsel %vm2296, %v2289, %v2293
        %v2298 = vand.u32 2147483647, %v1851
        %vm2299 = vcmp.eq.f32.partialorder %v2298, 8.507059e+37
        %v2300 = vand.u32 %v1851, 2147483648
        %v2301 = vor.u32 1.1754944e-38, %v2300
        %v2302 = vsel %vm2299, %v2301, %v2297
        %v2303 = vmul.f32 1.0, %v2302
        %v2304 = vrcp.pop %v1852
        %v2305 = vmul.f32 %v1852, %v2304
        %v2306 = vsub.f32 1.0, %v2305
        %v2307 = vmul.f32 %v2304, %v2306
        %v2308 = vadd.f32 %v2304, %v2307
        %vm2309 = vweird.f32 %v1852
        %vm2310 = vweird.f32 %v2304
        %vm2311 = vmor %vm2309, %vm2310
        %v2312 = vsel %vm2311, %v2304, %v2308
        %v2313 = vand.u32 2147483647, %v1852
        %vm2314 = vcmp.eq.f32.partialorder %v2313, 8.507059e+37
        %v2315 = vand.u32 %v1852, 2147483648
        %v2316 = vor.u32 1.1754944e-38, %v2315
        %v2317 = vsel %vm2314, %v2316, %v2312
        %v2318 = vmul.f32 1.0, %v2317
        %v2319 = vrcp.pop %v1853
        %v2320 = vmul.f32 %v1853, %v2319
        %v2321 = vsub.f32 1.0, %v2320
        %v2322 = vmul.f32 %v2319, %v2321
        %v2323 = vadd.f32 %v2319, %v2322
        %vm2324 = vweird.f32 %v1853
        %vm2325 = vweird.f32 %v2319
        %vm2326 = vmor %vm2324, %vm2325
        %v2327 = vsel %vm2326, %v2319, %v2323
        %v2328 = vand.u32 2147483647, %v1853
        %vm2329 = vcmp.eq.f32.partialorder %v2328, 8.507059e+37
        %v2330 = vand.u32 %v1853, 2147483648
        %v2331 = vor.u32 1.1754944e-38, %v2330
        %v2332 = vsel %vm2329, %v2331, %v2327
        %v2333 = vmul.f32 1.0, %v2332
        %v2334 = vmul.f32 %v1694, %v1868
        %v2335 = vmul.f32 %v1695, %v1883
        %v2336 = vmul.f32 %v1696, %v1898
        %v2337 = vmul.f32 %v1697, %v1913
        %v2338 = vmul.f32 %v1698, %v1928
        %v2339 = vmul.f32 %v1699, %v1943
        %v2340 = vmul.f32 %v1700, %v1958
        %v2341 = vmul.f32 %v1701, %v1973
        %v2342 = vmul.f32 %v1702, %v1988
        %v2343 = vmul.f32 %v1703, %v2003
        %v2344 = vmul.f32 %v1704, %v2018
        %v2345 = vmul.f32 %v1705, %v2033
        %v2346 = vmul.f32 %v1706, %v2048
        %v2347 = vmul.f32 %v1707, %v2063
        %v2348 = vmul.f32 %v1708, %v2078
        %v2349 = vmul.f32 %v1709, %v2093
        %v2350 = vmul.f32 %v1710, %v2108
        %v2351 = vmul.f32 %v1711, %v2123
        %v2352 = vmul.f32 %v1712, %v2138
        %v2353 = vmul.f32 %v1713, %v2153
        %v2354 = vmul.f32 %v1714, %v2168
        %v2355 = vmul.f32 %v1715, %v2183
        %v2356 = vmul.f32 %v1716, %v2198
        %v2357 = vmul.f32 %v1717, %v2213
        %v2358 = vmul.f32 %v1718, %v2228
        %v2359 = vmul.f32 %v1719, %v2243
        %v2360 = vmul.f32 %v1720, %v2258
        %v2361 = vmul.f32 %v1721, %v2273
        %v2362 = vmul.f32 %v1722, %v2288
        %v2363 = vmul.f32 %v1723, %v2303
        %v2364 = vmul.f32 %v1724, %v2318
        %v2365 = vmul.f32 %v1725, %v2333
        %vm2366 = vcmask 146432
        %2367 = vst.msk [vmem:[#allocation3] sm:$0xff] %vm2366, 0.0
        %2368 = vst.msk [vmem:[#allocation3 + $0x8] sm:$0xff] %vm2366, 0.0
        %2369 = vst.msk [vmem:[#allocation3 + $0x10] sm:$0xff] %vm2366, 0.0
        %2370 = vst.msk [vmem:[#allocation3 + $0x18] sm:$0xff] %vm2366, 0.0
        %2371 = vst.msk [vmem:[#allocation3 + $0x20] sm:$0xff] %vm2366, 0.0
        %2372 = vst.msk [vmem:[#allocation3 + $0x28] sm:$0xff] %vm2366, 0.0
        %2373 = vst.msk [vmem:[#allocation3 + $0x30] sm:$0xff] %vm2366, 0.0
        %2374 = vst.msk [vmem:[#allocation3 + $0x38] sm:$0xff] %vm2366, 0.0
        %2375 = vst.msk [vmem:[#allocation3 + $0x40] sm:$0xff] %vm2366, 0.0
        %2376 = vst.msk [vmem:[#allocation3 + $0x48] sm:$0xff] %vm2366, 0.0
        %2377 = vst.msk [vmem:[#allocation3 + $0x50] sm:$0xff] %vm2366, 0.0
        %2378 = vst.msk [vmem:[#allocation3 + $0x58] sm:$0xff] %vm2366, 0.0
        %2379 = vst.msk [vmem:[#allocation3 + $0x60] sm:$0xff] %vm2366, 0.0
        %2380 = vst.msk [vmem:[#allocation3 + $0x68] sm:$0xff] %vm2366, 0.0
        %2381 = vst.msk [vmem:[#allocation3 + $0x70] sm:$0xff] %vm2366, 0.0
        %2382 = vst.msk [vmem:[#allocation3 + $0x78] sm:$0xff] %vm2366, 0.0
        %2383 = vst.msk [vmem:[#allocation3 + $0x80] sm:$0xff] %vm2366, 0.0
        %2384 = vst.msk [vmem:[#allocation3 + $0x88] sm:$0xff] %vm2366, 0.0
        %2385 = vst.msk [vmem:[#allocation3 + $0x90] sm:$0xff] %vm2366, 0.0
        %2386 = vst.msk [vmem:[#allocation3 + $0x98] sm:$0xff] %vm2366, 0.0
        %2387 = vst.msk [vmem:[#allocation3 + $0xa0] sm:$0xff] %vm2366, 0.0
        %2388 = vst.msk [vmem:[#allocation3 + $0xa8] sm:$0xff] %vm2366, 0.0
        %2389 = vst.msk [vmem:[#allocation3 + $0xb0] sm:$0xff] %vm2366, 0.0
        %2390 = vst.msk [vmem:[#allocation3 + $0xb8] sm:$0xff] %vm2366, 0.0
        %2391 = vst.msk [vmem:[#allocation3 + $0xc0] sm:$0xff] %vm2366, 0.0
        %2392 = vst.msk [vmem:[#allocation3 + $0xc8] sm:$0xff] %vm2366, 0.0
        %2393 = vst.msk [vmem:[#allocation3 + $0xd0] sm:$0xff] %vm2366, 0.0
        %2394 = vst.msk [vmem:[#allocation3 + $0xd8] sm:$0xff] %vm2366, 0.0
        %2395 = vst.msk [vmem:[#allocation3 + $0xe0] sm:$0xff] %vm2366, 0.0
        %2396 = vst.msk [vmem:[#allocation3 + $0xe8] sm:$0xff] %vm2366, 0.0
        %2397 = vst.msk [vmem:[#allocation3 + $0xf0] sm:$0xff] %vm2366, 0.0
        %2398 = vst.msk [vmem:[#allocation3 + $0xf8] sm:$0xff] %vm2366, 0.0
        %s2399 = scalar_lea.vmem [#allocation3], 16
        %vm2400 = vcmask 15360
        %2401 = vst.msk [vmem:[%s2399 + $0x1] sm:$0xff] %vm2400, %v2334
        %vm2402 = vcmask 14336
        %2403 = vst.msk [vmem:[%s2399 + $0x9] sm:$0x7f] %vm2402, %v2335
        %2404 = vst.msk [vmem:[%s2399 + $0x11] sm:$0xff] %vm2400, %v2336
        %2405 = vst.msk [vmem:[%s2399 + $0x19] sm:$0x7f] %vm2402, %v2337
        %2406 = vst.msk [vmem:[%s2399 + $0x21] sm:$0xff] %vm2400, %v2338
        %2407 = vst.msk [vmem:[%s2399 + $0x29] sm:$0x7f] %vm2402, %v2339
        %2408 = vst.msk [vmem:[%s2399 + $0x31] sm:$0xff] %vm2400, %v2340
        %2409 = vst.msk [vmem:[%s2399 + $0x39] sm:$0x7f] %vm2402, %v2341
        %2410 = vst.msk [vmem:[%s2399 + $0x41] sm:$0xff] %vm2400, %v2342
        %2411 = vst.msk [vmem:[%s2399 + $0x49] sm:$0x7f] %vm2402, %v2343
        %2412 = vst.msk [vmem:[%s2399 + $0x51] sm:$0xff] %vm2400, %v2344
        %2413 = vst.msk [vmem:[%s2399 + $0x59] sm:$0x7f] %vm2402, %v2345
        %2414 = vst.msk [vmem:[%s2399 + $0x61] sm:$0xff] %vm2400, %v2346
        %2415 = vst.msk [vmem:[%s2399 + $0x69] sm:$0x7f] %vm2402, %v2347
        %2416 = vst.msk [vmem:[%s2399 + $0x71] sm:$0xff] %vm2400, %v2348
        %2417 = vst.msk [vmem:[%s2399 + $0x79] sm:$0x7f] %vm2402, %v2349
        %2418 = vst.msk [vmem:[%s2399 + $0x81] sm:$0xff] %vm2400, %v2350
        %2419 = vst.msk [vmem:[%s2399 + $0x89] sm:$0x7f] %vm2402, %v2351
        %2420 = vst.msk [vmem:[%s2399 + $0x91] sm:$0xff] %vm2400, %v2352
        %2421 = vst.msk [vmem:[%s2399 + $0x99] sm:$0x7f] %vm2402, %v2353
        %2422 = vst.msk [vmem:[%s2399 + $0xa1] sm:$0xff] %vm2400, %v2354
        %2423 = vst.msk [vmem:[%s2399 + $0xa9] sm:$0x7f] %vm2402, %v2355
        %2424 = vst.msk [vmem:[%s2399 + $0xb1] sm:$0xff] %vm2400, %v2356
        %2425 = vst.msk [vmem:[%s2399 + $0xb9] sm:$0x7f] %vm2402, %v2357
        %2426 = vst.msk [vmem:[%s2399 + $0xc1] sm:$0xff] %vm2400, %v2358
        %2427 = vst.msk [vmem:[%s2399 + $0xc9] sm:$0x7f] %vm2402, %v2359
        %2428 = vst.msk [vmem:[%s2399 + $0xd1] sm:$0xff] %vm2400, %v2360
        %2429 = vst.msk [vmem:[%s2399 + $0xd9] sm:$0x7f] %vm2402, %v2361
        %2430 = vst.msk [vmem:[%s2399 + $0xe1] sm:$0xff] %vm2400, %v2362
        %2431 = vst.msk [vmem:[%s2399 + $0xe9] sm:$0x7f] %vm2402, %v2363
        %2462 = vrot.lane.b32.xlu0 %v2334, 2
        %v2463 = vpop.permute.xlu0 %2462
        %2464 = vrot.lane.b32.xlu0 %v2335, 2
        %v2465 = vpop.permute.xlu0 %2464
        %2466 = vrot.lane.b32.xlu0 %v2336, 2
        %v2467 = vpop.permute.xlu0 %2466
        %2468 = vrot.lane.b32.xlu0 %v2337, 2
        %v2469 = vpop.permute.xlu0 %2468
        %2470 = vrot.lane.b32.xlu0 %v2338, 2
        %v2471 = vpop.permute.xlu0 %2470
        %2472 = vrot.lane.b32.xlu0 %v2339, 2
        %v2473 = vpop.permute.xlu0 %2472
        %2474 = vrot.lane.b32.xlu0 %v2340, 2
        %v2475 = vpop.permute.xlu0 %2474
        %2476 = vrot.lane.b32.xlu0 %v2341, 2
        %v2477 = vpop.permute.xlu0 %2476
        %2478 = vrot.lane.b32.xlu0 %v2342, 2
        %v2479 = vpop.permute.xlu0 %2478
        %2480 = vrot.lane.b32.xlu0 %v2343, 2
        %v2481 = vpop.permute.xlu0 %2480
        %2482 = vrot.lane.b32.xlu0 %v2344, 2
        %v2483 = vpop.permute.xlu0 %2482
        %2484 = vrot.lane.b32.xlu0 %v2345, 2
        %v2485 = vpop.permute.xlu0 %2484
        %2486 = vrot.lane.b32.xlu0 %v2346, 2
        %v2487 = vpop.permute.xlu0 %2486
        %2488 = vrot.lane.b32.xlu0 %v2347, 2
        %v2489 = vpop.permute.xlu0 %2488
        %2490 = vrot.lane.b32.xlu0 %v2348, 2
        %v2491 = vpop.permute.xlu0 %2490
        %2492 = vrot.lane.b32.xlu0 %v2349, 2
        %v2493 = vpop.permute.xlu0 %2492
        %2494 = vrot.lane.b32.xlu0 %v2350, 2
        %v2495 = vpop.permute.xlu0 %2494
        %2496 = vrot.lane.b32.xlu0 %v2351, 2
        %v2497 = vpop.permute.xlu0 %2496
        %2498 = vrot.lane.b32.xlu0 %v2352, 2
        %v2499 = vpop.permute.xlu0 %2498
        %2500 = vrot.lane.b32.xlu0 %v2353, 2
        %v2501 = vpop.permute.xlu0 %2500
        %2502 = vrot.lane.b32.xlu0 %v2354, 2
        %v2503 = vpop.permute.xlu0 %2502
        %2504 = vrot.lane.b32.xlu0 %v2355, 2
        %v2505 = vpop.permute.xlu0 %2504
        %2506 = vrot.lane.b32.xlu0 %v2356, 2
        %v2507 = vpop.permute.xlu0 %2506
        %2508 = vrot.lane.b32.xlu0 %v2357, 2
        %v2509 = vpop.permute.xlu0 %2508
        %2510 = vrot.lane.b32.xlu0 %v2358, 2
        %v2511 = vpop.permute.xlu0 %2510
        %2512 = vrot.lane.b32.xlu0 %v2359, 2
        %v2513 = vpop.permute.xlu0 %2512
        %2514 = vrot.lane.b32.xlu0 %v2360, 2
        %v2515 = vpop.permute.xlu0 %2514
        %2516 = vrot.lane.b32.xlu0 %v2361, 2
        %v2517 = vpop.permute.xlu0 %2516
        %2518 = vrot.lane.b32.xlu0 %v2362, 2
        %v2519 = vpop.permute.xlu0 %2518
        %2520 = vrot.lane.b32.xlu0 %v2363, 2
        %v2521 = vpop.permute.xlu0 %2520
        %vm2552 = vcmask 31760
        %2553 = vst.msk [vmem:[%s2399] sm:$0xff] %vm2552, %v2463
        %2554 = vst.msk [vmem:[%s2399 + $0x8] sm:$0xff] %vm2552, %v2465
        %2555 = vst.msk [vmem:[%s2399 + $0x10] sm:$0xff] %vm2552, %v2467
        %2556 = vst.msk [vmem:[%s2399 + $0x18] sm:$0xff] %vm2552, %v2469
        %2557 = vst.msk [vmem:[%s2399 + $0x20] sm:$0xff] %vm2552, %v2471
        %2558 = vst.msk [vmem:[%s2399 + $0x28] sm:$0xff] %vm2552, %v2473
        %2559 = vst.msk [vmem:[%s2399 + $0x30] sm:$0xff] %vm2552, %v2475
        %2560 = vst.msk [vmem:[%s2399 + $0x38] sm:$0xff] %vm2552, %v2477
        %2561 = vst.msk [vmem:[%s2399 + $0x40] sm:$0xff] %vm2552, %v2479
        %2562 = vst.msk [vmem:[%s2399 + $0x48] sm:$0xff] %vm2552, %v2481
        %2563 = vst.msk [vmem:[%s2399 + $0x50] sm:$0xff] %vm2552, %v2483
        %2564 = vst.msk [vmem:[%s2399 + $0x58] sm:$0xff] %vm2552, %v2485
        %2565 = vst.msk [vmem:[%s2399 + $0x60] sm:$0xff] %vm2552, %v2487
        %2566 = vst.msk [vmem:[%s2399 + $0x68] sm:$0xff] %vm2552, %v2489
        %2567 = vst.msk [vmem:[%s2399 + $0x70] sm:$0xff] %vm2552, %v2491
        %2568 = vst.msk [vmem:[%s2399 + $0x78] sm:$0xff] %vm2552, %v2493
        %2569 = vst.msk [vmem:[%s2399 + $0x80] sm:$0xff] %vm2552, %v2495
        %2570 = vst.msk [vmem:[%s2399 + $0x88] sm:$0xff] %vm2552, %v2497
        %2571 = vst.msk [vmem:[%s2399 + $0x90] sm:$0xff] %vm2552, %v2499
        %2572 = vst.msk [vmem:[%s2399 + $0x98] sm:$0xff] %vm2552, %v2501
        %2573 = vst.msk [vmem:[%s2399 + $0xa0] sm:$0xff] %vm2552, %v2503
        %2574 = vst.msk [vmem:[%s2399 + $0xa8] sm:$0xff] %vm2552, %v2505
        %2575 = vst.msk [vmem:[%s2399 + $0xb0] sm:$0xff] %vm2552, %v2507
        %2576 = vst.msk [vmem:[%s2399 + $0xb8] sm:$0xff] %vm2552, %v2509
        %2577 = vst.msk [vmem:[%s2399 + $0xc0] sm:$0xff] %vm2552, %v2511
        %2578 = vst.msk [vmem:[%s2399 + $0xc8] sm:$0xff] %vm2552, %v2513
        %2579 = vst.msk [vmem:[%s2399 + $0xd0] sm:$0xff] %vm2552, %v2515
        %2580 = vst.msk [vmem:[%s2399 + $0xd8] sm:$0xff] %vm2552, %v2517
        %2581 = vst.msk [vmem:[%s2399 + $0xe0] sm:$0xff] %vm2552, %v2519
        %2582 = vst.msk [vmem:[%s2399 + $0xe8] sm:$0xff] %vm2552, %v2521
        %2583 = vrot.lane.b32.xlu0 %v2334, 4
        %v2584 = vpop.permute.xlu0 %2583
        %2585 = vrot.lane.b32.xlu0 %v2335, 4
        %v2586 = vpop.permute.xlu0 %2585
        %2587 = vrot.lane.b32.xlu0 %v2336, 4
        %v2588 = vpop.permute.xlu0 %2587
        %2589 = vrot.lane.b32.xlu0 %v2337, 4
        %v2590 = vpop.permute.xlu0 %2589
        %2591 = vrot.lane.b32.xlu0 %v2338, 4
        %v2592 = vpop.permute.xlu0 %2591
        %2593 = vrot.lane.b32.xlu0 %v2339, 4
        %v2594 = vpop.permute.xlu0 %2593
        %2595 = vrot.lane.b32.xlu0 %v2340, 4
        %v2596 = vpop.permute.xlu0 %2595
        %2597 = vrot.lane.b32.xlu0 %v2341, 4
        %v2598 = vpop.permute.xlu0 %2597
        %2599 = vrot.lane.b32.xlu0 %v2342, 4
        %v2600 = vpop.permute.xlu0 %2599
        %2601 = vrot.lane.b32.xlu0 %v2343, 4
        %v2602 = vpop.permute.xlu0 %2601
        %2603 = vrot.lane.b32.xlu0 %v2344, 4
        %v2604 = vpop.permute.xlu0 %2603
        %2605 = vrot.lane.b32.xlu0 %v2345, 4
        %v2606 = vpop.permute.xlu0 %2605
        %2607 = vrot.lane.b32.xlu0 %v2346, 4
        %v2608 = vpop.permute.xlu0 %2607
        %2609 = vrot.lane.b32.xlu0 %v2347, 4
        %v2610 = vpop.permute.xlu0 %2609
        %2611 = vrot.lane.b32.xlu0 %v2348, 4
        %v2612 = vpop.permute.xlu0 %2611
        %2613 = vrot.lane.b32.xlu0 %v2349, 4
        %v2614 = vpop.permute.xlu0 %2613
        %2615 = vrot.lane.b32.xlu0 %v2350, 4
        %v2616 = vpop.permute.xlu0 %2615
        %2617 = vrot.lane.b32.xlu0 %v2351, 4
        %v2618 = vpop.permute.xlu0 %2617
        %2619 = vrot.lane.b32.xlu0 %v2352, 4
        %v2620 = vpop.permute.xlu0 %2619
        %2621 = vrot.lane.b32.xlu0 %v2353, 4
        %v2622 = vpop.permute.xlu0 %2621
        %2623 = vrot.lane.b32.xlu0 %v2354, 4
        %v2624 = vpop.permute.xlu0 %2623
        %2625 = vrot.lane.b32.xlu0 %v2355, 4
        %v2626 = vpop.permute.xlu0 %2625
        %2627 = vrot.lane.b32.xlu0 %v2356, 4
        %v2628 = vpop.permute.xlu0 %2627
        %2629 = vrot.lane.b32.xlu0 %v2357, 4
        %v2630 = vpop.permute.xlu0 %2629
        %2631 = vrot.lane.b32.xlu0 %v2358, 4
        %v2632 = vpop.permute.xlu0 %2631
        %2633 = vrot.lane.b32.xlu0 %v2359, 4
        %v2634 = vpop.permute.xlu0 %2633
        %2635 = vrot.lane.b32.xlu0 %v2360, 4
        %v2636 = vpop.permute.xlu0 %2635
        %2637 = vrot.lane.b32.xlu0 %v2361, 4
        %v2638 = vpop.permute.xlu0 %2637
        %2639 = vrot.lane.b32.xlu0 %v2362, 4
        %v2640 = vpop.permute.xlu0 %2639
        %2641 = vrot.lane.b32.xlu0 %v2363, 4
        %v2642 = vpop.permute.xlu0 %2641
        %vm2673 = vcmask 48161
        %2674 = vst.msk [vmem:[%s2399 - $0x1] sm:$0xfe] %vm2673, %v2584
        %vm2675 = vcmask 48160
        %2676 = vst.msk [vmem:[%s2399 + $0x7] sm:$0xff] %vm2675, %v2586
        %2677 = vst.msk [vmem:[%s2399 + $0xf] sm:$0xfe] %vm2673, %v2588
        %2678 = vst.msk [vmem:[%s2399 + $0x17] sm:$0xff] %vm2675, %v2590
        %2679 = vst.msk [vmem:[%s2399 + $0x1f] sm:$0xfe] %vm2673, %v2592
        %2680 = vst.msk [vmem:[%s2399 + $0x27] sm:$0xff] %vm2675, %v2594
        %2681 = vst.msk [vmem:[%s2399 + $0x2f] sm:$0xfe] %vm2673, %v2596
        %2682 = vst.msk [vmem:[%s2399 + $0x37] sm:$0xff] %vm2675, %v2598
        %2683 = vst.msk [vmem:[%s2399 + $0x3f] sm:$0xfe] %vm2673, %v2600
        %2684 = vst.msk [vmem:[%s2399 + $0x47] sm:$0xff] %vm2675, %v2602
        %2685 = vst.msk [vmem:[%s2399 + $0x4f] sm:$0xfe] %vm2673, %v2604
        %2686 = vst.msk [vmem:[%s2399 + $0x57] sm:$0xff] %vm2675, %v2606
        %2687 = vst.msk [vmem:[%s2399 + $0x5f] sm:$0xfe] %vm2673, %v2608
        %2688 = vst.msk [vmem:[%s2399 + $0x67] sm:$0xff] %vm2675, %v2610
        %2689 = vst.msk [vmem:[%s2399 + $0x6f] sm:$0xfe] %vm2673, %v2612
        %2690 = vst.msk [vmem:[%s2399 + $0x77] sm:$0xff] %vm2675, %v2614
        %2691 = vst.msk [vmem:[%s2399 + $0x7f] sm:$0xfe] %vm2673, %v2616
        %2692 = vst.msk [vmem:[%s2399 + $0x87] sm:$0xff] %vm2675, %v2618
        %2693 = vst.msk [vmem:[%s2399 + $0x8f] sm:$0xfe] %vm2673, %v2620
        %2694 = vst.msk [vmem:[%s2399 + $0x97] sm:$0xff] %vm2675, %v2622
        %2695 = vst.msk [vmem:[%s2399 + $0x9f] sm:$0xfe] %vm2673, %v2624
        %2696 = vst.msk [vmem:[%s2399 + $0xa7] sm:$0xff] %vm2675, %v2626
        %2697 = vst.msk [vmem:[%s2399 + $0xaf] sm:$0xfe] %vm2673, %v2628
        %2698 = vst.msk [vmem:[%s2399 + $0xb7] sm:$0xff] %vm2675, %v2630
        %2699 = vst.msk [vmem:[%s2399 + $0xbf] sm:$0xfe] %vm2673, %v2632
        %2700 = vst.msk [vmem:[%s2399 + $0xc7] sm:$0xff] %vm2675, %v2634
        %2701 = vst.msk [vmem:[%s2399 + $0xcf] sm:$0xfe] %vm2673, %v2636
        %2702 = vst.msk [vmem:[%s2399 + $0xd7] sm:$0xff] %vm2675, %v2638
        %2703 = vst.msk [vmem:[%s2399 + $0xdf] sm:$0xfe] %vm2673, %v2640
        %2704 = vst.msk [vmem:[%s2399 + $0xe7] sm:$0xff] %vm2675, %v2642
        %2707 = vrot.lane.b32.xlu0 %v2334, 6
        %v2708 = vpop.permute.xlu0 %2707
        %2709 = vrot.lane.b32.xlu0 %v2335, 6
        %v2710 = vpop.permute.xlu0 %2709
        %2711 = vrot.lane.b32.xlu0 %v2336, 6
        %v2712 = vpop.permute.xlu0 %2711
        %2713 = vrot.lane.b32.xlu0 %v2337, 6
        %v2714 = vpop.permute.xlu0 %2713
        %2715 = vrot.lane.b32.xlu0 %v2338, 6
        %v2716 = vpop.permute.xlu0 %2715
        %2717 = vrot.lane.b32.xlu0 %v2339, 6
        %v2718 = vpop.permute.xlu0 %2717
        %2719 = vrot.lane.b32.xlu0 %v2340, 6
        %v2720 = vpop.permute.xlu0 %2719
        %2721 = vrot.lane.b32.xlu0 %v2341, 6
        %v2722 = vpop.permute.xlu0 %2721
        %2723 = vrot.lane.b32.xlu0 %v2342, 6
        %v2724 = vpop.permute.xlu0 %2723
        %2725 = vrot.lane.b32.xlu0 %v2343, 6
        %v2726 = vpop.permute.xlu0 %2725
        %2727 = vrot.lane.b32.xlu0 %v2344, 6
        %v2728 = vpop.permute.xlu0 %2727
        %2729 = vrot.lane.b32.xlu0 %v2345, 6
        %v2730 = vpop.permute.xlu0 %2729
        %2731 = vrot.lane.b32.xlu0 %v2346, 6
        %v2732 = vpop.permute.xlu0 %2731
        %2733 = vrot.lane.b32.xlu0 %v2347, 6
        %v2734 = vpop.permute.xlu0 %2733
        %2735 = vrot.lane.b32.xlu0 %v2348, 6
        %v2736 = vpop.permute.xlu0 %2735
        %2737 = vrot.lane.b32.xlu0 %v2349, 6
        %v2738 = vpop.permute.xlu0 %2737
        %2739 = vrot.lane.b32.xlu0 %v2350, 6
        %v2740 = vpop.permute.xlu0 %2739
        %2741 = vrot.lane.b32.xlu0 %v2351, 6
        %v2742 = vpop.permute.xlu0 %2741
        %2743 = vrot.lane.b32.xlu0 %v2352, 6
        %v2744 = vpop.permute.xlu0 %2743
        %2745 = vrot.lane.b32.xlu0 %v2353, 6
        %v2746 = vpop.permute.xlu0 %2745
        %2747 = vrot.lane.b32.xlu0 %v2354, 6
        %v2748 = vpop.permute.xlu0 %2747
        %2749 = vrot.lane.b32.xlu0 %v2355, 6
        %v2750 = vpop.permute.xlu0 %2749
        %2751 = vrot.lane.b32.xlu0 %v2356, 6
        %v2752 = vpop.permute.xlu0 %2751
        %2753 = vrot.lane.b32.xlu0 %v2357, 6
        %v2754 = vpop.permute.xlu0 %2753
        %2755 = vrot.lane.b32.xlu0 %v2358, 6
        %v2756 = vpop.permute.xlu0 %2755
        %2757 = vrot.lane.b32.xlu0 %v2359, 6
        %v2758 = vpop.permute.xlu0 %2757
        %2759 = vrot.lane.b32.xlu0 %v2360, 6
        %v2760 = vpop.permute.xlu0 %2759
        %2761 = vrot.lane.b32.xlu0 %v2361, 6
        %v2762 = vpop.permute.xlu0 %2761
        %2763 = vrot.lane.b32.xlu0 %v2362, 6
        %v2764 = vpop.permute.xlu0 %2763
        %2765 = vrot.lane.b32.xlu0 %v2363, 6
        %v2766 = vpop.permute.xlu0 %2765
        %2767 = vrot.lane.b32.xlu0 %v2364, 6
        %v2768 = vpop.permute.xlu0 %2767
        %2769 = vrot.lane.b32.xlu0 %v2365, 6
        %v2770 = vpop.permute.xlu0 %2769
        %vm2803 = vcmask 64560
        %2804 = vst.msk [vmem:[#allocation3 + $0x1] sm:$0xff] %vm2803, %v2708
        %vm2805 = vcmask 63536
        %2806 = vst.msk [vmem:[#allocation3 + $0x9] sm:$0x7f] %vm2805, %v2710
        %2807 = vst.msk [vmem:[#allocation3 + $0x11] sm:$0xff] %vm2803, %v2712
        %2808 = vst.msk [vmem:[#allocation3 + $0x19] sm:$0x7f] %vm2805, %v2714
        %2809 = vst.msk [vmem:[#allocation3 + $0x21] sm:$0xff] %vm2803, %v2716
        %2810 = vst.msk [vmem:[#allocation3 + $0x29] sm:$0x7f] %vm2805, %v2718
        %2811 = vst.msk [vmem:[#allocation3 + $0x31] sm:$0xff] %vm2803, %v2720
        %2812 = vst.msk [vmem:[#allocation3 + $0x39] sm:$0x7f] %vm2805, %v2722
        %2813 = vst.msk [vmem:[#allocation3 + $0x41] sm:$0xff] %vm2803, %v2724
        %2814 = vst.msk [vmem:[#allocation3 + $0x49] sm:$0x7f] %vm2805, %v2726
        %2815 = vst.msk [vmem:[#allocation3 + $0x51] sm:$0xff] %vm2803, %v2728
        %2816 = vst.msk [vmem:[#allocation3 + $0x59] sm:$0x7f] %vm2805, %v2730
        %2817 = vst.msk [vmem:[#allocation3 + $0x61] sm:$0xff] %vm2803, %v2732
        %2818 = vst.msk [vmem:[#allocation3 + $0x69] sm:$0x7f] %vm2805, %v2734
        %2819 = vst.msk [vmem:[#allocation3 + $0x71] sm:$0xff] %vm2803, %v2736
        %2820 = vst.msk [vmem:[#allocation3 + $0x79] sm:$0x7f] %vm2805, %v2738
        %2821 = vst.msk [vmem:[#allocation3 + $0x81] sm:$0xff] %vm2803, %v2740
        %2822 = vst.msk [vmem:[#allocation3 + $0x89] sm:$0x7f] %vm2805, %v2742
        %2823 = vst.msk [vmem:[#allocation3 + $0x91] sm:$0xff] %vm2803, %v2744
        %2824 = vst.msk [vmem:[#allocation3 + $0x99] sm:$0x7f] %vm2805, %v2746
        %2825 = vst.msk [vmem:[#allocation3 + $0xa1] sm:$0xff] %vm2803, %v2748
        %2826 = vst.msk [vmem:[#allocation3 + $0xa9] sm:$0x7f] %vm2805, %v2750
        %2827 = vst.msk [vmem:[#allocation3 + $0xb1] sm:$0xff] %vm2803, %v2752
        %2828 = vst.msk [vmem:[#allocation3 + $0xb9] sm:$0x7f] %vm2805, %v2754
        %2829 = vst.msk [vmem:[#allocation3 + $0xc1] sm:$0xff] %vm2803, %v2756
        %2830 = vst.msk [vmem:[#allocation3 + $0xc9] sm:$0x7f] %vm2805, %v2758
        %2831 = vst.msk [vmem:[#allocation3 + $0xd1] sm:$0xff] %vm2803, %v2760
        %2832 = vst.msk [vmem:[#allocation3 + $0xd9] sm:$0x7f] %vm2805, %v2762
        %2833 = vst.msk [vmem:[#allocation3 + $0xe1] sm:$0xff] %vm2803, %v2764
        %2834 = vst.msk [vmem:[#allocation3 + $0xe9] sm:$0x7f] %vm2805, %v2766
        %2835 = vst.msk [vmem:[#allocation3 + $0xf1] sm:$0xff] %vm2803, %v2768
        %2836 = vst.msk [vmem:[#allocation3 + $0xf9] sm:$0x7f] %vm2805, %v2770
        %2837 = vrot.lane.b32.xlu0 %v2334, 8
        %v2838 = vpop.permute.xlu0 %2837
        %2839 = vrot.lane.b32.xlu0 %v2335, 8
        %v2840 = vpop.permute.xlu0 %2839
        %2841 = vrot.lane.b32.xlu0 %v2336, 8
        %v2842 = vpop.permute.xlu0 %2841
        %2843 = vrot.lane.b32.xlu0 %v2337, 8
        %v2844 = vpop.permute.xlu0 %2843
        %2845 = vrot.lane.b32.xlu0 %v2338, 8
        %v2846 = vpop.permute.xlu0 %2845
        %2847 = vrot.lane.b32.xlu0 %v2339, 8
        %v2848 = vpop.permute.xlu0 %2847
        %2849 = vrot.lane.b32.xlu0 %v2340, 8
        %v2850 = vpop.permute.xlu0 %2849
        %2851 = vrot.lane.b32.xlu0 %v2341, 8
        %v2852 = vpop.permute.xlu0 %2851
        %2853 = vrot.lane.b32.xlu0 %v2342, 8
        %v2854 = vpop.permute.xlu0 %2853
        %2855 = vrot.lane.b32.xlu0 %v2343, 8
        %v2856 = vpop.permute.xlu0 %2855
        %2857 = vrot.lane.b32.xlu0 %v2344, 8
        %v2858 = vpop.permute.xlu0 %2857
        %2859 = vrot.lane.b32.xlu0 %v2345, 8
        %v2860 = vpop.permute.xlu0 %2859
        %2861 = vrot.lane.b32.xlu0 %v2346, 8
        %v2862 = vpop.permute.xlu0 %2861
        %2863 = vrot.lane.b32.xlu0 %v2347, 8
        %v2864 = vpop.permute.xlu0 %2863
        %2865 = vrot.lane.b32.xlu0 %v2348, 8
        %v2866 = vpop.permute.xlu0 %2865
        %2867 = vrot.lane.b32.xlu0 %v2349, 8
        %v2868 = vpop.permute.xlu0 %2867
        %2869 = vrot.lane.b32.xlu0 %v2350, 8
        %v2870 = vpop.permute.xlu0 %2869
        %2871 = vrot.lane.b32.xlu0 %v2351, 8
        %v2872 = vpop.permute.xlu0 %2871
        %2873 = vrot.lane.b32.xlu0 %v2352, 8
        %v2874 = vpop.permute.xlu0 %2873
        %2875 = vrot.lane.b32.xlu0 %v2353, 8
        %v2876 = vpop.permute.xlu0 %2875
        %2877 = vrot.lane.b32.xlu0 %v2354, 8
        %v2878 = vpop.permute.xlu0 %2877
        %2879 = vrot.lane.b32.xlu0 %v2355, 8
        %v2880 = vpop.permute.xlu0 %2879
        %2881 = vrot.lane.b32.xlu0 %v2356, 8
        %v2882 = vpop.permute.xlu0 %2881
        %2883 = vrot.lane.b32.xlu0 %v2357, 8
        %v2884 = vpop.permute.xlu0 %2883
        %2885 = vrot.lane.b32.xlu0 %v2358, 8
        %v2886 = vpop.permute.xlu0 %2885
        %2887 = vrot.lane.b32.xlu0 %v2359, 8
        %v2888 = vpop.permute.xlu0 %2887
        %2889 = vrot.lane.b32.xlu0 %v2360, 8
        %v2890 = vpop.permute.xlu0 %2889
        %2891 = vrot.lane.b32.xlu0 %v2361, 8
        %v2892 = vpop.permute.xlu0 %2891
        %2893 = vrot.lane.b32.xlu0 %v2362, 8
        %v2894 = vpop.permute.xlu0 %2893
        %2895 = vrot.lane.b32.xlu0 %v2363, 8
        %v2896 = vpop.permute.xlu0 %2895
        %2897 = vrot.lane.b32.xlu0 %v2364, 8
        %v2898 = vpop.permute.xlu0 %2897
        %2899 = vrot.lane.b32.xlu0 %v2365, 8
        %v2900 = vpop.permute.xlu0 %2899
        %vm2933 = vcmask 80960
        %2934 = vst.msk [vmem:[#allocation3] sm:$0xff] %vm2933, %v2838
        %2935 = vst.msk [vmem:[#allocation3 + $0x8] sm:$0xff] %vm2933, %v2840
        %2936 = vst.msk [vmem:[#allocation3 + $0x10] sm:$0xff] %vm2933, %v2842
        %2937 = vst.msk [vmem:[#allocation3 + $0x18] sm:$0xff] %vm2933, %v2844
        %2938 = vst.msk [vmem:[#allocation3 + $0x20] sm:$0xff] %vm2933, %v2846
        %2939 = vst.msk [vmem:[#allocation3 + $0x28] sm:$0xff] %vm2933, %v2848
        %2940 = vst.msk [vmem:[#allocation3 + $0x30] sm:$0xff] %vm2933, %v2850
        %2941 = vst.msk [vmem:[#allocation3 + $0x38] sm:$0xff] %vm2933, %v2852
        %2942 = vst.msk [vmem:[#allocation3 + $0x40] sm:$0xff] %vm2933, %v2854
        %2943 = vst.msk [vmem:[#allocation3 + $0x48] sm:$0xff] %vm2933, %v2856
        %2944 = vst.msk [vmem:[#allocation3 + $0x50] sm:$0xff] %vm2933, %v2858
        %2945 = vst.msk [vmem:[#allocation3 + $0x58] sm:$0xff] %vm2933, %v2860
        %2946 = vst.msk [vmem:[#allocation3 + $0x60] sm:$0xff] %vm2933, %v2862
        %2947 = vst.msk [vmem:[#allocation3 + $0x68] sm:$0xff] %vm2933, %v2864
        %2948 = vst.msk [vmem:[#allocation3 + $0x70] sm:$0xff] %vm2933, %v2866
        %2949 = vst.msk [vmem:[#allocation3 + $0x78] sm:$0xff] %vm2933, %v2868
        %2950 = vst.msk [vmem:[#allocation3 + $0x80] sm:$0xff] %vm2933, %v2870
        %2951 = vst.msk [vmem:[#allocation3 + $0x88] sm:$0xff] %vm2933, %v2872
        %2952 = vst.msk [vmem:[#allocation3 + $0x90] sm:$0xff] %vm2933, %v2874
        %2953 = vst.msk [vmem:[#allocation3 + $0x98] sm:$0xff] %vm2933, %v2876
        %2954 = vst.msk [vmem:[#allocation3 + $0xa0] sm:$0xff] %vm2933, %v2878
        %2955 = vst.msk [vmem:[#allocation3 + $0xa8] sm:$0xff] %vm2933, %v2880
        %2956 = vst.msk [vmem:[#allocation3 + $0xb0] sm:$0xff] %vm2933, %v2882
        %2957 = vst.msk [vmem:[#allocation3 + $0xb8] sm:$0xff] %vm2933, %v2884
        %2958 = vst.msk [vmem:[#allocation3 + $0xc0] sm:$0xff] %vm2933, %v2886
        %2959 = vst.msk [vmem:[#allocation3 + $0xc8] sm:$0xff] %vm2933, %v2888
        %2960 = vst.msk [vmem:[#allocation3 + $0xd0] sm:$0xff] %vm2933, %v2890
        %2961 = vst.msk [vmem:[#allocation3 + $0xd8] sm:$0xff] %vm2933, %v2892
        %2962 = vst.msk [vmem:[#allocation3 + $0xe0] sm:$0xff] %vm2933, %v2894
        %2963 = vst.msk [vmem:[#allocation3 + $0xe8] sm:$0xff] %vm2933, %v2896
        %2964 = vst.msk [vmem:[#allocation3 + $0xf0] sm:$0xff] %vm2933, %v2898
        %2965 = vst.msk [vmem:[#allocation3 + $0xf8] sm:$0xff] %vm2933, %v2900
        %2966 = vrot.lane.b32.xlu0 %v2334, 10
        %v2967 = vpop.permute.xlu0 %2966
        %2968 = vrot.lane.b32.xlu0 %v2335, 10
        %v2969 = vpop.permute.xlu0 %2968
        %2970 = vrot.lane.b32.xlu0 %v2336, 10
        %v2971 = vpop.permute.xlu0 %2970
        %2972 = vrot.lane.b32.xlu0 %v2337, 10
        %v2973 = vpop.permute.xlu0 %2972
        %2974 = vrot.lane.b32.xlu0 %v2338, 10
        %v2975 = vpop.permute.xlu0 %2974
        %2976 = vrot.lane.b32.xlu0 %v2339, 10
        %v2977 = vpop.permute.xlu0 %2976
        %2978 = vrot.lane.b32.xlu0 %v2340, 10
        %v2979 = vpop.permute.xlu0 %2978
        %2980 = vrot.lane.b32.xlu0 %v2341, 10
        %v2981 = vpop.permute.xlu0 %2980
        %2982 = vrot.lane.b32.xlu0 %v2342, 10
        %v2983 = vpop.permute.xlu0 %2982
        %2984 = vrot.lane.b32.xlu0 %v2343, 10
        %v2985 = vpop.permute.xlu0 %2984
        %2986 = vrot.lane.b32.xlu0 %v2344, 10
        %v2987 = vpop.permute.xlu0 %2986
        %2988 = vrot.lane.b32.xlu0 %v2345, 10
        %v2989 = vpop.permute.xlu0 %2988
        %2990 = vrot.lane.b32.xlu0 %v2346, 10
        %v2991 = vpop.permute.xlu0 %2990
        %2992 = vrot.lane.b32.xlu0 %v2347, 10
        %v2993 = vpop.permute.xlu0 %2992
        %2994 = vrot.lane.b32.xlu0 %v2348, 10
        %v2995 = vpop.permute.xlu0 %2994
        %2996 = vrot.lane.b32.xlu0 %v2349, 10
        %v2997 = vpop.permute.xlu0 %2996
        %2998 = vrot.lane.b32.xlu0 %v2350, 10
        %v2999 = vpop.permute.xlu0 %2998
        %3000 = vrot.lane.b32.xlu0 %v2351, 10
        %v3001 = vpop.permute.xlu0 %3000
        %3002 = vrot.lane.b32.xlu0 %v2352, 10
        %v3003 = vpop.permute.xlu0 %3002
        %3004 = vrot.lane.b32.xlu0 %v2353, 10
        %v3005 = vpop.permute.xlu0 %3004
        %3006 = vrot.lane.b32.xlu0 %v2354, 10
        %v3007 = vpop.permute.xlu0 %3006
        %3008 = vrot.lane.b32.xlu0 %v2355, 10
        %v3009 = vpop.permute.xlu0 %3008
        %3010 = vrot.lane.b32.xlu0 %v2356, 10
        %v3011 = vpop.permute.xlu0 %3010
        %3012 = vrot.lane.b32.xlu0 %v2357, 10
        %v3013 = vpop.permute.xlu0 %3012
        %3014 = vrot.lane.b32.xlu0 %v2358, 10
        %v3015 = vpop.permute.xlu0 %3014
        %3016 = vrot.lane.b32.xlu0 %v2359, 10
        %v3017 = vpop.permute.xlu0 %3016
        %3018 = vrot.lane.b32.xlu0 %v2360, 10
        %v3019 = vpop.permute.xlu0 %3018
        %3020 = vrot.lane.b32.xlu0 %v2361, 10
        %v3021 = vpop.permute.xlu0 %3020
        %3022 = vrot.lane.b32.xlu0 %v2362, 10
        %v3023 = vpop.permute.xlu0 %3022
        %3024 = vrot.lane.b32.xlu0 %v2363, 10
        %v3025 = vpop.permute.xlu0 %3024
        %3026 = vrot.lane.b32.xlu0 %v2364, 10
        %v3027 = vpop.permute.xlu0 %3026
        %3028 = vrot.lane.b32.xlu0 %v2365, 10
        %v3029 = vpop.permute.xlu0 %3028
        %vm3062 = vcmask 97361
        %3063 = vst.msk [vmem:[#allocation3 - $0x1] sm:$0xfe] %vm3062, %v2967
        %vm3064 = vcmask 97360
        %3065 = vst.msk [vmem:[#allocation3 + $0x7] sm:$0xff] %vm3064, %v2969
        %3066 = vst.msk [vmem:[#allocation3 + $0xf] sm:$0xfe] %vm3062, %v2971
        %3067 = vst.msk [vmem:[#allocation3 + $0x17] sm:$0xff] %vm3064, %v2973
        %3068 = vst.msk [vmem:[#allocation3 + $0x1f] sm:$0xfe] %vm3062, %v2975
        %3069 = vst.msk [vmem:[#allocation3 + $0x27] sm:$0xff] %vm3064, %v2977
        %3070 = vst.msk [vmem:[#allocation3 + $0x2f] sm:$0xfe] %vm3062, %v2979
        %3071 = vst.msk [vmem:[#allocation3 + $0x37] sm:$0xff] %vm3064, %v2981
        %3072 = vst.msk [vmem:[#allocation3 + $0x3f] sm:$0xfe] %vm3062, %v2983
        %3073 = vst.msk [vmem:[#allocation3 + $0x47] sm:$0xff] %vm3064, %v2985
        %3074 = vst.msk [vmem:[#allocation3 + $0x4f] sm:$0xfe] %vm3062, %v2987
        %3075 = vst.msk [vmem:[#allocation3 + $0x57] sm:$0xff] %vm3064, %v2989
        %3076 = vst.msk [vmem:[#allocation3 + $0x5f] sm:$0xfe] %vm3062, %v2991
        %3077 = vst.msk [vmem:[#allocation3 + $0x67] sm:$0xff] %vm3064, %v2993
        %3078 = vst.msk [vmem:[#allocation3 + $0x6f] sm:$0xfe] %vm3062, %v2995
        %3079 = vst.msk [vmem:[#allocation3 + $0x77] sm:$0xff] %vm3064, %v2997
        %3080 = vst.msk [vmem:[#allocation3 + $0x7f] sm:$0xfe] %vm3062, %v2999
        %3081 = vst.msk [vmem:[#allocation3 + $0x87] sm:$0xff] %vm3064, %v3001
        %3082 = vst.msk [vmem:[#allocation3 + $0x8f] sm:$0xfe] %vm3062, %v3003
        %3083 = vst.msk [vmem:[#allocation3 + $0x97] sm:$0xff] %vm3064, %v3005
        %3084 = vst.msk [vmem:[#allocation3 + $0x9f] sm:$0xfe] %vm3062, %v3007
        %3085 = vst.msk [vmem:[#allocation3 + $0xa7] sm:$0xff] %vm3064, %v3009
        %3086 = vst.msk [vmem:[#allocation3 + $0xaf] sm:$0xfe] %vm3062, %v3011
        %3087 = vst.msk [vmem:[#allocation3 + $0xb7] sm:$0xff] %vm3064, %v3013
        %3088 = vst.msk [vmem:[#allocation3 + $0xbf] sm:$0xfe] %vm3062, %v3015
        %3089 = vst.msk [vmem:[#allocation3 + $0xc7] sm:$0xff] %vm3064, %v3017
        %3090 = vst.msk [vmem:[#allocation3 + $0xcf] sm:$0xfe] %vm3062, %v3019
        %3091 = vst.msk [vmem:[#allocation3 + $0xd7] sm:$0xff] %vm3064, %v3021
        %3092 = vst.msk [vmem:[#allocation3 + $0xdf] sm:$0xfe] %vm3062, %v3023
        %3093 = vst.msk [vmem:[#allocation3 + $0xe7] sm:$0xff] %vm3064, %v3025
        %3094 = vst.msk [vmem:[#allocation3 + $0xef] sm:$0xfe] %vm3062, %v3027
        %3095 = vst.msk [vmem:[#allocation3 + $0xf7] sm:$0xff] %vm3064, %v3029
        %3096 = vrot.lane.b32.xlu0 %v2336, 12
        %v3097 = vpop.permute.xlu0 %3096
        %3098 = vrot.lane.b32.xlu0 %v2337, 12
        %v3099 = vpop.permute.xlu0 %3098
        %3100 = vrot.lane.b32.xlu0 %v2338, 12
        %v3101 = vpop.permute.xlu0 %3100
        %3102 = vrot.lane.b32.xlu0 %v2339, 12
        %v3103 = vpop.permute.xlu0 %3102
        %3104 = vrot.lane.b32.xlu0 %v2340, 12
        %v3105 = vpop.permute.xlu0 %3104
        %3106 = vrot.lane.b32.xlu0 %v2341, 12
        %v3107 = vpop.permute.xlu0 %3106
        %3108 = vrot.lane.b32.xlu0 %v2342, 12
        %v3109 = vpop.permute.xlu0 %3108
        %3110 = vrot.lane.b32.xlu0 %v2343, 12
        %v3111 = vpop.permute.xlu0 %3110
        %3112 = vrot.lane.b32.xlu0 %v2344, 12
        %v3113 = vpop.permute.xlu0 %3112
        %3114 = vrot.lane.b32.xlu0 %v2345, 12
        %v3115 = vpop.permute.xlu0 %3114
        %3116 = vrot.lane.b32.xlu0 %v2346, 12
        %v3117 = vpop.permute.xlu0 %3116
        %3118 = vrot.lane.b32.xlu0 %v2347, 12
        %v3119 = vpop.permute.xlu0 %3118
        %3120 = vrot.lane.b32.xlu0 %v2348, 12
        %v3121 = vpop.permute.xlu0 %3120
        %3122 = vrot.lane.b32.xlu0 %v2349, 12
        %v3123 = vpop.permute.xlu0 %3122
        %3124 = vrot.lane.b32.xlu0 %v2350, 12
        %v3125 = vpop.permute.xlu0 %3124
        %3126 = vrot.lane.b32.xlu0 %v2351, 12
        %v3127 = vpop.permute.xlu0 %3126
        %3128 = vrot.lane.b32.xlu0 %v2352, 12
        %v3129 = vpop.permute.xlu0 %3128
        %3130 = vrot.lane.b32.xlu0 %v2353, 12
        %v3131 = vpop.permute.xlu0 %3130
        %3132 = vrot.lane.b32.xlu0 %v2354, 12
        %v3133 = vpop.permute.xlu0 %3132
        %3134 = vrot.lane.b32.xlu0 %v2355, 12
        %v3135 = vpop.permute.xlu0 %3134
        %3136 = vrot.lane.b32.xlu0 %v2356, 12
        %v3137 = vpop.permute.xlu0 %3136
        %3138 = vrot.lane.b32.xlu0 %v2357, 12
        %v3139 = vpop.permute.xlu0 %3138
        %3140 = vrot.lane.b32.xlu0 %v2358, 12
        %v3141 = vpop.permute.xlu0 %3140
        %3142 = vrot.lane.b32.xlu0 %v2359, 12
        %v3143 = vpop.permute.xlu0 %3142
        %3144 = vrot.lane.b32.xlu0 %v2360, 12
        %v3145 = vpop.permute.xlu0 %3144
        %3146 = vrot.lane.b32.xlu0 %v2361, 12
        %v3147 = vpop.permute.xlu0 %3146
        %3148 = vrot.lane.b32.xlu0 %v2362, 12
        %v3149 = vpop.permute.xlu0 %3148
        %3150 = vrot.lane.b32.xlu0 %v2363, 12
        %v3151 = vpop.permute.xlu0 %3150
        %3152 = vrot.lane.b32.xlu0 %v2364, 12
        %v3153 = vpop.permute.xlu0 %3152
        %3154 = vrot.lane.b32.xlu0 %v2365, 12
        %v3155 = vpop.permute.xlu0 %3154
        %vm3186 = vcmask 113760
        %3187 = vst.msk [vmem:[#allocation3 + $0x1] sm:$0xff] %vm3186, %v3097
        %vm3188 = vcmask 112736
        %3189 = vst.msk [vmem:[#allocation3 + $0x9] sm:$0x7f] %vm3188, %v3099
        %3190 = vst.msk [vmem:[#allocation3 + $0x11] sm:$0xff] %vm3186, %v3101
        %3191 = vst.msk [vmem:[#allocation3 + $0x19] sm:$0x7f] %vm3188, %v3103
        %3192 = vst.msk [vmem:[#allocation3 + $0x21] sm:$0xff] %vm3186, %v3105
        %3193 = vst.msk [vmem:[#allocation3 + $0x29] sm:$0x7f] %vm3188, %v3107
        %3194 = vst.msk [vmem:[#allocation3 + $0x31] sm:$0xff] %vm3186, %v3109
        %3195 = vst.msk [vmem:[#allocation3 + $0x39] sm:$0x7f] %vm3188, %v3111
        %3196 = vst.msk [vmem:[#allocation3 + $0x41] sm:$0xff] %vm3186, %v3113
        %3197 = vst.msk [vmem:[#allocation3 + $0x49] sm:$0x7f] %vm3188, %v3115
        %3198 = vst.msk [vmem:[#allocation3 + $0x51] sm:$0xff] %vm3186, %v3117
        %3199 = vst.msk [vmem:[#allocation3 + $0x59] sm:$0x7f] %vm3188, %v3119
        %3200 = vst.msk [vmem:[#allocation3 + $0x61] sm:$0xff] %vm3186, %v3121
        %3201 = vst.msk [vmem:[#allocation3 + $0x69] sm:$0x7f] %vm3188, %v3123
        %3202 = vst.msk [vmem:[#allocation3 + $0x71] sm:$0xff] %vm3186, %v3125
        %3203 = vst.msk [vmem:[#allocation3 + $0x79] sm:$0x7f] %vm3188, %v3127
        %3204 = vst.msk [vmem:[#allocation3 + $0x81] sm:$0xff] %vm3186, %v3129
        %3205 = vst.msk [vmem:[#allocation3 + $0x89] sm:$0x7f] %vm3188, %v3131
        %3206 = vst.msk [vmem:[#allocation3 + $0x91] sm:$0xff] %vm3186, %v3133
        %3207 = vst.msk [vmem:[#allocation3 + $0x99] sm:$0x7f] %vm3188, %v3135
        %3208 = vst.msk [vmem:[#allocation3 + $0xa1] sm:$0xff] %vm3186, %v3137
        %3209 = vst.msk [vmem:[#allocation3 + $0xa9] sm:$0x7f] %vm3188, %v3139
        %3210 = vst.msk [vmem:[#allocation3 + $0xb1] sm:$0xff] %vm3186, %v3141
        %3211 = vst.msk [vmem:[#allocation3 + $0xb9] sm:$0x7f] %vm3188, %v3143
        %3212 = vst.msk [vmem:[#allocation3 + $0xc1] sm:$0xff] %vm3186, %v3145
        %3213 = vst.msk [vmem:[#allocation3 + $0xc9] sm:$0x7f] %vm3188, %v3147
        %3214 = vst.msk [vmem:[#allocation3 + $0xd1] sm:$0xff] %vm3186, %v3149
        %3215 = vst.msk [vmem:[#allocation3 + $0xd9] sm:$0x7f] %vm3188, %v3151
        %3216 = vst.msk [vmem:[#allocation3 + $0xe1] sm:$0xff] %vm3186, %v3153
        %3217 = vst.msk [vmem:[#allocation3 + $0xe9] sm:$0x7f] %vm3188, %v3155
        %3218 = vrot.lane.b32.xlu0 %v2336, 14
        %v3219 = vpop.permute.xlu0 %3218
        %3220 = vrot.lane.b32.xlu0 %v2337, 14
        %v3221 = vpop.permute.xlu0 %3220
        %3222 = vrot.lane.b32.xlu0 %v2338, 14
        %v3223 = vpop.permute.xlu0 %3222
        %3224 = vrot.lane.b32.xlu0 %v2339, 14
        %v3225 = vpop.permute.xlu0 %3224
        %3226 = vrot.lane.b32.xlu0 %v2340, 14
        %v3227 = vpop.permute.xlu0 %3226
        %3228 = vrot.lane.b32.xlu0 %v2341, 14
        %v3229 = vpop.permute.xlu0 %3228
        %3230 = vrot.lane.b32.xlu0 %v2342, 14
        %v3231 = vpop.permute.xlu0 %3230
        %3232 = vrot.lane.b32.xlu0 %v2343, 14
        %v3233 = vpop.permute.xlu0 %3232
        %3234 = vrot.lane.b32.xlu0 %v2344, 14
        %v3235 = vpop.permute.xlu0 %3234
        %3236 = vrot.lane.b32.xlu0 %v2345, 14
        %v3237 = vpop.permute.xlu0 %3236
        %3238 = vrot.lane.b32.xlu0 %v2346, 14
        %v3239 = vpop.permute.xlu0 %3238
        %3240 = vrot.lane.b32.xlu0 %v2347, 14
        %v3241 = vpop.permute.xlu0 %3240
        %3242 = vrot.lane.b32.xlu0 %v2348, 14
        %v3243 = vpop.permute.xlu0 %3242
        %3244 = vrot.lane.b32.xlu0 %v2349, 14
        %v3245 = vpop.permute.xlu0 %3244
        %3246 = vrot.lane.b32.xlu0 %v2350, 14
        %v3247 = vpop.permute.xlu0 %3246
        %3248 = vrot.lane.b32.xlu0 %v2351, 14
        %v3249 = vpop.permute.xlu0 %3248
        %3250 = vrot.lane.b32.xlu0 %v2352, 14
        %v3251 = vpop.permute.xlu0 %3250
        %3252 = vrot.lane.b32.xlu0 %v2353, 14
        %v3253 = vpop.permute.xlu0 %3252
        %3254 = vrot.lane.b32.xlu0 %v2354, 14
        %v3255 = vpop.permute.xlu0 %3254
        %3256 = vrot.lane.b32.xlu0 %v2355, 14
        %v3257 = vpop.permute.xlu0 %3256
        %3258 = vrot.lane.b32.xlu0 %v2356, 14
        %v3259 = vpop.permute.xlu0 %3258
        %3260 = vrot.lane.b32.xlu0 %v2357, 14
        %v3261 = vpop.permute.xlu0 %3260
        %3262 = vrot.lane.b32.xlu0 %v2358, 14
        %v3263 = vpop.permute.xlu0 %3262
        %3264 = vrot.lane.b32.xlu0 %v2359, 14
        %v3265 = vpop.permute.xlu0 %3264
        %3266 = vrot.lane.b32.xlu0 %v2360, 14
        %v3267 = vpop.permute.xlu0 %3266
        %3268 = vrot.lane.b32.xlu0 %v2361, 14
        %v3269 = vpop.permute.xlu0 %3268
        %3270 = vrot.lane.b32.xlu0 %v2362, 14
        %v3271 = vpop.permute.xlu0 %3270
        %3272 = vrot.lane.b32.xlu0 %v2363, 14
        %v3273 = vpop.permute.xlu0 %3272
        %3274 = vrot.lane.b32.xlu0 %v2364, 14
        %v3275 = vpop.permute.xlu0 %3274
        %3276 = vrot.lane.b32.xlu0 %v2365, 14
        %v3277 = vpop.permute.xlu0 %3276
        %vm3308 = vcmask 130160
        %3309 = vst.msk [vmem:[#allocation3] sm:$0xff] %vm3308, %v3219
        %3310 = vst.msk [vmem:[#allocation3 + $0x8] sm:$0xff] %vm3308, %v3221
        %3311 = vst.msk [vmem:[#allocation3 + $0x10] sm:$0xff] %vm3308, %v3223
        %3312 = vst.msk [vmem:[#allocation3 + $0x18] sm:$0xff] %vm3308, %v3225
        %3313 = vst.msk [vmem:[#allocation3 + $0x20] sm:$0xff] %vm3308, %v3227
        %3314 = vst.msk [vmem:[#allocation3 + $0x28] sm:$0xff] %vm3308, %v3229
        %3315 = vst.msk [vmem:[#allocation3 + $0x30] sm:$0xff] %vm3308, %v3231
        %3316 = vst.msk [vmem:[#allocation3 + $0x38] sm:$0xff] %vm3308, %v3233
        %3317 = vst.msk [vmem:[#allocation3 + $0x40] sm:$0xff] %vm3308, %v3235
        %3318 = vst.msk [vmem:[#allocation3 + $0x48] sm:$0xff] %vm3308, %v3237
        %3319 = vst.msk [vmem:[#allocation3 + $0x50] sm:$0xff] %vm3308, %v3239
        %3320 = vst.msk [vmem:[#allocation3 + $0x58] sm:$0xff] %vm3308, %v3241
        %3321 = vst.msk [vmem:[#allocation3 + $0x60] sm:$0xff] %vm3308, %v3243
        %3322 = vst.msk [vmem:[#allocation3 + $0x68] sm:$0xff] %vm3308, %v3245
        %3323 = vst.msk [vmem:[#allocation3 + $0x70] sm:$0xff] %vm3308, %v3247
        %3324 = vst.msk [vmem:[#allocation3 + $0x78] sm:$0xff] %vm3308, %v3249
        %3325 = vst.msk [vmem:[#allocation3 + $0x80] sm:$0xff] %vm3308, %v3251
        %3326 = vst.msk [vmem:[#allocation3 + $0x88] sm:$0xff] %vm3308, %v3253
        %3327 = vst.msk [vmem:[#allocation3 + $0x90] sm:$0xff] %vm3308, %v3255
        %3328 = vst.msk [vmem:[#allocation3 + $0x98] sm:$0xff] %vm3308, %v3257
        %3329 = vst.msk [vmem:[#allocation3 + $0xa0] sm:$0xff] %vm3308, %v3259
        %3330 = vst.msk [vmem:[#allocation3 + $0xa8] sm:$0xff] %vm3308, %v3261
        %3331 = vst.msk [vmem:[#allocation3 + $0xb0] sm:$0xff] %vm3308, %v3263
        %3332 = vst.msk [vmem:[#allocation3 + $0xb8] sm:$0xff] %vm3308, %v3265
        %3333 = vst.msk [vmem:[#allocation3 + $0xc0] sm:$0xff] %vm3308, %v3267
        %3334 = vst.msk [vmem:[#allocation3 + $0xc8] sm:$0xff] %vm3308, %v3269
        %3335 = vst.msk [vmem:[#allocation3 + $0xd0] sm:$0xff] %vm3308, %v3271
        %3336 = vst.msk [vmem:[#allocation3 + $0xd8] sm:$0xff] %vm3308, %v3273
        %3337 = vst.msk [vmem:[#allocation3 + $0xe0] sm:$0xff] %vm3308, %v3275
        %3338 = vst.msk [vmem:[#allocation3 + $0xe8] sm:$0xff] %vm3308, %v3277
        %3339 = vrot.lane.b32.xlu0 %v2336, 16
        %v3340 = vpop.permute.xlu0 %3339
        %3341 = vrot.lane.b32.xlu0 %v2337, 16
        %v3342 = vpop.permute.xlu0 %3341
        %3343 = vrot.lane.b32.xlu0 %v2338, 16
        %v3344 = vpop.permute.xlu0 %3343
        %3345 = vrot.lane.b32.xlu0 %v2339, 16
        %v3346 = vpop.permute.xlu0 %3345
        %3347 = vrot.lane.b32.xlu0 %v2340, 16
        %v3348 = vpop.permute.xlu0 %3347
        %3349 = vrot.lane.b32.xlu0 %v2341, 16
        %v3350 = vpop.permute.xlu0 %3349
        %3351 = vrot.lane.b32.xlu0 %v2342, 16
        %v3352 = vpop.permute.xlu0 %3351
        %3353 = vrot.lane.b32.xlu0 %v2343, 16
        %v3354 = vpop.permute.xlu0 %3353
        %3355 = vrot.lane.b32.xlu0 %v2344, 16
        %v3356 = vpop.permute.xlu0 %3355
        %3357 = vrot.lane.b32.xlu0 %v2345, 16
        %v3358 = vpop.permute.xlu0 %3357
        %3359 = vrot.lane.b32.xlu0 %v2346, 16
        %v3360 = vpop.permute.xlu0 %3359
        %3361 = vrot.lane.b32.xlu0 %v2347, 16
        %v3362 = vpop.permute.xlu0 %3361
        %3363 = vrot.lane.b32.xlu0 %v2348, 16
        %v3364 = vpop.permute.xlu0 %3363
        %3365 = vrot.lane.b32.xlu0 %v2349, 16
        %v3366 = vpop.permute.xlu0 %3365
        %3367 = vrot.lane.b32.xlu0 %v2350, 16
        %v3368 = vpop.permute.xlu0 %3367
        %3369 = vrot.lane.b32.xlu0 %v2351, 16
        %v3370 = vpop.permute.xlu0 %3369
        %3371 = vrot.lane.b32.xlu0 %v2352, 16
        %v3372 = vpop.permute.xlu0 %3371
        %3373 = vrot.lane.b32.xlu0 %v2353, 16
        %v3374 = vpop.permute.xlu0 %3373
        %3375 = vrot.lane.b32.xlu0 %v2354, 16
        %v3376 = vpop.permute.xlu0 %3375
        %3377 = vrot.lane.b32.xlu0 %v2355, 16
        %v3378 = vpop.permute.xlu0 %3377
        %3379 = vrot.lane.b32.xlu0 %v2356, 16
        %v3380 = vpop.permute.xlu0 %3379
        %3381 = vrot.lane.b32.xlu0 %v2357, 16
        %v3382 = vpop.permute.xlu0 %3381
        %3383 = vrot.lane.b32.xlu0 %v2358, 16
        %v3384 = vpop.permute.xlu0 %3383
        %3385 = vrot.lane.b32.xlu0 %v2359, 16
        %v3386 = vpop.permute.xlu0 %3385
        %3387 = vrot.lane.b32.xlu0 %v2360, 16
        %v3388 = vpop.permute.xlu0 %3387
        %3389 = vrot.lane.b32.xlu0 %v2361, 16
        %v3390 = vpop.permute.xlu0 %3389
        %3391 = vrot.lane.b32.xlu0 %v2362, 16
        %v3392 = vpop.permute.xlu0 %3391
        %3393 = vrot.lane.b32.xlu0 %v2363, 16
        %v3394 = vpop.permute.xlu0 %3393
        %3395 = vrot.lane.b32.xlu0 %v2364, 16
        %v3396 = vpop.permute.xlu0 %3395
        %3397 = vrot.lane.b32.xlu0 %v2365, 16
        %v3398 = vpop.permute.xlu0 %3397
        %vm3429 = vcmask 146561
        %3430 = vst.msk [vmem:[#allocation3 - $0x1] sm:$0xfe] %vm3429, %v3340
        %vm3431 = vcmask 146560
        %3432 = vst.msk [vmem:[#allocation3 + $0x7] sm:$0xff] %vm3431, %v3342
        %3433 = vst.msk [vmem:[#allocation3 + $0xf] sm:$0xfe] %vm3429, %v3344
        %3434 = vst.msk [vmem:[#allocation3 + $0x17] sm:$0xff] %vm3431, %v3346
        %3435 = vst.msk [vmem:[#allocation3 + $0x1f] sm:$0xfe] %vm3429, %v3348
        %3436 = vst.msk [vmem:[#allocation3 + $0x27] sm:$0xff] %vm3431, %v3350
        %3437 = vst.msk [vmem:[#allocation3 + $0x2f] sm:$0xfe] %vm3429, %v3352
        %3438 = vst.msk [vmem:[#allocation3 + $0x37] sm:$0xff] %vm3431, %v3354
        %3439 = vst.msk [vmem:[#allocation3 + $0x3f] sm:$0xfe] %vm3429, %v3356
        %3440 = vst.msk [vmem:[#allocation3 + $0x47] sm:$0xff] %vm3431, %v3358
        %3441 = vst.msk [vmem:[#allocation3 + $0x4f] sm:$0xfe] %vm3429, %v3360
        %3442 = vst.msk [vmem:[#allocation3 + $0x57] sm:$0xff] %vm3431, %v3362
        %3443 = vst.msk [vmem:[#allocation3 + $0x5f] sm:$0xfe] %vm3429, %v3364
        %3444 = vst.msk [vmem:[#allocation3 + $0x67] sm:$0xff] %vm3431, %v3366
        %3445 = vst.msk [vmem:[#allocation3 + $0x6f] sm:$0xfe] %vm3429, %v3368
        %3446 = vst.msk [vmem:[#allocation3 + $0x77] sm:$0xff] %vm3431, %v3370
        %3447 = vst.msk [vmem:[#allocation3 + $0x7f] sm:$0xfe] %vm3429, %v3372
        %3448 = vst.msk [vmem:[#allocation3 + $0x87] sm:$0xff] %vm3431, %v3374
        %3449 = vst.msk [vmem:[#allocation3 + $0x8f] sm:$0xfe] %vm3429, %v3376
        %3450 = vst.msk [vmem:[#allocation3 + $0x97] sm:$0xff] %vm3431, %v3378
        %3451 = vst.msk [vmem:[#allocation3 + $0x9f] sm:$0xfe] %vm3429, %v3380
        %3452 = vst.msk [vmem:[#allocation3 + $0xa7] sm:$0xff] %vm3431, %v3382
        %3453 = vst.msk [vmem:[#allocation3 + $0xaf] sm:$0xfe] %vm3429, %v3384
        %3454 = vst.msk [vmem:[#allocation3 + $0xb7] sm:$0xff] %vm3431, %v3386
        %3455 = vst.msk [vmem:[#allocation3 + $0xbf] sm:$0xfe] %vm3429, %v3388
        %3456 = vst.msk [vmem:[#allocation3 + $0xc7] sm:$0xff] %vm3431, %v3390
        %3457 = vst.msk [vmem:[#allocation3 + $0xcf] sm:$0xfe] %vm3429, %v3392
        %3458 = vst.msk [vmem:[#allocation3 + $0xd7] sm:$0xff] %vm3431, %v3394
        %3459 = vst.msk [vmem:[#allocation3 + $0xdf] sm:$0xfe] %vm3429, %v3396
        %3460 = vst.msk [vmem:[#allocation3 + $0xe7] sm:$0xff] %vm3431, %v3398
        %v3461 = vld [vmem:[#allocation3] sm:$0xff]
        %v3462 = vld [vmem:[#allocation3 + $0x8] sm:$0xff]
        %v3463 = vld [vmem:[#allocation3 + $0x10] sm:$0xff]
        %v3464 = vld [vmem:[#allocation3 + $0x18] sm:$0xff]
        %v3465 = vld [vmem:[#allocation3 + $0x20] sm:$0xff]
        %v3466 = vld [vmem:[#allocation3 + $0x28] sm:$0xff]
        %v3467 = vld [vmem:[#allocation3 + $0x30] sm:$0xff]
        %v3468 = vld [vmem:[#allocation3 + $0x38] sm:$0xff]
        %v3469 = vld [vmem:[#allocation3 + $0x40] sm:$0xff]
        %v3470 = vld [vmem:[#allocation3 + $0x48] sm:$0xff]
        %v3471 = vld [vmem:[#allocation3 + $0x50] sm:$0xff]
        %v3472 = vld [vmem:[#allocation3 + $0x58] sm:$0xff]
        %v3473 = vld [vmem:[#allocation3 + $0x60] sm:$0xff]
        %v3474 = vld [vmem:[#allocation3 + $0x68] sm:$0xff]
        %v3475 = vld [vmem:[#allocation3 + $0x70] sm:$0xff]
        %v3476 = vld [vmem:[#allocation3 + $0x78] sm:$0xff]
        %v3477 = vld [vmem:[#allocation3 + $0x80] sm:$0xff]
        %v3478 = vld [vmem:[#allocation3 + $0x88] sm:$0xff]
        %v3479 = vld [vmem:[#allocation3 + $0x90] sm:$0xff]
        %v3480 = vld [vmem:[#allocation3 + $0x98] sm:$0xff]
        %v3481 = vld [vmem:[#allocation3 + $0xa0] sm:$0xff]
        %v3482 = vld [vmem:[#allocation3 + $0xa8] sm:$0xff]
        %v3483 = vld [vmem:[#allocation3 + $0xb0] sm:$0xff]
        %v3484 = vld [vmem:[#allocation3 + $0xb8] sm:$0xff]
        %v3485 = vld [vmem:[#allocation3 + $0xc0] sm:$0xff]
        %v3486 = vld [vmem:[#allocation3 + $0xc8] sm:$0xff]
        %v3487 = vld [vmem:[#allocation3 + $0xd0] sm:$0xff]
        %v3488 = vld [vmem:[#allocation3 + $0xd8] sm:$0xff]
        %v3489 = vld [vmem:[#allocation3 + $0xe0] sm:$0xff]
        %v3490 = vld [vmem:[#allocation3 + $0xe8] sm:$0xff]
        %v3491 = vld [vmem:[#allocation3 + $0xf0] sm:$0xff]
        %v3492 = vld [vmem:[#allocation3 + $0xf8] sm:$0xff]
        %v3493 = vld [vmem:[%s4] sm:$0xf]
        %v3495 = vsel %vm2366, %v3493, 0
        %v3498 = vsel %vm2366, %v3461, 0
        %v3501 = vsel %vm2366, %v3462, 0
        %v3504 = vsel %vm2366, %v3463, 0
        %v3507 = vsel %vm2366, %v3464, 0
        %v3510 = vsel %vm2366, %v3465, 0
        %v3513 = vsel %vm2366, %v3466, 0
        %v3516 = vsel %vm2366, %v3467, 0
        %v3519 = vsel %vm2366, %v3468, 0
        %v3522 = vsel %vm2366, %v3469, 0
        %v3525 = vsel %vm2366, %v3470, 0
        %v3528 = vsel %vm2366, %v3471, 0
        %v3531 = vsel %vm2366, %v3472, 0
        %v3534 = vsel %vm2366, %v3473, 0
        %v3537 = vsel %vm2366, %v3474, 0
        %v3540 = vsel %vm2366, %v3475, 0
        %v3543 = vsel %vm2366, %v3476, 0
        %v3546 = vsel %vm2366, %v3477, 0
        %v3549 = vsel %vm2366, %v3478, 0
        %v3552 = vsel %vm2366, %v3479, 0
        %v3555 = vsel %vm2366, %v3480, 0
        %v3558 = vsel %vm2366, %v3481, 0
        %v3561 = vsel %vm2366, %v3482, 0
        %v3564 = vsel %vm2366, %v3483, 0
        %v3567 = vsel %vm2366, %v3484, 0
        %v3570 = vsel %vm2366, %v3485, 0
        %v3573 = vsel %vm2366, %v3486, 0
        %v3576 = vsel %vm2366, %v3487, 0
        %v3579 = vsel %vm2366, %v3488, 0
        %v3582 = vsel %vm2366, %v3489, 0
        %v3585 = vsel %vm2366, %v3490, 0
        %v3588 = vsel %vm2366, %v3491, 0
        %v3591 = vsel %vm2366, %v3492, 0
        %3593 = vmatpush.xpose.msra.mxu0 %v3543
        %3594 = vmatpush.xpose.msra.mxu0 %v3540
        %3595 = vmatpush.xpose.msra.mxu0 %v3537
        %3596 = vmatpush.xpose.msra.mxu0 %v3534
        %3597 = vmatpush.xpose.msra.mxu0 %v3531
        %3598 = vmatpush.xpose.msra.mxu0 %v3528
        %3599 = vmatpush.xpose.msra.mxu0 %v3525
        %3600 = vmatpush.xpose.msra.mxu0 %v3522
        %3601 = vmatpush.xpose.msra.mxu0 %v3519
        %3602 = vmatpush.xpose.msra.mxu0 %v3516
        %3603 = vmatpush.xpose.msra.mxu0 %v3513
        %3604 = vmatpush.xpose.msra.mxu0 %v3510
        %3605 = vmatpush.xpose.msra.mxu0 %v3507
        %3606 = vmatpush.xpose.msra.mxu0 %v3504
        %3607 = vmatpush.xpose.msra.mxu0 %v3501
        %3608 = vmatpush.xpose.msra.mxu0 %v3498
        %3609 = vmatmul.f32.gmra.mxu0 %v3495
        %v3610 = vpop.f32.mrf.mxu0
        %v3611 = vadd.f32 0.0, %v3610
        %3612 = vdwg.mxu0
        %3613 = vmatpush.xpose.msra.mxu0 %v3591
        %3614 = vmatpush.xpose.msra.mxu0 %v3588
        %3615 = vmatpush.xpose.msra.mxu0 %v3585
        %3616 = vmatpush.xpose.msra.mxu0 %v3582
        %3617 = vmatpush.xpose.msra.mxu0 %v3579
        %3618 = vmatpush.xpose.msra.mxu0 %v3576
        %3619 = vmatpush.xpose.msra.mxu0 %v3573
        %3620 = vmatpush.xpose.msra.mxu0 %v3570
        %3621 = vmatpush.xpose.msra.mxu0 %v3567
        %3622 = vmatpush.xpose.msra.mxu0 %v3564
        %3623 = vmatpush.xpose.msra.mxu0 %v3561
        %3624 = vmatpush.xpose.msra.mxu0 %v3558
        %3625 = vmatpush.xpose.msra.mxu0 %v3555
        %3626 = vmatpush.xpose.msra.mxu0 %v3552
        %3627 = vmatpush.xpose.msra.mxu0 %v3549
        %3628 = vmatpush.xpose.msra.mxu0 %v3546
        %3629 = vmatmul.f32.gmra.mxu0 %v3495
        %v3630 = vpop.f32.mrf.mxu0
        %v3631 = vadd.f32 0.0, %v3630
        %3632 = vdwg.mxu0
        %v3633 = vld [vmem:[%s5] sm:$0xf]
        %3635 = vset.pattern.permute.xlu0 0
        %3636 = vperm.xlu0 %3635, %v3633
        %v3637 = vpop.permute.xlu0 %3636
        %v3639 = vmul.f32 %v3611, %v3637
        %v3640 = vmul.f32 %v3631, %v3637
        %v3641 = vld [vmem:[%s6] sm:$0xf]
        %3643 = vset.pattern.permute.xlu0 0
        %3644 = vperm.xlu0 %3643, %v3641
        %v3645 = vpop.permute.xlu0 %3644
        %v3647 = vadd.f32 %v3639, %v3645
        %v3648 = vadd.f32 %v3640, %v3645
        %v3649 = vxor.u32 %v3647, 2147483648
        %v3650 = vxor.u32 %v3648, 2147483648
        %v3651 = vmul.f32 %v3649, 1.442695
        %v3652 = vpow.pop %v3651
        %v3653 = vmul.f32 %v3650, 1.442695
        %v3654 = vpow.pop %v3653
        %v3655 = vadd.f32 %v3652, 1.0
        %v3656 = vadd.f32 %v3654, 1.0
        %v3657 = vrcp.pop %v3655
        %v3658 = vmul.f32 %v3655, %v3657
        %v3659 = vsub.f32 1.0, %v3658
        %v3660 = vmul.f32 %v3657, %v3659
        %v3661 = vadd.f32 %v3657, %v3660
        %vm3662 = vweird.f32 %v3655
        %vm3663 = vweird.f32 %v3657
        %vm3664 = vmor %vm3662, %vm3663
        %v3665 = vsel %vm3664, %v3657, %v3661
        %v3666 = vand.u32 2147483647, %v3655
        %vm3667 = vcmp.eq.f32.partialorder %v3666, 8.507059e+37
        %v3668 = vand.u32 %v3655, 2147483648
        %v3669 = vor.u32 1.1754944e-38, %v3668
        %v3670 = vsel %vm3667, %v3669, %v3665
        %v3671 = vmul.f32 1.0, %v3670
        %v3672 = vrcp.pop %v3656
        %v3673 = vmul.f32 %v3656, %v3672
        %v3674 = vsub.f32 1.0, %v3673
        %v3675 = vmul.f32 %v3672, %v3674
        %v3676 = vadd.f32 %v3672, %v3675
        %vm3677 = vweird.f32 %v3656
        %vm3678 = vweird.f32 %v3672
        %vm3679 = vmor %vm3677, %vm3678
        %v3680 = vsel %vm3679, %v3672, %v3676
        %v3681 = vand.u32 2147483647, %v3656
        %vm3682 = vcmp.eq.f32.partialorder %v3681, 8.507059e+37
        %v3683 = vand.u32 %v3656, 2147483648
        %v3684 = vor.u32 1.1754944e-38, %v3683
        %v3685 = vsel %vm3682, %v3684, %v3680
        %v3686 = vmul.f32 1.0, %v3685
        %v3687 = vmul.f32 %v3647, %v3671
        %v3688 = vmul.f32 %v3648, %v3686
        %v3691 = vrot.slane %v3688, 4
        %v3692 = vsel %vm1537, %v3687, %v3691
        %3694 = vst [vmem:[%s271] sm:$0xff] %v3692
        %s3695 = sand.u32 %s181, 1
        %s3696 = scalar_lea.sflag [#allocation5], %s3695
        %s3697 = sand.u32 %s181, 1
        %s3698 = smul.addr %s3697, 8
        %s3699 = scalar_lea.vmem [#allocation4], %s3698
        // Predicated region
        $region49: #{tpu_custom_call.1} parent=47 // pred_check
          %p3700 = pneg %p191
        $region50: #{tpu_custom_call.1} parent=47 // pred_check_branch
          %3702 = sbr.rel (%p3700) target = $region52
        $region51: #{tpu_custom_call.1} parent=47 // pred_region
          %3704 = vsyncadd %s3696, 0
          %s3705 = smul.addr %s21, 2
          %s3706 = smul.addr %s3705, 4
          %s3707 = scalar_lea.hbm %s7, %s3706
          %s3709 = sshll.u32 %s3699, 4
          %s3710 = int_to_ptr.vmem [resolvable:$true] %s3709
          %s3711 = sshll.u32 %s3707, 4
          %s3712 = int_to_ptr.hbm [resolvable:$true] %s3711
          %3714 = dma.vmem_to_hbm [thread:$0]  %s3710, 128, %s3712, %s3696
        $region52: #{tpu_custom_call.1} parent=47 // pred_fallthru
          _
      $region48: #{tpu_custom_call.1} parent=5 // pred_fallthru
        _
      %p3715 = scmp.le.s32.totalorder 2, %s16
      // Predicated region
      $region53: #{tpu_custom_call.1} parent=5 // pred_check
        %p3716 = pneg %p3715
      $region54: #{tpu_custom_call.1} parent=5 // pred_check_branch
        %3718 = sbr.rel (%p3716) target = $region56
      $region55: #{tpu_custom_call.1} parent=5 // pred_region
        %s3719 = ssub.s32 %s16, 2
        // Predicated region
        $region57: #{tpu_custom_call.1} parent=55 // pred_check
          %p3720 = pneg %p197
        $region58: #{tpu_custom_call.1} parent=55 // pred_check_branch
          %3722 = sbr.rel (%p3720) target = $region60
        $region59: #{tpu_custom_call.1} parent=55 // pred_region
          %s3723 = sand.u32 %s182, 1
          %s3724 = scalar_lea.sflag [#allocation5], %s3723
          %s3725 = sand.u32 %s182, 1
          %s3726 = smul.addr %s3725, 8
          %s3727 = scalar_lea.vmem [#allocation4], %s3726
          %3729 = dma.done %s3724, 128
        $region60: #{tpu_custom_call.1} parent=55 // pred_fallthru
          _
      $region56: #{tpu_custom_call.1} parent=5 // pred_fallthru
        _
    $region6: #{tpu_custom_call.1} parent=1 // loop_footer
      %s20 = sadd.s32 1, %s16
    $region7: #{tpu_custom_call.1} parent=1 // loop_footer_branch
      %15 = sbr.rel target = $region3
    $region8: #{tpu_custom_call.1} parent=1 // loop_exit
      _
    %3730 = vsyncpa [#allocation5], 1
    %s3731 = scalar_lea.sflag [#allocation5], 1
    %3732 = vsyncpa %s3731, 1

</llo_original>
